<compile_context>
chip_gen: v7x
topology: tpu7x:2x2x1
jax: 0.10.0
libtpu: 0.0.40
codegen_flags: <defaults>
</compile_context>

<pallas_src>
import jax
import jax.numpy as jnp
from jax import lax
from jax.experimental import pallas as pl
from jax.experimental.pallas import tpu as pltpu

BN_EPS = 1e-5
CPO = 128  # lane-padded conv-output width (lane-dense MXU columns)


def _round_up(x, m):
    return (x + m - 1) // m * m


# --------------------------------- kernel ---------------------------------- #
def _down_layer_kernel(x_ref, w1_ref, aff1_ref, w2_ref, aff2_ref, o_ref, xp_ref):
    N, Ho, _, Wo, two_kp = x_ref.shape
    KP = two_kp // 2                      # per-tap (lane-group) channel width
    cout = o_ref.shape[1]
    Wp = xp_ref.shape[2]
    R = N * Ho * Wo

    # ----- fused 2x2 / stride-2 max pool -----
    # wrapper packed x as (N, Ho, hy, Wo, wx*KP + c): window rows via integer index,
    # window cols via a static lane slice -> no strided indexing anywhere.
    m = jnp.maximum(x_ref[:, :, 0, :, :], x_ref[:, :, 1, :, :])      # (N,Ho,Wo,2KP)
    pooled = jnp.maximum(m[..., :KP], m[..., KP:])                   # (N,Ho,Wo,KP) bf16

    def conv_bn_relu(xin, w_ref, aff_ref):
        """zero-pad -> 3x3 conv (single packed-K im2col dot) -> BN(train) -> ReLU."""
        # Zero only the 1-pixel halo; interior is written exactly once below.
        zrow = jnp.zeros((N, Wp, KP), xp_ref.dtype)
        zcol = jnp.zeros((N, Ho, KP), xp_ref.dtype)
        xp_ref[:, 0, :, :] = zrow                   # top halo row
        xp_ref[:, Ho + 1, :, :] = zrow              # bottom halo row
        xp_ref[:, 1:Ho + 1, 0, :] = zcol            # left halo column
        xp_ref[:, 1:Ho + 1, Wo + 1, :] = zcol       # right halo column
        xp_ref[:, 1:Ho + 1, 1:Wo + 1, :] = xin      # interior (cols >= Wo+2 never read)

        # im2col with K packed as (ky, kx, ci): one MXU contraction of K = 9*KP.
        taps = []
        for dy in range(3):
            for dx in range(3):
                taps.append(xp_ref[:, dy:dy + Ho, dx:dx + Wo, :].reshape(R, KP))
        patch = jnp.concatenate(taps, axis=-1)                       # (R, 9*KP) bf16

        acc = jnp.dot(patch, w_ref[...], preferred_element_type=jnp.float32)  # (R, CPO)
        acc = acc + aff_ref[0:1, :]                                  # conv bias

        # BatchNorm2d (training mode): per-channel batch stats over all (n,h,w), f32.
        mu = jnp.mean(acc, axis=0, keepdims=True)
        var = jnp.mean((acc - mu) ** 2, axis=0, keepdims=True)
        y = (acc - mu) * lax.rsqrt(var + BN_EPS) * aff_ref[1:2, :] + aff_ref[2:3, :]
        return jnp.maximum(y, 0.0)                                   # (R, CPO) f32

    h1 = conv_bn_relu(pooled, w1_ref, aff1_ref)
    # Padded lanes of h1 are exactly 0 (weights/bias/gamma/beta are zero-padded), so the
    # first KP lanes are a valid stage-2 input; stage-2 weight rows >= cout are zero.
    xin2 = h1[:, :KP].astype(xp_ref.dtype).reshape(N, Ho, Wo, KP)
    h2 = conv_bn_relu(xin2, w2_ref, aff2_ref)

    # channels -> sublanes so only the `cout` real channels are written to HBM.
    yt = h2.T                                                        # (CPO, R) f32
    for n in range(N):
        o_ref[n] = yt[:cout, n * Ho * Wo:(n + 1) * Ho * Wo]          # (cout, Ho*Wo)


# --------------------------- parameter preparation -------------------------- #
def _prep_conv_params(w_oihw, b, gamma, beta, kp):
    # PyTorch Conv2d weight (Cout, Cin, 3, 3) -> packed im2col weight (9*kp, CPO) bf16
    # with rows ordered (ky, kx, ci), plus stacked f32 (3, CPO) = [bias; gamma; beta].
    cout, cin = w_oihw.shape[0], w_oihw.shape[1]
    assert cin <= kp and cout <= CPO
    w = jnp.transpose(w_oihw, (2, 3, 1, 0))                          # (3,3,Cin,Cout)
    w = jnp.pad(w, ((0, 0), (0, 0), (0, kp - cin), (0, CPO - cout)))
    w = w.reshape(9 * kp, CPO).astype(jnp.bfloat16)

    def pad1(v):
        return jnp.pad(v, (0, CPO - cout))

    aff = jnp.stack([pad1(b), pad1(gamma), pad1(beta)]).astype(jnp.float32)  # (3, CPO)
    return w, aff


# ------------------------------ public forward ------------------------------ #
@jax.jit
def down_layer_forward(params, x_nchw):
    N, cin, H, W = x_nchw.shape
    assert H % 2 == 0 and W % 2 == 0
    cout = params["w1"].shape[0]
    Ho, Wo = H // 2, W // 2
    KP = max(cin, cout)                   # shared per-tap channel width for both stages
    # TODO(synk): for 9*KP > 128 (wide UNet layers) fall back to per-tap K<=128 dots
    # (or K=256 groups on v6e/v7x) instead of the single packed contraction.
    assert 9 * KP <= 128

    w1, aff1 = _prep_conv_params(params["w1"], params["b1"], params["g1"], params["be1"], KP)
    w2, aff2 = _prep_conv_params(params["w2"], params["b2"], params["g2"], params["be2"], KP)

    # NCHW -> NHWC (real channels only, bf16); pack the 2x2 pool window with free,
    # metadata-only reshapes: (N, Ho, hy, Wo, wx*KP + c).
    x = jnp.transpose(x_nchw, (0, 2, 3, 1)).astype(jnp.bfloat16)
    x = jnp.pad(x, ((0, 0), (0, 0), (0, 0), (0, KP - cin)))
    x = x.reshape(N, Ho, 2, Wo, 2 * KP)

    Wp = _round_up(Wo + 2, 8)             # keep tap slices sublane-tile friendly

    def zero_map(nd):
        return lambda i: (0,) * nd

    inputs = (x, w1, aff1, w2, aff2)
    out = pl.pallas_call(
        _down_layer_kernel,
        out_shape=jax.ShapeDtypeStruct((N, cout, Ho * Wo), jnp.float32),
        grid=(1,),
        in_specs=[pl.BlockSpec(a.shape, zero_map(a.ndim)) for a in inputs],
        out_specs=pl.BlockSpec((N, cout, Ho * Wo), zero_map(3)),
        scratch_shapes=[pltpu.VMEM((N, Ho + 2, Wp, KP), jnp.bfloat16)],
        compiler_params=pltpu.CompilerParams(
            dimension_semantics=("arbitrary",),
            vmem_limit_bytes=32 * 1024 * 1024,   # explicit budget; safe on v5e/v6e/v7x
        ),
    )(*inputs)

    return out.reshape(N, cout, Ho, Wo)   # metadata-only reshape back to NCHW


# ----------------------------- plain-JAX reference --------------------------- #
def _ref_conv_bn_relu(x_nchw, w, b, g, be):
    y = lax.conv_general_dilated(x_nchw, w, (1, 1), "SAME",
                                 dimension_numbers=("NCHW", "OIHW", "NCHW"))
    y = y + b.reshape(1, -1, 1, 1)
    mu = jnp.mean(y, axis=(0, 2, 3), keepdims=True)
    var = jnp.mean((y - mu) ** 2, axis=(0, 2, 3), keepdims=True)
    y = (y - mu) * lax.rsqrt(var + BN_EPS) * g.reshape(1, -1, 1, 1) + be.reshape(1, -1, 1, 1)
    return jnp.maximum(y, 0.0)


def ref_forward(params, x_nchw):
    p = lax.reduce_window(x_nchw, -jnp.inf, lax.max,
                          (1, 1, 2, 2), (1, 1, 2, 2), "VALID")
    h = _ref_conv_bn_relu(p, params["w1"], params["b1"], params["g1"], params["be1"])
    h = _ref_conv_bn_relu(h, params["w2"], params["b2"], params["g2"], params["be2"])
    return h


# ------------------------------------ main ----------------------------------- #
if __name__ == "__main__":
    in_ch, out_ch = 8, 4
    N, H, W = 2, 16, 16
    key = jax.random.PRNGKey(0)
    ks = jax.random.split(key, 7)
    params = {
        # Conv2d(in_ch, out_ch, 3, padding=1): PyTorch weight layout (out, in, kH, kW)
        "w1": 0.1 * jax.random.normal(ks[0], (out_ch, in_ch, 3, 3), jnp.float32),
        "b1": 0.1 * jax.random.normal(ks[1], (out_ch,), jnp.float32),
        "g1": 1.0 + 0.1 * jax.random.normal(ks[2], (out_ch,), jnp.float32),
        "be1": 0.1 * jax.random.normal(ks[3], (out_ch,), jnp.float32),
        # Conv2d(out_ch, out_ch, 3, padding=1)
        "w2": 0.1 * jax.random.normal(ks[4], (out_ch, out_ch, 3, 3), jnp.float32),
        "b2": 0.1 * jax.random.normal(ks[5], (out_ch,), jnp.float32),
        "g2": jnp.ones((out_ch,), jnp.float32),
        "be2": jnp.zeros((out_ch,), jnp.float32),
    }
    x = jax.random.normal(ks[6], (N, in_ch, H, W), jnp.float32)

    out = jax.block_until_ready(down_layer_forward(params, x))
    ref = jax.block_until_ready(ref_forward(params, x))

    assert out.shape == (N, out_ch, H // 2, W // 2), out.shape
    if not jnp.allclose(out, ref, atol=5e-2, rtol=5e-2):
        raise AssertionError(
            "Pallas output mismatch vs JAX reference, max abs diff "
            f"{float(jnp.max(jnp.abs(out - ref)))}")
    print("KERNEL_OK")
</pallas_src>

<mosaic_0001>
module attributes {stable_mosaic.version = 11 : i64} {
  func.func @_down_layer_kernel(%arg0: i32, %arg1: memref<2x8x2x8x16xbf16, #tpu.memory_space<vmem>>, %arg2: memref<72x128xbf16, #tpu.memory_space<vmem>>, %arg3: memref<3x128xf32, #tpu.memory_space<vmem>>, %arg4: memref<72x128xbf16, #tpu.memory_space<vmem>>, %arg5: memref<3x128xf32, #tpu.memory_space<vmem>>, %arg6: memref<2x4x64xf32, #tpu.memory_space<vmem>>, %arg7: memref<2x10x16x8xbf16, #tpu.memory_space<vmem>>) attributes {dimension_semantics = [#tpu.dimension_semantics<arbitrary>], iteration_bounds = array<i64: 1>, scalar_prefetch = 0 : i64, scratch_operands = 1 : i64, tpu.core_type = #tpu.core_type<tc>, window_params = [{pipeline_mode = #tpu.pipeline_mode<synchronous>, transform_indices = @transform_0, window_bounds = array<i64: 2, 8, 2, 8, 16>}, {pipeline_mode = #tpu.pipeline_mode<synchronous>, transform_indices = @transform_1, window_bounds = array<i64: 72, 128>}, {pipeline_mode = #tpu.pipeline_mode<synchronous>, transform_indices = @transform_2, window_bounds = array<i64: 3, 128>}, {pipeline_mode = #tpu.pipeline_mode<synchronous>, transform_indices = @transform_3, window_bounds = array<i64: 72, 128>}, {pipeline_mode = #tpu.pipeline_mode<synchronous>, transform_indices = @transform_4, window_bounds = array<i64: 3, 128>}, {pipeline_mode = #tpu.pipeline_mode<synchronous>, transform_indices = @transform_5, window_bounds = array<i64: 2, 4, 64>}]} {
    %c0 = arith.constant 0 : index
    %c0_0 = arith.constant 0 : index
    %c0_1 = arith.constant 0 : index
    %c0_2 = arith.constant 0 : index
    %c0_3 = arith.constant 0 : index
    %0 = vector.load %arg1[%c0, %c0_0, %c0_1, %c0_2, %c0_3] : memref<2x8x2x8x16xbf16, #tpu.memory_space<vmem>>, vector<2x8x1x8x16xbf16>
    %1 = vector.shape_cast %0 : vector<2x8x1x8x16xbf16> to vector<2x8x8x16xbf16>
    %c0_4 = arith.constant 0 : index
    %c0_5 = arith.constant 0 : index
    %c1 = arith.constant 1 : index
    %c0_6 = arith.constant 0 : index
    %c0_7 = arith.constant 0 : index
    %2 = vector.load %arg1[%c0_4, %c0_5, %c1, %c0_6, %c0_7] : memref<2x8x2x8x16xbf16, #tpu.memory_space<vmem>>, vector<2x8x1x8x16xbf16>
    %3 = vector.shape_cast %2 : vector<2x8x1x8x16xbf16> to vector<2x8x8x16xbf16>
    %4 = arith.maximumf %1, %3 : vector<2x8x8x16xbf16>
    %5 = vector.extract_strided_slice %4 {offsets = [0, 0, 0, 0], sizes = [2, 8, 8, 8], strides = [1, 1, 1, 1]} : vector<2x8x8x16xbf16> to vector<2x8x8x8xbf16>
    %6 = vector.extract_strided_slice %4 {offsets = [0, 0, 0, 8], sizes = [2, 8, 8, 8], strides = [1, 1, 1, 1]} : vector<2x8x8x16xbf16> to vector<2x8x8x8xbf16>
    %7 = arith.maximumf %5, %6 : vector<2x8x8x8xbf16>
    %cst = arith.constant 0.000000e+00 : bf16
    %8 = vector.broadcast %cst : bf16 to vector<2x16x8xbf16>
    %cst_8 = arith.constant 0.000000e+00 : bf16
    %9 = vector.broadcast %cst_8 : bf16 to vector<2x8x8xbf16>
    %c0_9 = arith.constant 0 : index
    %c0_10 = arith.constant 0 : index
    %c0_11 = arith.constant 0 : index
    %c0_12 = arith.constant 0 : index
    %10 = vector.load %arg7[%c0_9, %c0_10, %c0_11, %c0_12] : memref<2x10x16x8xbf16, #tpu.memory_space<vmem>>, vector<2x1x16x8xbf16>
    %11 = vector.shape_cast %10 : vector<2x1x16x8xbf16> to vector<2x16x8xbf16>
    %12 = vector.shape_cast %8 : vector<2x16x8xbf16> to vector<2x1x16x8xbf16>
    tpu.vector_store %arg7[%c0_9, %c0_10, %c0_11, %c0_12], %12 {strides = array<i32>} : memref<2x10x16x8xbf16, #tpu.memory_space<vmem>>, vector<2x1x16x8xbf16>,
    %c0_13 = arith.constant 0 : index
    %c9 = arith.constant 9 : index
    %c0_14 = arith.constant 0 : index
    %c0_15 = arith.constant 0 : index
    %13 = vector.load %arg7[%c0_13, %c9, %c0_14, %c0_15] : memref<2x10x16x8xbf16, #tpu.memory_space<vmem>>, vector<2x1x16x8xbf16>
    %14 = vector.shape_cast %13 : vector<2x1x16x8xbf16> to vector<2x16x8xbf16>
    %15 = vector.shape_cast %8 : vector<2x16x8xbf16> to vector<2x1x16x8xbf16>
    tpu.vector_store %arg7[%c0_13, %c9, %c0_14, %c0_15], %15 {strides = array<i32>} : memref<2x10x16x8xbf16, #tpu.memory_space<vmem>>, vector<2x1x16x8xbf16>,
    %c0_16 = arith.constant 0 : index
    %c1_17 = arith.constant 1 : index
    %c0_18 = arith.constant 0 : index
    %c0_19 = arith.constant 0 : index
    %16 = vector.load %arg7[%c0_16, %c1_17, %c0_18, %c0_19] : memref<2x10x16x8xbf16, #tpu.memory_space<vmem>>, vector<2x8x1x8xbf16>
    %17 = vector.shape_cast %16 : vector<2x8x1x8xbf16> to vector<2x8x8xbf16>
    %18 = vector.shape_cast %9 : vector<2x8x8xbf16> to vector<2x8x1x8xbf16>
    tpu.vector_store %arg7[%c0_16, %c1_17, %c0_18, %c0_19], %18 {strides = array<i32>} : memref<2x10x16x8xbf16, #tpu.memory_space<vmem>>, vector<2x8x1x8xbf16>,
    %c0_20 = arith.constant 0 : index
    %c1_21 = arith.constant 1 : index
    %c9_22 = arith.constant 9 : index
    %c0_23 = arith.constant 0 : index
    %19 = vector.load %arg7[%c0_20, %c1_21, %c9_22, %c0_23] : memref<2x10x16x8xbf16, #tpu.memory_space<vmem>>, vector<2x8x1x8xbf16>
    %20 = vector.shape_cast %19 : vector<2x8x1x8xbf16> to vector<2x8x8xbf16>
    %21 = vector.shape_cast %9 : vector<2x8x8xbf16> to vector<2x8x1x8xbf16>
    tpu.vector_store %arg7[%c0_20, %c1_21, %c9_22, %c0_23], %21 {strides = array<i32>} : memref<2x10x16x8xbf16, #tpu.memory_space<vmem>>, vector<2x8x1x8xbf16>,
    %c0_24 = arith.constant 0 : index
    %c1_25 = arith.constant 1 : index
    %c1_26 = arith.constant 1 : index
    %c0_27 = arith.constant 0 : index
    %22 = vector.load %arg7[%c0_24, %c1_25, %c1_26, %c0_27] : memref<2x10x16x8xbf16, #tpu.memory_space<vmem>>, vector<2x8x8x8xbf16>
    tpu.vector_store %arg7[%c0_24, %c1_25, %c1_26, %c0_27], %7 {strides = array<i32>} : memref<2x10x16x8xbf16, #tpu.memory_space<vmem>>, vector<2x8x8x8xbf16>,
    %c0_28 = arith.constant 0 : index
    %c0_29 = arith.constant 0 : index
    %c0_30 = arith.constant 0 : index
    %c0_31 = arith.constant 0 : index
    %23 = vector.load %arg7[%c0_28, %c0_29, %c0_30, %c0_31] : memref<2x10x16x8xbf16, #tpu.memory_space<vmem>>, vector<2x8x8x8xbf16>
    %24 = vector.shape_cast %23 : vector<2x8x8x8xbf16> to vector<128x8xbf16>
    %c0_32 = arith.constant 0 : index
    %c0_33 = arith.constant 0 : index
    %c1_34 = arith.constant 1 : index
    %c0_35 = arith.constant 0 : index
    %25 = vector.load %arg7[%c0_32, %c0_33, %c1_34, %c0_35] : memref<2x10x16x8xbf16, #tpu.memory_space<vmem>>, vector<2x8x8x8xbf16>
    %26 = vector.shape_cast %25 : vector<2x8x8x8xbf16> to vector<128x8xbf16>
    %c0_36 = arith.constant 0 : index
    %c0_37 = arith.constant 0 : index
    %c2 = arith.constant 2 : index
    %c0_38 = arith.constant 0 : index
    %27 = vector.load %arg7[%c0_36, %c0_37, %c2, %c0_38] : memref<2x10x16x8xbf16, #tpu.memory_space<vmem>>, vector<2x8x8x8xbf16>
    %28 = vector.shape_cast %27 : vector<2x8x8x8xbf16> to vector<128x8xbf16>
    %c0_39 = arith.constant 0 : index
    %c1_40 = arith.constant 1 : index
    %c0_41 = arith.constant 0 : index
    %c0_42 = arith.constant 0 : index
    %29 = vector.load %arg7[%c0_39, %c1_40, %c0_41, %c0_42] : memref<2x10x16x8xbf16, #tpu.memory_space<vmem>>, vector<2x8x8x8xbf16>
    %30 = vector.shape_cast %29 : vector<2x8x8x8xbf16> to vector<128x8xbf16>
    %c0_43 = arith.constant 0 : index
    %c1_44 = arith.constant 1 : index
    %c1_45 = arith.constant 1 : index
    %c0_46 = arith.constant 0 : index
    %31 = vector.load %arg7[%c0_43, %c1_44, %c1_45, %c0_46] : memref<2x10x16x8xbf16, #tpu.memory_space<vmem>>, vector<2x8x8x8xbf16>
    %32 = vector.shape_cast %31 : vector<2x8x8x8xbf16> to vector<128x8xbf16>
    %c0_47 = arith.constant 0 : index
    %c1_48 = arith.constant 1 : index
    %c2_49 = arith.constant 2 : index
    %c0_50 = arith.constant 0 : index
    %33 = vector.load %arg7[%c0_47, %c1_48, %c2_49, %c0_50] : memref<2x10x16x8xbf16, #tpu.memory_space<vmem>>, vector<2x8x8x8xbf16>
    %34 = vector.shape_cast %33 : vector<2x8x8x8xbf16> to vector<128x8xbf16>
    %c0_51 = arith.constant 0 : index
    %c2_52 = arith.constant 2 : index
    %c0_53 = arith.constant 0 : index
    %c0_54 = arith.constant 0 : index
    %35 = vector.load %arg7[%c0_51, %c2_52, %c0_53, %c0_54] : memref<2x10x16x8xbf16, #tpu.memory_space<vmem>>, vector<2x8x8x8xbf16>
    %36 = vector.shape_cast %35 : vector<2x8x8x8xbf16> to vector<128x8xbf16>
    %c0_55 = arith.constant 0 : index
    %c2_56 = arith.constant 2 : index
    %c1_57 = arith.constant 1 : index
    %c0_58 = arith.constant 0 : index
    %37 = vector.load %arg7[%c0_55, %c2_56, %c1_57, %c0_58] : memref<2x10x16x8xbf16, #tpu.memory_space<vmem>>, vector<2x8x8x8xbf16>
    %38 = vector.shape_cast %37 : vector<2x8x8x8xbf16> to vector<128x8xbf16>
    %c0_59 = arith.constant 0 : index
    %c2_60 = arith.constant 2 : index
    %c2_61 = arith.constant 2 : index
    %c0_62 = arith.constant 0 : index
    %39 = vector.load %arg7[%c0_59, %c2_60, %c2_61, %c0_62] : memref<2x10x16x8xbf16, #tpu.memory_space<vmem>>, vector<2x8x8x8xbf16>
    %40 = vector.shape_cast %39 : vector<2x8x8x8xbf16> to vector<128x8xbf16>
    %41 = tpu.concatenate %24, %26, %28, %30, %32, %34, %36, %38, %40 in 1 : vector<128x8xbf16>, vector<128x8xbf16>, vector<128x8xbf16>, vector<128x8xbf16>, vector<128x8xbf16>, vector<128x8xbf16>, vector<128x8xbf16>, vector<128x8xbf16>, vector<128x8xbf16> -> vector<128x72xbf16>
    %c0_63 = arith.constant 0 : index
    %c0_64 = arith.constant 0 : index
    %42 = vector.load %arg2[%c0_63, %c0_64] : memref<72x128xbf16, #tpu.memory_space<vmem>>, vector<72x128xbf16>
    %cst_65 = arith.constant dense<0.000000e+00> : vector<128x128xf32>
    %43 = tpu.matmul %41, %42, %cst_65 {dimension_numbers = #tpu.dot_dimension_numbers<[1], [0], [0], [1], [0, 0, 1, 1], [], []>} : vector<128x72xbf16>, vector<72x128xbf16>, vector<128x128xf32> -> vector<128x128xf32>
    %c0_66 = arith.constant 0 : index
    %c0_67 = arith.constant 0 : index
    %44 = vector.load %arg3[%c0_66, %c0_67] : memref<3x128xf32, #tpu.memory_space<vmem>>, vector<1x128xf32>
    %45 = vector.broadcast %44 : vector<1x128xf32> to vector<128x128xf32>
    %46 = arith.addf %43, %45 : vector<128x128xf32>
    %cst_68 = arith.constant dense<0.000000e+00> : vector<128xf32>
    %47 = vector.multi_reduction <add>, %46, %cst_68 [0] : vector<128x128xf32> to vector<128xf32>
    %48 = vector.shape_cast %47 : vector<128xf32> to vector<1x128xf32>
    %cst_69 = arith.constant 1.280000e+02 : f32
    %49 = vector.broadcast %cst_69 : f32 to vector<1x128xf32>
    %50 = arith.divf %48, %49 : vector<1x128xf32>
    %51 = vector.broadcast %50 : vector<1x128xf32> to vector<128x128xf32>
    %52 = arith.subf %46, %51 : vector<128x128xf32>
    %53 = arith.mulf %52, %52 : vector<128x128xf32>
    %cst_70 = arith.constant dense<0.000000e+00> : vector<128xf32>
    %54 = vector.multi_reduction <add>, %53, %cst_70 [0] : vector<128x128xf32> to vector<128xf32>
    %55 = vector.shape_cast %54 : vector<128xf32> to vector<1x128xf32>
    %cst_71 = arith.constant 1.280000e+02 : f32
    %56 = vector.broadcast %cst_71 : f32 to vector<1x128xf32>
    %57 = arith.divf %55, %56 : vector<1x128xf32>
    %58 = vector.broadcast %50 : vector<1x128xf32> to vector<128x128xf32>
    %59 = arith.subf %46, %58 : vector<128x128xf32>
    %cst_72 = arith.constant 9.99999974E-6 : f32
    %60 = vector.broadcast %cst_72 : f32 to vector<1x128xf32>
    %61 = arith.addf %57, %60 : vector<1x128xf32>
    %62 = math.rsqrt %61 : vector<1x128xf32>
    %63 = vector.broadcast %62 : vector<1x128xf32> to vector<128x128xf32>
    %64 = arith.mulf %59, %63 : vector<128x128xf32>
    %c1_73 = arith.constant 1 : index
    %c0_74 = arith.constant 0 : index
    %65 = vector.load %arg3[%c1_73, %c0_74] : memref<3x128xf32, #tpu.memory_space<vmem>>, vector<1x128xf32>
    %66 = vector.broadcast %65 : vector<1x128xf32> to vector<128x128xf32>
    %67 = arith.mulf %64, %66 : vector<128x128xf32>
    %c2_75 = arith.constant 2 : index
    %c0_76 = arith.constant 0 : index
    %68 = vector.load %arg3[%c2_75, %c0_76] : memref<3x128xf32, #tpu.memory_space<vmem>>, vector<1x128xf32>
    %69 = vector.broadcast %68 : vector<1x128xf32> to vector<128x128xf32>
    %70 = arith.addf %67, %69 : vector<128x128xf32>
    %cst_77 = arith.constant 0.000000e+00 : f32
    %71 = vector.broadcast %cst_77 : f32 to vector<128x128xf32>
    %72 = arith.maximumf %70, %71 : vector<128x128xf32>
    %73 = vector.extract_strided_slice %72 {offsets = [0, 0], sizes = [128, 8], strides = [1, 1]} : vector<128x128xf32> to vector<128x8xf32>
    %74 = arith.truncf %73 : vector<128x8xf32> to vector<128x8xbf16>
    %75 = vector.shape_cast %74 : vector<128x8xbf16> to vector<2x8x8x8xbf16>
    %cst_78 = arith.constant 0.000000e+00 : bf16
    %76 = vector.broadcast %cst_78 : bf16 to vector<2x16x8xbf16>
    %cst_79 = arith.constant 0.000000e+00 : bf16
    %77 = vector.broadcast %cst_79 : bf16 to vector<2x8x8xbf16>
    %c0_80 = arith.constant 0 : index
    %c0_81 = arith.constant 0 : index
    %c0_82 = arith.constant 0 : index
    %c0_83 = arith.constant 0 : index
    %78 = vector.load %arg7[%c0_80, %c0_81, %c0_82, %c0_83] : memref<2x10x16x8xbf16, #tpu.memory_space<vmem>>, vector<2x1x16x8xbf16>
    %79 = vector.shape_cast %78 : vector<2x1x16x8xbf16> to vector<2x16x8xbf16>
    %80 = vector.shape_cast %76 : vector<2x16x8xbf16> to vector<2x1x16x8xbf16>
    tpu.vector_store %arg7[%c0_80, %c0_81, %c0_82, %c0_83], %80 {strides = array<i32>} : memref<2x10x16x8xbf16, #tpu.memory_space<vmem>>, vector<2x1x16x8xbf16>,
    %c0_84 = arith.constant 0 : index
    %c9_85 = arith.constant 9 : index
    %c0_86 = arith.constant 0 : index
    %c0_87 = arith.constant 0 : index
    %81 = vector.load %arg7[%c0_84, %c9_85, %c0_86, %c0_87] : memref<2x10x16x8xbf16, #tpu.memory_space<vmem>>, vector<2x1x16x8xbf16>
    %82 = vector.shape_cast %81 : vector<2x1x16x8xbf16> to vector<2x16x8xbf16>
    %83 = vector.shape_cast %76 : vector<2x16x8xbf16> to vector<2x1x16x8xbf16>
    tpu.vector_store %arg7[%c0_84, %c9_85, %c0_86, %c0_87], %83 {strides = array<i32>} : memref<2x10x16x8xbf16, #tpu.memory_space<vmem>>, vector<2x1x16x8xbf16>,
    %c0_88 = arith.constant 0 : index
    %c1_89 = arith.constant 1 : index
    %c0_90 = arith.constant 0 : index
    %c0_91 = arith.constant 0 : index
    %84 = vector.load %arg7[%c0_88, %c1_89, %c0_90, %c0_91] : memref<2x10x16x8xbf16, #tpu.memory_space<vmem>>, vector<2x8x1x8xbf16>
    %85 = vector.shape_cast %84 : vector<2x8x1x8xbf16> to vector<2x8x8xbf16>
    %86 = vector.shape_cast %77 : vector<2x8x8xbf16> to vector<2x8x1x8xbf16>
    tpu.vector_store %arg7[%c0_88, %c1_89, %c0_90, %c0_91], %86 {strides = array<i32>} : memref<2x10x16x8xbf16, #tpu.memory_space<vmem>>, vector<2x8x1x8xbf16>,
    %c0_92 = arith.constant 0 : index
    %c1_93 = arith.constant 1 : index
    %c9_94 = arith.constant 9 : index
    %c0_95 = arith.constant 0 : index
    %87 = vector.load %arg7[%c0_92, %c1_93, %c9_94, %c0_95] : memref<2x10x16x8xbf16, #tpu.memory_space<vmem>>, vector<2x8x1x8xbf16>
    %88 = vector.shape_cast %87 : vector<2x8x1x8xbf16> to vector<2x8x8xbf16>
    %89 = vector.shape_cast %77 : vector<2x8x8xbf16> to vector<2x8x1x8xbf16>
    tpu.vector_store %arg7[%c0_92, %c1_93, %c9_94, %c0_95], %89 {strides = array<i32>} : memref<2x10x16x8xbf16, #tpu.memory_space<vmem>>, vector<2x8x1x8xbf16>,
    %c0_96 = arith.constant 0 : index
    %c1_97 = arith.constant 1 : index
    %c1_98 = arith.constant 1 : index
    %c0_99 = arith.constant 0 : index
    %90 = vector.load %arg7[%c0_96, %c1_97, %c1_98, %c0_99] : memref<2x10x16x8xbf16, #tpu.memory_space<vmem>>, vector<2x8x8x8xbf16>
    tpu.vector_store %arg7[%c0_96, %c1_97, %c1_98, %c0_99], %75 {strides = array<i32>} : memref<2x10x16x8xbf16, #tpu.memory_space<vmem>>, vector<2x8x8x8xbf16>,
    %c0_100 = arith.constant 0 : index
    %c0_101 = arith.constant 0 : index
    %c0_102 = arith.constant 0 : index
    %c0_103 = arith.constant 0 : index
    %91 = vector.load %arg7[%c0_100, %c0_101, %c0_102, %c0_103] : memref<2x10x16x8xbf16, #tpu.memory_space<vmem>>, vector<2x8x8x8xbf16>
    %92 = vector.shape_cast %91 : vector<2x8x8x8xbf16> to vector<128x8xbf16>
    %c0_104 = arith.constant 0 : index
    %c0_105 = arith.constant 0 : index
    %c1_106 = arith.constant 1 : index
    %c0_107 = arith.constant 0 : index
    %93 = vector.load %arg7[%c0_104, %c0_105, %c1_106, %c0_107] : memref<2x10x16x8xbf16, #tpu.memory_space<vmem>>, vector<2x8x8x8xbf16>
    %94 = vector.shape_cast %93 : vector<2x8x8x8xbf16> to vector<128x8xbf16>
    %c0_108 = arith.constant 0 : index
    %c0_109 = arith.constant 0 : index
    %c2_110 = arith.constant 2 : index
    %c0_111 = arith.constant 0 : index
    %95 = vector.load %arg7[%c0_108, %c0_109, %c2_110, %c0_111] : memref<2x10x16x8xbf16, #tpu.memory_space<vmem>>, vector<2x8x8x8xbf16>
    %96 = vector.shape_cast %95 : vector<2x8x8x8xbf16> to vector<128x8xbf16>
    %c0_112 = arith.constant 0 : index
    %c1_113 = arith.constant 1 : index
    %c0_114 = arith.constant 0 : index
    %c0_115 = arith.constant 0 : index
    %97 = vector.load %arg7[%c0_112, %c1_113, %c0_114, %c0_115] : memref<2x10x16x8xbf16, #tpu.memory_space<vmem>>, vector<2x8x8x8xbf16>
    %98 = vector.shape_cast %97 : vector<2x8x8x8xbf16> to vector<128x8xbf16>
    %c0_116 = arith.constant 0 : index
    %c1_117 = arith.constant 1 : index
    %c1_118 = arith.constant 1 : index
    %c0_119 = arith.constant 0 : index
    %99 = vector.load %arg7[%c0_116, %c1_117, %c1_118, %c0_119] : memref<2x10x16x8xbf16, #tpu.memory_space<vmem>>, vector<2x8x8x8xbf16>
    %100 = vector.shape_cast %99 : vector<2x8x8x8xbf16> to vector<128x8xbf16>
    %c0_120 = arith.constant 0 : index
    %c1_121 = arith.constant 1 : index
    %c2_122 = arith.constant 2 : index
    %c0_123 = arith.constant 0 : index
    %101 = vector.load %arg7[%c0_120, %c1_121, %c2_122, %c0_123] : memref<2x10x16x8xbf16, #tpu.memory_space<vmem>>, vector<2x8x8x8xbf16>
    %102 = vector.shape_cast %101 : vector<2x8x8x8xbf16> to vector<128x8xbf16>
    %c0_124 = arith.constant 0 : index
    %c2_125 = arith.constant 2 : index
    %c0_126 = arith.constant 0 : index
    %c0_127 = arith.constant 0 : index
    %103 = vector.load %arg7[%c0_124, %c2_125, %c0_126, %c0_127] : memref<2x10x16x8xbf16, #tpu.memory_space<vmem>>, vector<2x8x8x8xbf16>
    %104 = vector.shape_cast %103 : vector<2x8x8x8xbf16> to vector<128x8xbf16>
    %c0_128 = arith.constant 0 : index
    %c2_129 = arith.constant 2 : index
    %c1_130 = arith.constant 1 : index
    %c0_131 = arith.constant 0 : index
    %105 = vector.load %arg7[%c0_128, %c2_129, %c1_130, %c0_131] : memref<2x10x16x8xbf16, #tpu.memory_space<vmem>>, vector<2x8x8x8xbf16>
    %106 = vector.shape_cast %105 : vector<2x8x8x8xbf16> to vector<128x8xbf16>
    %c0_132 = arith.constant 0 : index
    %c2_133 = arith.constant 2 : index
    %c2_134 = arith.constant 2 : index
    %c0_135 = arith.constant 0 : index
    %107 = vector.load %arg7[%c0_132, %c2_133, %c2_134, %c0_135] : memref<2x10x16x8xbf16, #tpu.memory_space<vmem>>, vector<2x8x8x8xbf16>
    %108 = vector.shape_cast %107 : vector<2x8x8x8xbf16> to vector<128x8xbf16>
    %109 = tpu.concatenate %92, %94, %96, %98, %100, %102, %104, %106, %108 in 1 : vector<128x8xbf16>, vector<128x8xbf16>, vector<128x8xbf16>, vector<128x8xbf16>, vector<128x8xbf16>, vector<128x8xbf16>, vector<128x8xbf16>, vector<128x8xbf16>, vector<128x8xbf16> -> vector<128x72xbf16>
    %c0_136 = arith.constant 0 : index
    %c0_137 = arith.constant 0 : index
    %110 = vector.load %arg4[%c0_136, %c0_137] : memref<72x128xbf16, #tpu.memory_space<vmem>>, vector<72x128xbf16>
    %cst_138 = arith.constant dense<0.000000e+00> : vector<128x128xf32>
    %111 = tpu.matmul %109, %110, %cst_138 {dimension_numbers = #tpu.dot_dimension_numbers<[1], [0], [0], [1], [0, 0, 1, 1], [], []>} : vector<128x72xbf16>, vector<72x128xbf16>, vector<128x128xf32> -> vector<128x128xf32>
    %c0_139 = arith.constant 0 : index
    %c0_140 = arith.constant 0 : index
    %112 = vector.load %arg5[%c0_139, %c0_140] : memref<3x128xf32, #tpu.memory_space<vmem>>, vector<1x128xf32>
    %113 = vector.broadcast %112 : vector<1x128xf32> to vector<128x128xf32>
    %114 = arith.addf %111, %113 : vector<128x128xf32>
    %cst_141 = arith.constant dense<0.000000e+00> : vector<128xf32>
    %115 = vector.multi_reduction <add>, %114, %cst_141 [0] : vector<128x128xf32> to vector<128xf32>
    %116 = vector.shape_cast %115 : vector<128xf32> to vector<1x128xf32>
    %cst_142 = arith.constant 1.280000e+02 : f32
    %117 = vector.broadcast %cst_142 : f32 to vector<1x128xf32>
    %118 = arith.divf %116, %117 : vector<1x128xf32>
    %119 = vector.broadcast %118 : vector<1x128xf32> to vector<128x128xf32>
    %120 = arith.subf %114, %119 : vector<128x128xf32>
    %121 = arith.mulf %120, %120 : vector<128x128xf32>
    %cst_143 = arith.constant dense<0.000000e+00> : vector<128xf32>
    %122 = vector.multi_reduction <add>, %121, %cst_143 [0] : vector<128x128xf32> to vector<128xf32>
    %123 = vector.shape_cast %122 : vector<128xf32> to vector<1x128xf32>
    %cst_144 = arith.constant 1.280000e+02 : f32
    %124 = vector.broadcast %cst_144 : f32 to vector<1x128xf32>
    %125 = arith.divf %123, %124 : vector<1x128xf32>
    %126 = vector.broadcast %118 : vector<1x128xf32> to vector<128x128xf32>
    %127 = arith.subf %114, %126 : vector<128x128xf32>
    %cst_145 = arith.constant 9.99999974E-6 : f32
    %128 = vector.broadcast %cst_145 : f32 to vector<1x128xf32>
    %129 = arith.addf %125, %128 : vector<1x128xf32>
    %130 = math.rsqrt %129 : vector<1x128xf32>
    %131 = vector.broadcast %130 : vector<1x128xf32> to vector<128x128xf32>
    %132 = arith.mulf %127, %131 : vector<128x128xf32>
    %c1_146 = arith.constant 1 : index
    %c0_147 = arith.constant 0 : index
    %133 = vector.load %arg5[%c1_146, %c0_147] : memref<3x128xf32, #tpu.memory_space<vmem>>, vector<1x128xf32>
    %134 = vector.broadcast %133 : vector<1x128xf32> to vector<128x128xf32>
    %135 = arith.mulf %132, %134 : vector<128x128xf32>
    %c2_148 = arith.constant 2 : index
    %c0_149 = arith.constant 0 : index
    %136 = vector.load %arg5[%c2_148, %c0_149] : memref<3x128xf32, #tpu.memory_space<vmem>>, vector<1x128xf32>
    %137 = vector.broadcast %136 : vector<1x128xf32> to vector<128x128xf32>
    %138 = arith.addf %135, %137 : vector<128x128xf32>
    %cst_150 = arith.constant 0.000000e+00 : f32
    %139 = vector.broadcast %cst_150 : f32 to vector<128x128xf32>
    %140 = arith.maximumf %138, %139 : vector<128x128xf32>
    %141 = tpu.transpose %140, [1, 0] : vector<128x128xf32> -> vector<128x128xf32>
    %142 = vector.extract_strided_slice %141 {offsets = [0, 0], sizes = [4, 64], strides = [1, 1]} : vector<128x128xf32> to vector<4x64xf32>
    %c0_151 = arith.constant 0 : index
    %c0_152 = arith.constant 0 : index
    %c0_153 = arith.constant 0 : index
    %143 = vector.load %arg6[%c0_151, %c0_152, %c0_153] : memref<2x4x64xf32, #tpu.memory_space<vmem>>, vector<1x4x64xf32>
    %144 = vector.shape_cast %143 : vector<1x4x64xf32> to vector<4x64xf32>
    %145 = vector.shape_cast %142 : vector<4x64xf32> to vector<1x4x64xf32>
    tpu.vector_store %arg6[%c0_151, %c0_152, %c0_153], %145 {strides = array<i32>} : memref<2x4x64xf32, #tpu.memory_space<vmem>>, vector<1x4x64xf32>,
    %146 = vector.extract_strided_slice %141 {offsets = [0, 64], sizes = [4, 64], strides = [1, 1]} : vector<128x128xf32> to vector<4x64xf32>
    %c1_154 = arith.constant 1 : index
    %c0_155 = arith.constant 0 : index
    %c0_156 = arith.constant 0 : index
    %147 = vector.load %arg6[%c1_154, %c0_155, %c0_156] : memref<2x4x64xf32, #tpu.memory_space<vmem>>, vector<1x4x64xf32>
    %148 = vector.shape_cast %147 : vector<1x4x64xf32> to vector<4x64xf32>
    %149 = vector.shape_cast %146 : vector<4x64xf32> to vector<1x4x64xf32>
    tpu.vector_store %arg6[%c1_154, %c0_155, %c0_156], %149 {strides = array<i32>} : memref<2x4x64xf32, #tpu.memory_space<vmem>>, vector<1x4x64xf32>,
    return
  }
  func.func @transform_0(%arg0: i32) -> (i32, i32, i32, i32, i32) {
    %c0_i32 = arith.constant 0 : i32
    %c0_i32_0 = arith.constant 0 : i32
    %c0_i32_1 = arith.constant 0 : i32
    %c0_i32_2 = arith.constant 0 : i32
    %c0_i32_3 = arith.constant 0 : i32
    %c0_i32_4 = arith.constant 0 : i32
    return %c0_i32, %c0_i32_0, %c0_i32_1, %c0_i32_2, %c0_i32_3 : i32, i32, i32, i32, i32
  }
  func.func @transform_1(%arg0: i32) -> (i32, i32) {
    %c0_i32 = arith.constant 0 : i32
    %c0_i32_0 = arith.constant 0 : i32
    %c0_i32_1 = arith.constant 0 : i32
    return %c0_i32, %c0_i32_0 : i32, i32
  }
  func.func @transform_2(%arg0: i32) -> (i32, i32) {
    %c0_i32 = arith.constant 0 : i32
    %c0_i32_0 = arith.constant 0 : i32
    %c0_i32_1 = arith.constant 0 : i32
    return %c0_i32, %c0_i32_0 : i32, i32
  }
  func.func @transform_3(%arg0: i32) -> (i32, i32) {
    %c0_i32 = arith.constant 0 : i32
    %c0_i32_0 = arith.constant 0 : i32
    %c0_i32_1 = arith.constant 0 : i32
    return %c0_i32, %c0_i32_0 : i32, i32
  }
  func.func @transform_4(%arg0: i32) -> (i32, i32) {
    %c0_i32 = arith.constant 0 : i32
    %c0_i32_0 = arith.constant 0 : i32
    %c0_i32_1 = arith.constant 0 : i32
    return %c0_i32, %c0_i32_0 : i32, i32
  }
  func.func @transform_5(%arg0: i32) -> (i32, i32, i32) {
    %c0_i32 = arith.constant 0 : i32
    %c0_i32_0 = arith.constant 0 : i32
    %c0_i32_1 = arith.constant 0 : i32
    %c0_i32_2 = arith.constant 0 : i32
    return %c0_i32, %c0_i32_0, %c0_i32_1 : i32, i32, i32
  }
}

</mosaic_0001>

<llo_original>
// kernel: down_layer_forward.1
$region0: #{down_layer_forward.1}
  #allocation0 [shape = 'u32[]', space=smem, size = 0x4, offset = 0x4, fixed_abs, tag = 'smem constant byte address 0x4 - core index']
  #allocation1 [shape = 'u32[144,128]{1,0:T(1,128)}', space=vmem, size = 0x12000, scoped, tag = 'internal scratch']
  #allocation2 [shape = 'bf16[2,10,16,8]{3,2,1,0:T(16,128)(2,1)}', space=vmem, size = 0x14000, scoped, tag = 'scratch operand']
  %s0 = inlined_call_operand.vmem [shape: bf16[2,8,2,8,16], index: 0, kind: input, shape index: {}]
  %s1 = inlined_call_operand.vmem [shape: bf16[72,128], index: 1, kind: input, shape index: {}]
  %s2 = inlined_call_operand.vmem [shape: f32[3,128], index: 2, kind: input, shape index: {}]
  %s3 = inlined_call_operand.vmem [shape: bf16[72,128], index: 3, kind: input, shape index: {}]
  %s4 = inlined_call_operand.vmem [shape: f32[3,128], index: 4, kind: input, shape index: {}]
  %s5 = inlined_call_operand.vmem [shape: f32[2,4,64], index: 5, kind: output, shape index: {}]
  %s6 = sld [smem:[#allocation0]]
  $region30: #{down_layer_forward.1} parent=0
    _
  %s8 = ssub.s32 1, %s6
  %s9 = scalar_select 0, %s8, %s6
  // Predicated region
  $region2: #{down_layer_forward.1} parent=0 // pred_check
    _
  $region3: #{down_layer_forward.1} parent=0 // pred_check_branch
    %11 = sbr.rel (0) target = $region5
  $region4: #{down_layer_forward.1} parent=0 // pred_region
    _
  $region5: #{down_layer_forward.1} parent=0 // pred_fallthru
    _
  // Predicated region
  $region6: #{down_layer_forward.1} parent=0 // pred_check
    _
  $region7: #{down_layer_forward.1} parent=0 // pred_check_branch
    %13 = sbr.rel (0) target = $region9
  $region8: #{down_layer_forward.1} parent=0 // pred_region
    _
  $region9: #{down_layer_forward.1} parent=0 // pred_fallthru
    _
  // Predicated region
  $region10: #{down_layer_forward.1} parent=0 // pred_check
    _
  $region11: #{down_layer_forward.1} parent=0 // pred_check_branch
    %15 = sbr.rel (0) target = $region13
  $region12: #{down_layer_forward.1} parent=0 // pred_region
    _
  $region13: #{down_layer_forward.1} parent=0 // pred_fallthru
    _
  // Predicated region
  $region14: #{down_layer_forward.1} parent=0 // pred_check
    _
  $region15: #{down_layer_forward.1} parent=0 // pred_check_branch
    %17 = sbr.rel (0) target = $region17
  $region16: #{down_layer_forward.1} parent=0 // pred_region
    _
  $region17: #{down_layer_forward.1} parent=0 // pred_fallthru
    _
  // Predicated region
  $region18: #{down_layer_forward.1} parent=0 // pred_check
    _
  $region19: #{down_layer_forward.1} parent=0 // pred_check_branch
    %19 = sbr.rel (0) target = $region21
  $region20: #{down_layer_forward.1} parent=0 // pred_region
    _
  $region21: #{down_layer_forward.1} parent=0 // pred_fallthru
    _
  %v21 = vld [vmem:[%s0] sm:$0xf]
  %v22 = vld [vmem:[%s0 + $0x8] sm:$0xf]
  %v23 = vld [vmem:[%s0 + $0x10] sm:$0xf]
  %v24 = vld [vmem:[%s0 + $0x18] sm:$0xf]
  %v25 = vld [vmem:[%s0 + $0x20] sm:$0xf]
  %v26 = vld [vmem:[%s0 + $0x28] sm:$0xf]
  %v27 = vld [vmem:[%s0 + $0x30] sm:$0xf]
  %v28 = vld [vmem:[%s0 + $0x38] sm:$0xf]
  %v29 = vld [vmem:[%s0 + $0x40] sm:$0xf]
  %v30 = vld [vmem:[%s0 + $0x48] sm:$0xf]
  %v31 = vld [vmem:[%s0 + $0x50] sm:$0xf]
  %v32 = vld [vmem:[%s0 + $0x58] sm:$0xf]
  %v33 = vld [vmem:[%s0 + $0x60] sm:$0xf]
  %v34 = vld [vmem:[%s0 + $0x68] sm:$0xf]
  %v35 = vld [vmem:[%s0 + $0x70] sm:$0xf]
  %v36 = vld [vmem:[%s0 + $0x78] sm:$0xf]
  %s37 = scalar_lea.vmem %s0, 4
  %v38 = vld [vmem:[%s37] sm:$0xf]
  %v39 = vld [vmem:[%s37 + $0x8] sm:$0xf]
  %v40 = vld [vmem:[%s37 + $0x10] sm:$0xf]
  %v41 = vld [vmem:[%s37 + $0x18] sm:$0xf]
  %v42 = vld [vmem:[%s37 + $0x20] sm:$0xf]
  %v43 = vld [vmem:[%s37 + $0x28] sm:$0xf]
  %v44 = vld [vmem:[%s37 + $0x30] sm:$0xf]
  %v45 = vld [vmem:[%s37 + $0x38] sm:$0xf]
  %v46 = vld [vmem:[%s37 + $0x40] sm:$0xf]
  %v47 = vld [vmem:[%s37 + $0x48] sm:$0xf]
  %v48 = vld [vmem:[%s37 + $0x50] sm:$0xf]
  %v49 = vld [vmem:[%s37 + $0x58] sm:$0xf]
  %v50 = vld [vmem:[%s37 + $0x60] sm:$0xf]
  %v51 = vld [vmem:[%s37 + $0x68] sm:$0xf]
  %v52 = vld [vmem:[%s37 + $0x70] sm:$0xf]
  %v53 = vld [vmem:[%s37 + $0x78] sm:$0xf]
  %v54 = vmax.bf16 %v21, %v38
  %v55 = vmax.bf16 %v22, %v39
  %v56 = vmax.bf16 %v23, %v40
  %v57 = vmax.bf16 %v24, %v41
  %v58 = vmax.bf16 %v25, %v42
  %v59 = vmax.bf16 %v26, %v43
  %v60 = vmax.bf16 %v27, %v44
  %v61 = vmax.bf16 %v28, %v45
  %v62 = vmax.bf16 %v29, %v46
  %v63 = vmax.bf16 %v30, %v47
  %v64 = vmax.bf16 %v31, %v48
  %v65 = vmax.bf16 %v32, %v49
  %v66 = vmax.bf16 %v33, %v50
  %v67 = vmax.bf16 %v34, %v51
  %v68 = vmax.bf16 %v35, %v52
  %v69 = vmax.bf16 %v36, %v53
  %86 = vrot.lane.b32.xlu0 %v54, 120
  %v87 = vpop.permute.xlu0 %86
  %88 = vrot.lane.b32.xlu0 %v55, 120
  %v89 = vpop.permute.xlu0 %88
  %90 = vrot.lane.b32.xlu0 %v56, 120
  %v91 = vpop.permute.xlu0 %90
  %92 = vrot.lane.b32.xlu0 %v57, 120
  %v93 = vpop.permute.xlu0 %92
  %94 = vrot.lane.b32.xlu0 %v58, 120
  %v95 = vpop.permute.xlu0 %94
  %96 = vrot.lane.b32.xlu0 %v59, 120
  %v97 = vpop.permute.xlu0 %96
  %98 = vrot.lane.b32.xlu0 %v60, 120
  %v99 = vpop.permute.xlu0 %98
  %100 = vrot.lane.b32.xlu0 %v61, 120
  %v101 = vpop.permute.xlu0 %100
  %102 = vrot.lane.b32.xlu0 %v62, 120
  %v103 = vpop.permute.xlu0 %102
  %104 = vrot.lane.b32.xlu0 %v63, 120
  %v105 = vpop.permute.xlu0 %104
  %106 = vrot.lane.b32.xlu0 %v64, 120
  %v107 = vpop.permute.xlu0 %106
  %108 = vrot.lane.b32.xlu0 %v65, 120
  %v109 = vpop.permute.xlu0 %108
  %110 = vrot.lane.b32.xlu0 %v66, 120
  %v111 = vpop.permute.xlu0 %110
  %112 = vrot.lane.b32.xlu0 %v67, 120
  %v113 = vpop.permute.xlu0 %112
  %114 = vrot.lane.b32.xlu0 %v68, 120
  %v115 = vpop.permute.xlu0 %114
  %116 = vrot.lane.b32.xlu0 %v69, 120
  %v117 = vpop.permute.xlu0 %116
  %v134 = vmax.bf16 %v54, %v87
  %v135 = vmax.bf16 %v55, %v89
  %v136 = vmax.bf16 %v56, %v91
  %v137 = vmax.bf16 %v57, %v93
  %v138 = vmax.bf16 %v58, %v95
  %v139 = vmax.bf16 %v59, %v97
  %v140 = vmax.bf16 %v60, %v99
  %v141 = vmax.bf16 %v61, %v101
  %v142 = vmax.bf16 %v62, %v103
  %v143 = vmax.bf16 %v63, %v105
  %v144 = vmax.bf16 %v64, %v107
  %v145 = vmax.bf16 %v65, %v109
  %v146 = vmax.bf16 %v66, %v111
  %v147 = vmax.bf16 %v67, %v113
  %v148 = vmax.bf16 %v68, %v115
  %v149 = vmax.bf16 %v69, %v117
  %vm150 = vcmask 64512
  %151 = vst.msk [vmem:[#allocation2] sm:$0xff] %vm150, 0
  %152 = vst.msk [vmem:[#allocation2 + $0x50] sm:$0xff] %vm150, 0
  %s153 = scalar_lea.vmem [#allocation2], 72
  %154 = vst.msk [vmem:[%s153] sm:$0xff] %vm150, 0
  %155 = vst.msk [vmem:[%s153 + $0x50] sm:$0xff] %vm150, 0
  %s156 = scalar_lea.vmem [#allocation2], 8
  %vm157 = vcmask 57344
  %vm158 = vsmask.f32 256
  %vm159 = vmand %vm157, %vm158
  %v160 = vld [vmem:[%s156] sm:$0x1]
  %v161 = vsel %vm159, 0, %v160
  %162 = vst [vmem:[%s156] sm:$0x1] %v161
  %v163 = vld [vmem:[%s156 + $0x8] sm:$0x1]
  %v164 = vsel %vm159, 0, %v163
  %165 = vst [vmem:[%s156 + $0x8] sm:$0x1] %v164
  %v166 = vld [vmem:[%s156 + $0x10] sm:$0x1]
  %v167 = vsel %vm159, 0, %v166
  %168 = vst [vmem:[%s156 + $0x10] sm:$0x1] %v167
  %v169 = vld [vmem:[%s156 + $0x18] sm:$0x1]
  %v170 = vsel %vm159, 0, %v169
  %171 = vst [vmem:[%s156 + $0x18] sm:$0x1] %v170
  %v172 = vld [vmem:[%s156 + $0x20] sm:$0x1]
  %v173 = vsel %vm159, 0, %v172
  %174 = vst [vmem:[%s156 + $0x20] sm:$0x1] %v173
  %v175 = vld [vmem:[%s156 + $0x28] sm:$0x1]
  %v176 = vsel %vm159, 0, %v175
  %177 = vst [vmem:[%s156 + $0x28] sm:$0x1] %v176
  %v178 = vld [vmem:[%s156 + $0x30] sm:$0x1]
  %v179 = vsel %vm159, 0, %v178
  %180 = vst [vmem:[%s156 + $0x30] sm:$0x1] %v179
  %v181 = vld [vmem:[%s156 + $0x38] sm:$0x1]
  %v182 = vsel %vm159, 0, %v181
  %183 = vst [vmem:[%s156 + $0x38] sm:$0x1] %v182
  %v184 = vld [vmem:[%s156 + $0x50] sm:$0x1]
  %v185 = vsel %vm159, 0, %v184
  %186 = vst [vmem:[%s156 + $0x50] sm:$0x1] %v185
  %v187 = vld [vmem:[%s156 + $0x58] sm:$0x1]
  %v188 = vsel %vm159, 0, %v187
  %189 = vst [vmem:[%s156 + $0x58] sm:$0x1] %v188
  %v190 = vld [vmem:[%s156 + $0x60] sm:$0x1]
  %v191 = vsel %vm159, 0, %v190
  %192 = vst [vmem:[%s156 + $0x60] sm:$0x1] %v191
  %v193 = vld [vmem:[%s156 + $0x68] sm:$0x1]
  %v194 = vsel %vm159, 0, %v193
  %195 = vst [vmem:[%s156 + $0x68] sm:$0x1] %v194
  %v196 = vld [vmem:[%s156 + $0x70] sm:$0x1]
  %v197 = vsel %vm159, 0, %v196
  %198 = vst [vmem:[%s156 + $0x70] sm:$0x1] %v197
  %v199 = vld [vmem:[%s156 + $0x78] sm:$0x1]
  %v200 = vsel %vm159, 0, %v199
  %201 = vst [vmem:[%s156 + $0x78] sm:$0x1] %v200
  %v202 = vld [vmem:[%s156 + $0x80] sm:$0x1]
  %v203 = vsel %vm159, 0, %v202
  %204 = vst [vmem:[%s156 + $0x80] sm:$0x1] %v203
  %v205 = vld [vmem:[%s156 + $0x88] sm:$0x1]
  %v206 = vsel %vm159, 0, %v205
  %207 = vst [vmem:[%s156 + $0x88] sm:$0x1] %v206
  %vm208 = vcmask 61444
  %vm209 = vsmask.f32 7954
  %vm210 = vmand %vm208, %vm209
  %v211 = vld [vmem:[%s156] sm:$0x10]
  %v212 = vsel %vm210, 0, %v211
  %213 = vst [vmem:[%s156] sm:$0x10] %v212
  %v214 = vld [vmem:[%s156 + $0x8] sm:$0x10]
  %v215 = vsel %vm210, 0, %v214
  %216 = vst [vmem:[%s156 + $0x8] sm:$0x10] %v215
  %v217 = vld [vmem:[%s156 + $0x10] sm:$0x10]
  %v218 = vsel %vm210, 0, %v217
  %219 = vst [vmem:[%s156 + $0x10] sm:$0x10] %v218
  %v220 = vld [vmem:[%s156 + $0x18] sm:$0x10]
  %v221 = vsel %vm210, 0, %v220
  %222 = vst [vmem:[%s156 + $0x18] sm:$0x10] %v221
  %v223 = vld [vmem:[%s156 + $0x20] sm:$0x10]
  %v224 = vsel %vm210, 0, %v223
  %225 = vst [vmem:[%s156 + $0x20] sm:$0x10] %v224
  %v226 = vld [vmem:[%s156 + $0x28] sm:$0x10]
  %v227 = vsel %vm210, 0, %v226
  %228 = vst [vmem:[%s156 + $0x28] sm:$0x10] %v227
  %v229 = vld [vmem:[%s156 + $0x30] sm:$0x10]
  %v230 = vsel %vm210, 0, %v229
  %231 = vst [vmem:[%s156 + $0x30] sm:$0x10] %v230
  %v232 = vld [vmem:[%s156 + $0x38] sm:$0x10]
  %v233 = vsel %vm210, 0, %v232
  %234 = vst [vmem:[%s156 + $0x38] sm:$0x10] %v233
  %v235 = vld [vmem:[%s156 + $0x50] sm:$0x10]
  %v236 = vsel %vm210, 0, %v235
  %237 = vst [vmem:[%s156 + $0x50] sm:$0x10] %v236
  %v238 = vld [vmem:[%s156 + $0x58] sm:$0x10]
  %v239 = vsel %vm210, 0, %v238
  %240 = vst [vmem:[%s156 + $0x58] sm:$0x10] %v239
  %v241 = vld [vmem:[%s156 + $0x60] sm:$0x10]
  %v242 = vsel %vm210, 0, %v241
  %243 = vst [vmem:[%s156 + $0x60] sm:$0x10] %v242
  %v244 = vld [vmem:[%s156 + $0x68] sm:$0x10]
  %v245 = vsel %vm210, 0, %v244
  %246 = vst [vmem:[%s156 + $0x68] sm:$0x10] %v245
  %v247 = vld [vmem:[%s156 + $0x70] sm:$0x10]
  %v248 = vsel %vm210, 0, %v247
  %249 = vst [vmem:[%s156 + $0x70] sm:$0x10] %v248
  %v250 = vld [vmem:[%s156 + $0x78] sm:$0x10]
  %v251 = vsel %vm210, 0, %v250
  %252 = vst [vmem:[%s156 + $0x78] sm:$0x10] %v251
  %v253 = vld [vmem:[%s156 + $0x80] sm:$0x10]
  %v254 = vsel %vm210, 0, %v253
  %255 = vst [vmem:[%s156 + $0x80] sm:$0x10] %v254
  %v256 = vld [vmem:[%s156 + $0x88] sm:$0x10]
  %v257 = vsel %vm210, 0, %v256
  %258 = vst [vmem:[%s156 + $0x88] sm:$0x10] %v257
  %v275 = vunpack.c.l.b16 %v134
  %v276 = vunpack.c.l.b16 %v135
  %v277 = vunpack.c.l.b16 %v136
  %v278 = vunpack.c.l.b16 %v137
  %v279 = vunpack.c.l.b16 %v138
  %v280 = vunpack.c.l.b16 %v139
  %v281 = vunpack.c.l.b16 %v140
  %v282 = vunpack.c.l.b16 %v141
  %v283 = vunpack.c.l.b16 %v142
  %v284 = vunpack.c.l.b16 %v143
  %v285 = vunpack.c.l.b16 %v144
  %v286 = vunpack.c.l.b16 %v145
  %v287 = vunpack.c.l.b16 %v146
  %v288 = vunpack.c.l.b16 %v147
  %v289 = vunpack.c.l.b16 %v148
  %v290 = vunpack.c.l.b16 %v149
  %v291 = vpack.c.b16 %v275, %v275
  %v292 = vpack.c.b16 %v276, %v276
  %v293 = vpack.c.b16 %v277, %v277
  %v294 = vpack.c.b16 %v278, %v278
  %v295 = vpack.c.b16 %v279, %v279
  %v296 = vpack.c.b16 %v280, %v280
  %v297 = vpack.c.b16 %v281, %v281
  %v298 = vpack.c.b16 %v282, %v282
  %v299 = vpack.c.b16 %v283, %v283
  %v300 = vpack.c.b16 %v284, %v284
  %v301 = vpack.c.b16 %v285, %v285
  %v302 = vpack.c.b16 %v286, %v286
  %v303 = vpack.c.b16 %v287, %v287
  %v304 = vpack.c.b16 %v288, %v288
  %v305 = vpack.c.b16 %v289, %v289
  %v306 = vpack.c.b16 %v290, %v290
  %v308 = vshrl.u32 %v291, 16
  %v310 = vrot.slane %v308, 7
  %v311 = vshll.u32 %v291, 16
  %v313 = vor.u32 %v310, %v311
  %v315 = vshrl.u32 %v292, 16
  %v317 = vrot.slane %v315, 7
  %v318 = vshll.u32 %v292, 16
  %v320 = vor.u32 %v317, %v318
  %v322 = vshrl.u32 %v293, 16
  %v324 = vrot.slane %v322, 7
  %v325 = vshll.u32 %v293, 16
  %v327 = vor.u32 %v324, %v325
  %v329 = vshrl.u32 %v294, 16
  %v331 = vrot.slane %v329, 7
  %v332 = vshll.u32 %v294, 16
  %v334 = vor.u32 %v331, %v332
  %v336 = vshrl.u32 %v295, 16
  %v338 = vrot.slane %v336, 7
  %v339 = vshll.u32 %v295, 16
  %v341 = vor.u32 %v338, %v339
  %v343 = vshrl.u32 %v296, 16
  %v345 = vrot.slane %v343, 7
  %v346 = vshll.u32 %v296, 16
  %v348 = vor.u32 %v345, %v346
  %v350 = vshrl.u32 %v297, 16
  %v352 = vrot.slane %v350, 7
  %v353 = vshll.u32 %v297, 16
  %v355 = vor.u32 %v352, %v353
  %v357 = vshrl.u32 %v298, 16
  %v359 = vrot.slane %v357, 7
  %v360 = vshll.u32 %v298, 16
  %v362 = vor.u32 %v359, %v360
  %v364 = vshrl.u32 %v299, 16
  %v366 = vrot.slane %v364, 7
  %v367 = vshll.u32 %v299, 16
  %v369 = vor.u32 %v366, %v367
  %v371 = vshrl.u32 %v300, 16
  %v373 = vrot.slane %v371, 7
  %v374 = vshll.u32 %v300, 16
  %v376 = vor.u32 %v373, %v374
  %v378 = vshrl.u32 %v301, 16
  %v380 = vrot.slane %v378, 7
  %v381 = vshll.u32 %v301, 16
  %v383 = vor.u32 %v380, %v381
  %v385 = vshrl.u32 %v302, 16
  %v387 = vrot.slane %v385, 7
  %v388 = vshll.u32 %v302, 16
  %v390 = vor.u32 %v387, %v388
  %v392 = vshrl.u32 %v303, 16
  %v394 = vrot.slane %v392, 7
  %v395 = vshll.u32 %v303, 16
  %v397 = vor.u32 %v394, %v395
  %v399 = vshrl.u32 %v304, 16
  %v401 = vrot.slane %v399, 7
  %v402 = vshll.u32 %v304, 16
  %v404 = vor.u32 %v401, %v402
  %v406 = vshrl.u32 %v305, 16
  %v408 = vrot.slane %v406, 7
  %v409 = vshll.u32 %v305, 16
  %v411 = vor.u32 %v408, %v409
  %v413 = vshrl.u32 %v306, 16
  %v415 = vrot.slane %v413, 7
  %v416 = vshll.u32 %v306, 16
  %v418 = vor.u32 %v415, %v416
  %vm435 = vcmask 61440
  %vm436 = vsmask.f32 4354
  %vm437 = vmand %vm435, %vm436
  %v438 = vld [vmem:[%s156] sm:$0x1f]
  %v439 = vsel %vm437, %v313, %v438
  %440 = vst [vmem:[%s156] sm:$0x1f] %v439
  %v441 = vld [vmem:[%s156 + $0x8] sm:$0x1f]
  %v442 = vsel %vm437, %v320, %v441
  %443 = vst [vmem:[%s156 + $0x8] sm:$0x1f] %v442
  %v444 = vld [vmem:[%s156 + $0x10] sm:$0x1f]
  %v445 = vsel %vm437, %v327, %v444
  %446 = vst [vmem:[%s156 + $0x10] sm:$0x1f] %v445
  %v447 = vld [vmem:[%s156 + $0x18] sm:$0x1f]
  %v448 = vsel %vm437, %v334, %v447
  %449 = vst [vmem:[%s156 + $0x18] sm:$0x1f] %v448
  %v450 = vld [vmem:[%s156 + $0x20] sm:$0x1f]
  %v451 = vsel %vm437, %v341, %v450
  %452 = vst [vmem:[%s156 + $0x20] sm:$0x1f] %v451
  %v453 = vld [vmem:[%s156 + $0x28] sm:$0x1f]
  %v454 = vsel %vm437, %v348, %v453
  %455 = vst [vmem:[%s156 + $0x28] sm:$0x1f] %v454
  %v456 = vld [vmem:[%s156 + $0x30] sm:$0x1f]
  %v457 = vsel %vm437, %v355, %v456
  %458 = vst [vmem:[%s156 + $0x30] sm:$0x1f] %v457
  %v459 = vld [vmem:[%s156 + $0x38] sm:$0x1f]
  %v460 = vsel %vm437, %v362, %v459
  %461 = vst [vmem:[%s156 + $0x38] sm:$0x1f] %v460
  %v462 = vld [vmem:[%s156 + $0x50] sm:$0x1f]
  %v463 = vsel %vm437, %v369, %v462
  %464 = vst [vmem:[%s156 + $0x50] sm:$0x1f] %v463
  %v465 = vld [vmem:[%s156 + $0x58] sm:$0x1f]
  %v466 = vsel %vm437, %v376, %v465
  %467 = vst [vmem:[%s156 + $0x58] sm:$0x1f] %v466
  %v468 = vld [vmem:[%s156 + $0x60] sm:$0x1f]
  %v469 = vsel %vm437, %v383, %v468
  %470 = vst [vmem:[%s156 + $0x60] sm:$0x1f] %v469
  %v471 = vld [vmem:[%s156 + $0x68] sm:$0x1f]
  %v472 = vsel %vm437, %v390, %v471
  %473 = vst [vmem:[%s156 + $0x68] sm:$0x1f] %v472
  %v474 = vld [vmem:[%s156 + $0x70] sm:$0x1f]
  %v475 = vsel %vm437, %v397, %v474
  %476 = vst [vmem:[%s156 + $0x70] sm:$0x1f] %v475
  %v477 = vld [vmem:[%s156 + $0x78] sm:$0x1f]
  %v478 = vsel %vm437, %v404, %v477
  %479 = vst [vmem:[%s156 + $0x78] sm:$0x1f] %v478
  %v480 = vld [vmem:[%s156 + $0x80] sm:$0x1f]
  %v481 = vsel %vm437, %v411, %v480
  %482 = vst [vmem:[%s156 + $0x80] sm:$0x1f] %v481
  %v483 = vld [vmem:[%s156 + $0x88] sm:$0x1f]
  %v484 = vsel %vm437, %v418, %v483
  %485 = vst [vmem:[%s156 + $0x88] sm:$0x1f] %v484
  %v486 = vld [vmem:[#allocation2] sm:$0xf]
  %v487 = vld [vmem:[#allocation2 + $0x8] sm:$0xf]
  %v488 = vld [vmem:[#allocation2 + $0x10] sm:$0xf]
  %v489 = vld [vmem:[#allocation2 + $0x18] sm:$0xf]
  %v490 = vld [vmem:[#allocation2 + $0x20] sm:$0xf]
  %v491 = vld [vmem:[#allocation2 + $0x28] sm:$0xf]
  %v492 = vld [vmem:[#allocation2 + $0x30] sm:$0xf]
  %v493 = vld [vmem:[#allocation2 + $0x38] sm:$0xf]
  %v494 = vld [vmem:[#allocation2 + $0x50] sm:$0xf]
  %v495 = vld [vmem:[#allocation2 + $0x58] sm:$0xf]
  %v496 = vld [vmem:[#allocation2 + $0x60] sm:$0xf]
  %v497 = vld [vmem:[#allocation2 + $0x68] sm:$0xf]
  %v498 = vld [vmem:[#allocation2 + $0x70] sm:$0xf]
  %v499 = vld [vmem:[#allocation2 + $0x78] sm:$0xf]
  %v500 = vld [vmem:[#allocation2 + $0x80] sm:$0xf]
  %v501 = vld [vmem:[#allocation2 + $0x88] sm:$0xf]
  %v502 = vld [vmem:[#allocation2] sm:$0x1f]
  %v503 = vld [vmem:[#allocation2 + $0x8] sm:$0x1f]
  %v504 = vld [vmem:[#allocation2 + $0x10] sm:$0x1f]
  %v505 = vld [vmem:[#allocation2 + $0x18] sm:$0x1f]
  %v506 = vld [vmem:[#allocation2 + $0x20] sm:$0x1f]
  %v507 = vld [vmem:[#allocation2 + $0x28] sm:$0x1f]
  %v508 = vld [vmem:[#allocation2 + $0x30] sm:$0x1f]
  %v509 = vld [vmem:[#allocation2 + $0x38] sm:$0x1f]
  %v510 = vld [vmem:[#allocation2 + $0x50] sm:$0x1f]
  %v511 = vld [vmem:[#allocation2 + $0x58] sm:$0x1f]
  %v512 = vld [vmem:[#allocation2 + $0x60] sm:$0x1f]
  %v513 = vld [vmem:[#allocation2 + $0x68] sm:$0x1f]
  %v514 = vld [vmem:[#allocation2 + $0x70] sm:$0x1f]
  %v515 = vld [vmem:[#allocation2 + $0x78] sm:$0x1f]
  %v516 = vld [vmem:[#allocation2 + $0x80] sm:$0x1f]
  %v517 = vld [vmem:[#allocation2 + $0x88] sm:$0x1f]
  %v534 = vunpack.c.l.b16 %v502
  %v535 = vunpack.c.h.b16 %v502
  %v536 = vunpack.c.l.b16 %v503
  %v537 = vunpack.c.h.b16 %v503
  %v538 = vunpack.c.l.b16 %v504
  %v539 = vunpack.c.h.b16 %v504
  %v540 = vunpack.c.l.b16 %v505
  %v541 = vunpack.c.h.b16 %v505
  %v542 = vunpack.c.l.b16 %v506
  %v543 = vunpack.c.h.b16 %v506
  %v544 = vunpack.c.l.b16 %v507
  %v545 = vunpack.c.h.b16 %v507
  %v546 = vunpack.c.l.b16 %v508
  %v547 = vunpack.c.h.b16 %v508
  %v548 = vunpack.c.l.b16 %v509
  %v549 = vunpack.c.h.b16 %v509
  %v550 = vunpack.c.l.b16 %v510
  %v551 = vunpack.c.h.b16 %v510
  %v552 = vunpack.c.l.b16 %v511
  %v553 = vunpack.c.h.b16 %v511
  %v554 = vunpack.c.l.b16 %v512
  %v555 = vunpack.c.h.b16 %v512
  %v556 = vunpack.c.l.b16 %v513
  %v557 = vunpack.c.h.b16 %v513
  %v558 = vunpack.c.l.b16 %v514
  %v559 = vunpack.c.h.b16 %v514
  %v560 = vunpack.c.l.b16 %v515
  %v561 = vunpack.c.h.b16 %v515
  %v562 = vunpack.c.l.b16 %v516
  %v563 = vunpack.c.h.b16 %v516
  %v564 = vunpack.c.l.b16 %v517
  %v565 = vunpack.c.h.b16 %v517
  %v566 = vpack.c.b16 %v534, %v534
  %v567 = vpack.c.b16 %v535, %v535
  %v568 = vpack.c.b16 %v536, %v536
  %v569 = vpack.c.b16 %v537, %v537
  %v570 = vpack.c.b16 %v538, %v538
  %v571 = vpack.c.b16 %v539, %v539
  %v572 = vpack.c.b16 %v540, %v540
  %v573 = vpack.c.b16 %v541, %v541
  %v574 = vpack.c.b16 %v542, %v542
  %v575 = vpack.c.b16 %v543, %v543
  %v576 = vpack.c.b16 %v544, %v544
  %v577 = vpack.c.b16 %v545, %v545
  %v578 = vpack.c.b16 %v546, %v546
  %v579 = vpack.c.b16 %v547, %v547
  %v580 = vpack.c.b16 %v548, %v548
  %v581 = vpack.c.b16 %v549, %v549
  %v582 = vpack.c.b16 %v550, %v550
  %v583 = vpack.c.b16 %v551, %v551
  %v584 = vpack.c.b16 %v552, %v552
  %v585 = vpack.c.b16 %v553, %v553
  %v586 = vpack.c.b16 %v554, %v554
  %v587 = vpack.c.b16 %v555, %v555
  %v588 = vpack.c.b16 %v556, %v556
  %v589 = vpack.c.b16 %v557, %v557
  %v590 = vpack.c.b16 %v558, %v558
  %v591 = vpack.c.b16 %v559, %v559
  %v592 = vpack.c.b16 %v560, %v560
  %v593 = vpack.c.b16 %v561, %v561
  %v594 = vpack.c.b16 %v562, %v562
  %v595 = vpack.c.b16 %v563, %v563
  %v596 = vpack.c.b16 %v564, %v564
  %v597 = vpack.c.b16 %v565, %v565
  %vm598 = vsmask.f32 3328
  %vm599 = vsmask.f32 7440
  %vm600 = vmor %vm598, %vm599
  %v602 = vshrl.u32 %v566, 16
  %v604 = vrot.slane %v602, 4
  %v605 = vshll.u32 %v566, 16
  %v607 = vrot.slane %v605, 5
  %v608 = vor.u32 %v604, %v607
  %v609 = vrot.slane %v608, 4
  %v611 = vshll.u32 %v567, 16
  %v613 = vrot.slane %v611, 5
  %v614 = vsel %vm600, %v609, %v613
  %v616 = vshrl.u32 %v568, 16
  %v618 = vrot.slane %v616, 4
  %v619 = vshll.u32 %v568, 16
  %v621 = vrot.slane %v619, 5
  %v622 = vor.u32 %v618, %v621
  %v623 = vrot.slane %v622, 4
  %v625 = vshll.u32 %v569, 16
  %v627 = vrot.slane %v625, 5
  %v628 = vsel %vm600, %v623, %v627
  %v630 = vshrl.u32 %v570, 16
  %v632 = vrot.slane %v630, 4
  %v633 = vshll.u32 %v570, 16
  %v635 = vrot.slane %v633, 5
  %v636 = vor.u32 %v632, %v635
  %v637 = vrot.slane %v636, 4
  %v639 = vshll.u32 %v571, 16
  %v641 = vrot.slane %v639, 5
  %v642 = vsel %vm600, %v637, %v641
  %v644 = vshrl.u32 %v572, 16
  %v646 = vrot.slane %v644, 4
  %v647 = vshll.u32 %v572, 16
  %v649 = vrot.slane %v647, 5
  %v650 = vor.u32 %v646, %v649
  %v651 = vrot.slane %v650, 4
  %v653 = vshll.u32 %v573, 16
  %v655 = vrot.slane %v653, 5
  %v656 = vsel %vm600, %v651, %v655
  %v658 = vshrl.u32 %v574, 16
  %v660 = vrot.slane %v658, 4
  %v661 = vshll.u32 %v574, 16
  %v663 = vrot.slane %v661, 5
  %v664 = vor.u32 %v660, %v663
  %v665 = vrot.slane %v664, 4
  %v667 = vshll.u32 %v575, 16
  %v669 = vrot.slane %v667, 5
  %v670 = vsel %vm600, %v665, %v669
  %v672 = vshrl.u32 %v576, 16
  %v674 = vrot.slane %v672, 4
  %v675 = vshll.u32 %v576, 16
  %v677 = vrot.slane %v675, 5
  %v678 = vor.u32 %v674, %v677
  %v679 = vrot.slane %v678, 4
  %v681 = vshll.u32 %v577, 16
  %v683 = vrot.slane %v681, 5
  %v684 = vsel %vm600, %v679, %v683
  %v686 = vshrl.u32 %v578, 16
  %v688 = vrot.slane %v686, 4
  %v689 = vshll.u32 %v578, 16
  %v691 = vrot.slane %v689, 5
  %v692 = vor.u32 %v688, %v691
  %v693 = vrot.slane %v692, 4
  %v695 = vshll.u32 %v579, 16
  %v697 = vrot.slane %v695, 5
  %v698 = vsel %vm600, %v693, %v697
  %v700 = vshrl.u32 %v580, 16
  %v702 = vrot.slane %v700, 4
  %v703 = vshll.u32 %v580, 16
  %v705 = vrot.slane %v703, 5
  %v706 = vor.u32 %v702, %v705
  %v707 = vrot.slane %v706, 4
  %v709 = vshll.u32 %v581, 16
  %v711 = vrot.slane %v709, 5
  %v712 = vsel %vm600, %v707, %v711
  %v714 = vshrl.u32 %v582, 16
  %v716 = vrot.slane %v714, 4
  %v717 = vshll.u32 %v582, 16
  %v719 = vrot.slane %v717, 5
  %v720 = vor.u32 %v716, %v719
  %v721 = vrot.slane %v720, 4
  %v723 = vshll.u32 %v583, 16
  %v725 = vrot.slane %v723, 5
  %v726 = vsel %vm600, %v721, %v725
  %v728 = vshrl.u32 %v584, 16
  %v730 = vrot.slane %v728, 4
  %v731 = vshll.u32 %v584, 16
  %v733 = vrot.slane %v731, 5
  %v734 = vor.u32 %v730, %v733
  %v735 = vrot.slane %v734, 4
  %v737 = vshll.u32 %v585, 16
  %v739 = vrot.slane %v737, 5
  %v740 = vsel %vm600, %v735, %v739
  %v742 = vshrl.u32 %v586, 16
  %v744 = vrot.slane %v742, 4
  %v745 = vshll.u32 %v586, 16
  %v747 = vrot.slane %v745, 5
  %v748 = vor.u32 %v744, %v747
  %v749 = vrot.slane %v748, 4
  %v751 = vshll.u32 %v587, 16
  %v753 = vrot.slane %v751, 5
  %v754 = vsel %vm600, %v749, %v753
  %v756 = vshrl.u32 %v588, 16
  %v758 = vrot.slane %v756, 4
  %v759 = vshll.u32 %v588, 16
  %v761 = vrot.slane %v759, 5
  %v762 = vor.u32 %v758, %v761
  %v763 = vrot.slane %v762, 4
  %v765 = vshll.u32 %v589, 16
  %v767 = vrot.slane %v765, 5
  %v768 = vsel %vm600, %v763, %v767
  %v770 = vshrl.u32 %v590, 16
  %v772 = vrot.slane %v770, 4
  %v773 = vshll.u32 %v590, 16
  %v775 = vrot.slane %v773, 5
  %v776 = vor.u32 %v772, %v775
  %v777 = vrot.slane %v776, 4
  %v779 = vshll.u32 %v591, 16
  %v781 = vrot.slane %v779, 5
  %v782 = vsel %vm600, %v777, %v781
  %v784 = vshrl.u32 %v592, 16
  %v786 = vrot.slane %v784, 4
  %v787 = vshll.u32 %v592, 16
  %v789 = vrot.slane %v787, 5
  %v790 = vor.u32 %v786, %v789
  %v791 = vrot.slane %v790, 4
  %v793 = vshll.u32 %v593, 16
  %v795 = vrot.slane %v793, 5
  %v796 = vsel %vm600, %v791, %v795
  %v798 = vshrl.u32 %v594, 16
  %v800 = vrot.slane %v798, 4
  %v801 = vshll.u32 %v594, 16
  %v803 = vrot.slane %v801, 5
  %v804 = vor.u32 %v800, %v803
  %v805 = vrot.slane %v804, 4
  %v807 = vshll.u32 %v595, 16
  %v809 = vrot.slane %v807, 5
  %v810 = vsel %vm600, %v805, %v809
  %v812 = vshrl.u32 %v596, 16
  %v814 = vrot.slane %v812, 4
  %v815 = vshll.u32 %v596, 16
  %v817 = vrot.slane %v815, 5
  %v818 = vor.u32 %v814, %v817
  %v819 = vrot.slane %v818, 4
  %v821 = vshll.u32 %v597, 16
  %v823 = vrot.slane %v821, 5
  %v824 = vsel %vm600, %v819, %v823
  %v825 = vld [vmem:[#allocation2] sm:$0x1e]
  %v826 = vld [vmem:[#allocation2 + $0x8] sm:$0x1e]
  %v827 = vld [vmem:[#allocation2 + $0x10] sm:$0x1e]
  %v828 = vld [vmem:[#allocation2 + $0x18] sm:$0x1e]
  %v829 = vld [vmem:[#allocation2 + $0x20] sm:$0x1e]
  %v830 = vld [vmem:[#allocation2 + $0x28] sm:$0x1e]
  %v831 = vld [vmem:[#allocation2 + $0x30] sm:$0x1e]
  %v832 = vld [vmem:[#allocation2 + $0x38] sm:$0x1e]
  %v833 = vld [vmem:[#allocation2 + $0x50] sm:$0x1e]
  %v834 = vld [vmem:[#allocation2 + $0x58] sm:$0x1e]
  %v835 = vld [vmem:[#allocation2 + $0x60] sm:$0x1e]
  %v836 = vld [vmem:[#allocation2 + $0x68] sm:$0x1e]
  %v837 = vld [vmem:[#allocation2 + $0x70] sm:$0x1e]
  %v838 = vld [vmem:[#allocation2 + $0x78] sm:$0x1e]
  %v839 = vld [vmem:[#allocation2 + $0x80] sm:$0x1e]
  %v840 = vld [vmem:[#allocation2 + $0x88] sm:$0x1e]
  %v857 = vunpack.c.l.b16 %v825
  %v858 = vunpack.c.h.b16 %v825
  %v859 = vunpack.c.l.b16 %v826
  %v860 = vunpack.c.h.b16 %v826
  %v861 = vunpack.c.l.b16 %v827
  %v862 = vunpack.c.h.b16 %v827
  %v863 = vunpack.c.l.b16 %v828
  %v864 = vunpack.c.h.b16 %v828
  %v865 = vunpack.c.l.b16 %v829
  %v866 = vunpack.c.h.b16 %v829
  %v867 = vunpack.c.l.b16 %v830
  %v868 = vunpack.c.h.b16 %v830
  %v869 = vunpack.c.l.b16 %v831
  %v870 = vunpack.c.h.b16 %v831
  %v871 = vunpack.c.l.b16 %v832
  %v872 = vunpack.c.h.b16 %v832
  %v873 = vunpack.c.l.b16 %v833
  %v874 = vunpack.c.h.b16 %v833
  %v875 = vunpack.c.l.b16 %v834
  %v876 = vunpack.c.h.b16 %v834
  %v877 = vunpack.c.l.b16 %v835
  %v878 = vunpack.c.h.b16 %v835
  %v879 = vunpack.c.l.b16 %v836
  %v880 = vunpack.c.h.b16 %v836
  %v881 = vunpack.c.l.b16 %v837
  %v882 = vunpack.c.h.b16 %v837
  %v883 = vunpack.c.l.b16 %v838
  %v884 = vunpack.c.h.b16 %v838
  %v885 = vunpack.c.l.b16 %v839
  %v886 = vunpack.c.h.b16 %v839
  %v887 = vunpack.c.l.b16 %v840
  %v888 = vunpack.c.h.b16 %v840
  %v889 = vpack.c.b16 %v857, %v857
  %v890 = vpack.c.b16 %v858, %v858
  %v891 = vpack.c.b16 %v859, %v859
  %v892 = vpack.c.b16 %v860, %v860
  %v893 = vpack.c.b16 %v861, %v861
  %v894 = vpack.c.b16 %v862, %v862
  %v895 = vpack.c.b16 %v863, %v863
  %v896 = vpack.c.b16 %v864, %v864
  %v897 = vpack.c.b16 %v865, %v865
  %v898 = vpack.c.b16 %v866, %v866
  %v899 = vpack.c.b16 %v867, %v867
  %v900 = vpack.c.b16 %v868, %v868
  %v901 = vpack.c.b16 %v869, %v869
  %v902 = vpack.c.b16 %v870, %v870
  %v903 = vpack.c.b16 %v871, %v871
  %v904 = vpack.c.b16 %v872, %v872
  %v905 = vpack.c.b16 %v873, %v873
  %v906 = vpack.c.b16 %v874, %v874
  %v907 = vpack.c.b16 %v875, %v875
  %v908 = vpack.c.b16 %v876, %v876
  %v909 = vpack.c.b16 %v877, %v877
  %v910 = vpack.c.b16 %v878, %v878
  %v911 = vpack.c.b16 %v879, %v879
  %v912 = vpack.c.b16 %v880, %v880
  %v913 = vpack.c.b16 %v881, %v881
  %v914 = vpack.c.b16 %v882, %v882
  %v915 = vpack.c.b16 %v883, %v883
  %v916 = vpack.c.b16 %v884, %v884
  %v917 = vpack.c.b16 %v885, %v885
  %v918 = vpack.c.b16 %v886, %v886
  %v919 = vpack.c.b16 %v887, %v887
  %v920 = vpack.c.b16 %v888, %v888
  %vm921 = vcmask 1042432
  %vm922 = vcmask 1046532
  %vm923 = vmor %vm921, %vm922
  %v924 = vrot.slane %v889, 5
  %v925 = vrot.slane %v924, 4
  %v926 = vrot.slane %v890, 5
  %v927 = vsel %vm923, %v925, %v926
  %v928 = vrot.slane %v891, 5
  %v929 = vrot.slane %v928, 4
  %v930 = vrot.slane %v892, 5
  %v931 = vsel %vm923, %v929, %v930
  %v932 = vrot.slane %v893, 5
  %v933 = vrot.slane %v932, 4
  %v934 = vrot.slane %v894, 5
  %v935 = vsel %vm923, %v933, %v934
  %v936 = vrot.slane %v895, 5
  %v937 = vrot.slane %v936, 4
  %v938 = vrot.slane %v896, 5
  %v939 = vsel %vm923, %v937, %v938
  %v940 = vrot.slane %v897, 5
  %v941 = vrot.slane %v940, 4
  %v942 = vrot.slane %v898, 5
  %v943 = vsel %vm923, %v941, %v942
  %v944 = vrot.slane %v899, 5
  %v945 = vrot.slane %v944, 4
  %v946 = vrot.slane %v900, 5
  %v947 = vsel %vm923, %v945, %v946
  %v948 = vrot.slane %v901, 5
  %v949 = vrot.slane %v948, 4
  %v950 = vrot.slane %v902, 5
  %v951 = vsel %vm923, %v949, %v950
  %v952 = vrot.slane %v903, 5
  %v953 = vrot.slane %v952, 4
  %v954 = vrot.slane %v904, 5
  %v955 = vsel %vm923, %v953, %v954
  %v956 = vrot.slane %v905, 5
  %v957 = vrot.slane %v956, 4
  %v958 = vrot.slane %v906, 5
  %v959 = vsel %vm923, %v957, %v958
  %v960 = vrot.slane %v907, 5
  %v961 = vrot.slane %v960, 4
  %v962 = vrot.slane %v908, 5
  %v963 = vsel %vm923, %v961, %v962
  %v964 = vrot.slane %v909, 5
  %v965 = vrot.slane %v964, 4
  %v966 = vrot.slane %v910, 5
  %v967 = vsel %vm923, %v965, %v966
  %v968 = vrot.slane %v911, 5
  %v969 = vrot.slane %v968, 4
  %v970 = vrot.slane %v912, 5
  %v971 = vsel %vm923, %v969, %v970
  %v972 = vrot.slane %v913, 5
  %v973 = vrot.slane %v972, 4
  %v974 = vrot.slane %v914, 5
  %v975 = vsel %vm923, %v973, %v974
  %v976 = vrot.slane %v915, 5
  %v977 = vrot.slane %v976, 4
  %v978 = vrot.slane %v916, 5
  %v979 = vsel %vm923, %v977, %v978
  %v980 = vrot.slane %v917, 5
  %v981 = vrot.slane %v980, 4
  %v982 = vrot.slane %v918, 5
  %v983 = vsel %vm923, %v981, %v982
  %v984 = vrot.slane %v919, 5
  %v985 = vrot.slane %v984, 4
  %v986 = vrot.slane %v920, 5
  %v987 = vsel %vm923, %v985, %v986
  %v988 = vld [vmem:[%s156] sm:$0xf]
  %v989 = vld [vmem:[%s156 + $0x8] sm:$0xf]
  %v990 = vld [vmem:[%s156 + $0x10] sm:$0xf]
  %v991 = vld [vmem:[%s156 + $0x18] sm:$0xf]
  %v992 = vld [vmem:[%s156 + $0x20] sm:$0xf]
  %v993 = vld [vmem:[%s156 + $0x28] sm:$0xf]
  %v994 = vld [vmem:[%s156 + $0x30] sm:$0xf]
  %v995 = vld [vmem:[%s156 + $0x38] sm:$0xf]
  %v996 = vld [vmem:[%s156 + $0x50] sm:$0xf]
  %v997 = vld [vmem:[%s156 + $0x58] sm:$0xf]
  %v998 = vld [vmem:[%s156 + $0x60] sm:$0xf]
  %v999 = vld [vmem:[%s156 + $0x68] sm:$0xf]
  %v1000 = vld [vmem:[%s156 + $0x70] sm:$0xf]
  %v1001 = vld [vmem:[%s156 + $0x78] sm:$0xf]
  %v1002 = vld [vmem:[%s156 + $0x80] sm:$0xf]
  %v1003 = vld [vmem:[%s156 + $0x88] sm:$0xf]
  %v1004 = vld [vmem:[%s156] sm:$0x1f]
  %v1005 = vld [vmem:[%s156 + $0x8] sm:$0x1f]
  %v1006 = vld [vmem:[%s156 + $0x10] sm:$0x1f]
  %v1007 = vld [vmem:[%s156 + $0x18] sm:$0x1f]
  %v1008 = vld [vmem:[%s156 + $0x20] sm:$0x1f]
  %v1009 = vld [vmem:[%s156 + $0x28] sm:$0x1f]
  %v1010 = vld [vmem:[%s156 + $0x30] sm:$0x1f]
  %v1011 = vld [vmem:[%s156 + $0x38] sm:$0x1f]
  %v1012 = vld [vmem:[%s156 + $0x50] sm:$0x1f]
  %v1013 = vld [vmem:[%s156 + $0x58] sm:$0x1f]
  %v1014 = vld [vmem:[%s156 + $0x60] sm:$0x1f]
  %v1015 = vld [vmem:[%s156 + $0x68] sm:$0x1f]
  %v1016 = vld [vmem:[%s156 + $0x70] sm:$0x1f]
  %v1017 = vld [vmem:[%s156 + $0x78] sm:$0x1f]
  %v1018 = vld [vmem:[%s156 + $0x80] sm:$0x1f]
  %v1019 = vld [vmem:[%s156 + $0x88] sm:$0x1f]
  %v1036 = vunpack.c.l.b16 %v1004
  %v1037 = vunpack.c.h.b16 %v1004
  %v1038 = vunpack.c.l.b16 %v1005
  %v1039 = vunpack.c.h.b16 %v1005
  %v1040 = vunpack.c.l.b16 %v1006
  %v1041 = vunpack.c.h.b16 %v1006
  %v1042 = vunpack.c.l.b16 %v1007
  %v1043 = vunpack.c.h.b16 %v1007
  %v1044 = vunpack.c.l.b16 %v1008
  %v1045 = vunpack.c.h.b16 %v1008
  %v1046 = vunpack.c.l.b16 %v1009
  %v1047 = vunpack.c.h.b16 %v1009
  %v1048 = vunpack.c.l.b16 %v1010
  %v1049 = vunpack.c.h.b16 %v1010
  %v1050 = vunpack.c.l.b16 %v1011
  %v1051 = vunpack.c.h.b16 %v1011
  %v1052 = vunpack.c.l.b16 %v1012
  %v1053 = vunpack.c.h.b16 %v1012
  %v1054 = vunpack.c.l.b16 %v1013
  %v1055 = vunpack.c.h.b16 %v1013
  %v1056 = vunpack.c.l.b16 %v1014
  %v1057 = vunpack.c.h.b16 %v1014
  %v1058 = vunpack.c.l.b16 %v1015
  %v1059 = vunpack.c.h.b16 %v1015
  %v1060 = vunpack.c.l.b16 %v1016
  %v1061 = vunpack.c.h.b16 %v1016
  %v1062 = vunpack.c.l.b16 %v1017
  %v1063 = vunpack.c.h.b16 %v1017
  %v1064 = vunpack.c.l.b16 %v1018
  %v1065 = vunpack.c.h.b16 %v1018
  %v1066 = vunpack.c.l.b16 %v1019
  %v1067 = vunpack.c.h.b16 %v1019
  %v1068 = vpack.c.b16 %v1036, %v1036
  %v1069 = vpack.c.b16 %v1037, %v1037
  %v1070 = vpack.c.b16 %v1038, %v1038
  %v1071 = vpack.c.b16 %v1039, %v1039
  %v1072 = vpack.c.b16 %v1040, %v1040
  %v1073 = vpack.c.b16 %v1041, %v1041
  %v1074 = vpack.c.b16 %v1042, %v1042
  %v1075 = vpack.c.b16 %v1043, %v1043
  %v1076 = vpack.c.b16 %v1044, %v1044
  %v1077 = vpack.c.b16 %v1045, %v1045
  %v1078 = vpack.c.b16 %v1046, %v1046
  %v1079 = vpack.c.b16 %v1047, %v1047
  %v1080 = vpack.c.b16 %v1048, %v1048
  %v1081 = vpack.c.b16 %v1049, %v1049
  %v1082 = vpack.c.b16 %v1050, %v1050
  %v1083 = vpack.c.b16 %v1051, %v1051
  %v1084 = vpack.c.b16 %v1052, %v1052
  %v1085 = vpack.c.b16 %v1053, %v1053
  %v1086 = vpack.c.b16 %v1054, %v1054
  %v1087 = vpack.c.b16 %v1055, %v1055
  %v1088 = vpack.c.b16 %v1056, %v1056
  %v1089 = vpack.c.b16 %v1057, %v1057
  %v1090 = vpack.c.b16 %v1058, %v1058
  %v1091 = vpack.c.b16 %v1059, %v1059
  %v1092 = vpack.c.b16 %v1060, %v1060
  %v1093 = vpack.c.b16 %v1061, %v1061
  %v1094 = vpack.c.b16 %v1062, %v1062
  %v1095 = vpack.c.b16 %v1063, %v1063
  %v1096 = vpack.c.b16 %v1064, %v1064
  %v1097 = vpack.c.b16 %v1065, %v1065
  %v1098 = vpack.c.b16 %v1066, %v1066
  %v1099 = vpack.c.b16 %v1067, %v1067
  %v1101 = vshrl.u32 %v1068, 16
  %v1103 = vrot.slane %v1101, 4
  %v1104 = vshll.u32 %v1068, 16
  %v1106 = vrot.slane %v1104, 5
  %v1107 = vor.u32 %v1103, %v1106
  %v1108 = vrot.slane %v1107, 4
  %v1110 = vshll.u32 %v1069, 16
  %v1112 = vrot.slane %v1110, 5
  %v1113 = vsel %vm600, %v1108, %v1112
  %v1115 = vshrl.u32 %v1070, 16
  %v1117 = vrot.slane %v1115, 4
  %v1118 = vshll.u32 %v1070, 16
  %v1120 = vrot.slane %v1118, 5
  %v1121 = vor.u32 %v1117, %v1120
  %v1122 = vrot.slane %v1121, 4
  %v1124 = vshll.u32 %v1071, 16
  %v1126 = vrot.slane %v1124, 5
  %v1127 = vsel %vm600, %v1122, %v1126
  %v1129 = vshrl.u32 %v1072, 16
  %v1131 = vrot.slane %v1129, 4
  %v1132 = vshll.u32 %v1072, 16
  %v1134 = vrot.slane %v1132, 5
  %v1135 = vor.u32 %v1131, %v1134
  %v1136 = vrot.slane %v1135, 4
  %v1138 = vshll.u32 %v1073, 16
  %v1140 = vrot.slane %v1138, 5
  %v1141 = vsel %vm600, %v1136, %v1140
  %v1143 = vshrl.u32 %v1074, 16
  %v1145 = vrot.slane %v1143, 4
  %v1146 = vshll.u32 %v1074, 16
  %v1148 = vrot.slane %v1146, 5
  %v1149 = vor.u32 %v1145, %v1148
  %v1150 = vrot.slane %v1149, 4
  %v1152 = vshll.u32 %v1075, 16
  %v1154 = vrot.slane %v1152, 5
  %v1155 = vsel %vm600, %v1150, %v1154
  %v1157 = vshrl.u32 %v1076, 16
  %v1159 = vrot.slane %v1157, 4
  %v1160 = vshll.u32 %v1076, 16
  %v1162 = vrot.slane %v1160, 5
  %v1163 = vor.u32 %v1159, %v1162
  %v1164 = vrot.slane %v1163, 4
  %v1166 = vshll.u32 %v1077, 16
  %v1168 = vrot.slane %v1166, 5
  %v1169 = vsel %vm600, %v1164, %v1168
  %v1171 = vshrl.u32 %v1078, 16
  %v1173 = vrot.slane %v1171, 4
  %v1174 = vshll.u32 %v1078, 16
  %v1176 = vrot.slane %v1174, 5
  %v1177 = vor.u32 %v1173, %v1176
  %v1178 = vrot.slane %v1177, 4
  %v1180 = vshll.u32 %v1079, 16
  %v1182 = vrot.slane %v1180, 5
  %v1183 = vsel %vm600, %v1178, %v1182
  %v1185 = vshrl.u32 %v1080, 16
  %v1187 = vrot.slane %v1185, 4
  %v1188 = vshll.u32 %v1080, 16
  %v1190 = vrot.slane %v1188, 5
  %v1191 = vor.u32 %v1187, %v1190
  %v1192 = vrot.slane %v1191, 4
  %v1194 = vshll.u32 %v1081, 16
  %v1196 = vrot.slane %v1194, 5
  %v1197 = vsel %vm600, %v1192, %v1196
  %v1199 = vshrl.u32 %v1082, 16
  %v1201 = vrot.slane %v1199, 4
  %v1202 = vshll.u32 %v1082, 16
  %v1204 = vrot.slane %v1202, 5
  %v1205 = vor.u32 %v1201, %v1204
  %v1206 = vrot.slane %v1205, 4
  %v1208 = vshll.u32 %v1083, 16
  %v1210 = vrot.slane %v1208, 5
  %v1211 = vsel %vm600, %v1206, %v1210
  %v1213 = vshrl.u32 %v1084, 16
  %v1215 = vrot.slane %v1213, 4
  %v1216 = vshll.u32 %v1084, 16
  %v1218 = vrot.slane %v1216, 5
  %v1219 = vor.u32 %v1215, %v1218
  %v1220 = vrot.slane %v1219, 4
  %v1222 = vshll.u32 %v1085, 16
  %v1224 = vrot.slane %v1222, 5
  %v1225 = vsel %vm600, %v1220, %v1224
  %v1227 = vshrl.u32 %v1086, 16
  %v1229 = vrot.slane %v1227, 4
  %v1230 = vshll.u32 %v1086, 16
  %v1232 = vrot.slane %v1230, 5
  %v1233 = vor.u32 %v1229, %v1232
  %v1234 = vrot.slane %v1233, 4
  %v1236 = vshll.u32 %v1087, 16
  %v1238 = vrot.slane %v1236, 5
  %v1239 = vsel %vm600, %v1234, %v1238
  %v1241 = vshrl.u32 %v1088, 16
  %v1243 = vrot.slane %v1241, 4
  %v1244 = vshll.u32 %v1088, 16
  %v1246 = vrot.slane %v1244, 5
  %v1247 = vor.u32 %v1243, %v1246
  %v1248 = vrot.slane %v1247, 4
  %v1250 = vshll.u32 %v1089, 16
  %v1252 = vrot.slane %v1250, 5
  %v1253 = vsel %vm600, %v1248, %v1252
  %v1255 = vshrl.u32 %v1090, 16
  %v1257 = vrot.slane %v1255, 4
  %v1258 = vshll.u32 %v1090, 16
  %v1260 = vrot.slane %v1258, 5
  %v1261 = vor.u32 %v1257, %v1260
  %v1262 = vrot.slane %v1261, 4
  %v1264 = vshll.u32 %v1091, 16
  %v1266 = vrot.slane %v1264, 5
  %v1267 = vsel %vm600, %v1262, %v1266
  %v1269 = vshrl.u32 %v1092, 16
  %v1271 = vrot.slane %v1269, 4
  %v1272 = vshll.u32 %v1092, 16
  %v1274 = vrot.slane %v1272, 5
  %v1275 = vor.u32 %v1271, %v1274
  %v1276 = vrot.slane %v1275, 4
  %v1278 = vshll.u32 %v1093, 16
  %v1280 = vrot.slane %v1278, 5
  %v1281 = vsel %vm600, %v1276, %v1280
  %v1283 = vshrl.u32 %v1094, 16
  %v1285 = vrot.slane %v1283, 4
  %v1286 = vshll.u32 %v1094, 16
  %v1288 = vrot.slane %v1286, 5
  %v1289 = vor.u32 %v1285, %v1288
  %v1290 = vrot.slane %v1289, 4
  %v1292 = vshll.u32 %v1095, 16
  %v1294 = vrot.slane %v1292, 5
  %v1295 = vsel %vm600, %v1290, %v1294
  %v1297 = vshrl.u32 %v1096, 16
  %v1299 = vrot.slane %v1297, 4
  %v1300 = vshll.u32 %v1096, 16
  %v1302 = vrot.slane %v1300, 5
  %v1303 = vor.u32 %v1299, %v1302
  %v1304 = vrot.slane %v1303, 4
  %v1306 = vshll.u32 %v1097, 16
  %v1308 = vrot.slane %v1306, 5
  %v1309 = vsel %vm600, %v1304, %v1308
  %v1311 = vshrl.u32 %v1098, 16
  %v1313 = vrot.slane %v1311, 4
  %v1314 = vshll.u32 %v1098, 16
  %v1316 = vrot.slane %v1314, 5
  %v1317 = vor.u32 %v1313, %v1316
  %v1318 = vrot.slane %v1317, 4
  %v1320 = vshll.u32 %v1099, 16
  %v1322 = vrot.slane %v1320, 5
  %v1323 = vsel %vm600, %v1318, %v1322
  %v1324 = vld [vmem:[%s156] sm:$0x1e]
  %v1325 = vld [vmem:[%s156 + $0x8] sm:$0x1e]
  %v1326 = vld [vmem:[%s156 + $0x10] sm:$0x1e]
  %v1327 = vld [vmem:[%s156 + $0x18] sm:$0x1e]
  %v1328 = vld [vmem:[%s156 + $0x20] sm:$0x1e]
  %v1329 = vld [vmem:[%s156 + $0x28] sm:$0x1e]
  %v1330 = vld [vmem:[%s156 + $0x30] sm:$0x1e]
  %v1331 = vld [vmem:[%s156 + $0x38] sm:$0x1e]
  %v1332 = vld [vmem:[%s156 + $0x50] sm:$0x1e]
  %v1333 = vld [vmem:[%s156 + $0x58] sm:$0x1e]
  %v1334 = vld [vmem:[%s156 + $0x60] sm:$0x1e]
  %v1335 = vld [vmem:[%s156 + $0x68] sm:$0x1e]
  %v1336 = vld [vmem:[%s156 + $0x70] sm:$0x1e]
  %v1337 = vld [vmem:[%s156 + $0x78] sm:$0x1e]
  %v1338 = vld [vmem:[%s156 + $0x80] sm:$0x1e]
  %v1339 = vld [vmem:[%s156 + $0x88] sm:$0x1e]
  %v1356 = vunpack.c.l.b16 %v1324
  %v1357 = vunpack.c.h.b16 %v1324
  %v1358 = vunpack.c.l.b16 %v1325
  %v1359 = vunpack.c.h.b16 %v1325
  %v1360 = vunpack.c.l.b16 %v1326
  %v1361 = vunpack.c.h.b16 %v1326
  %v1362 = vunpack.c.l.b16 %v1327
  %v1363 = vunpack.c.h.b16 %v1327
  %v1364 = vunpack.c.l.b16 %v1328
  %v1365 = vunpack.c.h.b16 %v1328
  %v1366 = vunpack.c.l.b16 %v1329
  %v1367 = vunpack.c.h.b16 %v1329
  %v1368 = vunpack.c.l.b16 %v1330
  %v1369 = vunpack.c.h.b16 %v1330
  %v1370 = vunpack.c.l.b16 %v1331
  %v1371 = vunpack.c.h.b16 %v1331
  %v1372 = vunpack.c.l.b16 %v1332
  %v1373 = vunpack.c.h.b16 %v1332
  %v1374 = vunpack.c.l.b16 %v1333
  %v1375 = vunpack.c.h.b16 %v1333
  %v1376 = vunpack.c.l.b16 %v1334
  %v1377 = vunpack.c.h.b16 %v1334
  %v1378 = vunpack.c.l.b16 %v1335
  %v1379 = vunpack.c.h.b16 %v1335
  %v1380 = vunpack.c.l.b16 %v1336
  %v1381 = vunpack.c.h.b16 %v1336
  %v1382 = vunpack.c.l.b16 %v1337
  %v1383 = vunpack.c.h.b16 %v1337
  %v1384 = vunpack.c.l.b16 %v1338
  %v1385 = vunpack.c.h.b16 %v1338
  %v1386 = vunpack.c.l.b16 %v1339
  %v1387 = vunpack.c.h.b16 %v1339
  %v1388 = vpack.c.b16 %v1356, %v1356
  %v1389 = vpack.c.b16 %v1357, %v1357
  %v1390 = vpack.c.b16 %v1358, %v1358
  %v1391 = vpack.c.b16 %v1359, %v1359
  %v1392 = vpack.c.b16 %v1360, %v1360
  %v1393 = vpack.c.b16 %v1361, %v1361
  %v1394 = vpack.c.b16 %v1362, %v1362
  %v1395 = vpack.c.b16 %v1363, %v1363
  %v1396 = vpack.c.b16 %v1364, %v1364
  %v1397 = vpack.c.b16 %v1365, %v1365
  %v1398 = vpack.c.b16 %v1366, %v1366
  %v1399 = vpack.c.b16 %v1367, %v1367
  %v1400 = vpack.c.b16 %v1368, %v1368
  %v1401 = vpack.c.b16 %v1369, %v1369
  %v1402 = vpack.c.b16 %v1370, %v1370
  %v1403 = vpack.c.b16 %v1371, %v1371
  %v1404 = vpack.c.b16 %v1372, %v1372
  %v1405 = vpack.c.b16 %v1373, %v1373
  %v1406 = vpack.c.b16 %v1374, %v1374
  %v1407 = vpack.c.b16 %v1375, %v1375
  %v1408 = vpack.c.b16 %v1376, %v1376
  %v1409 = vpack.c.b16 %v1377, %v1377
  %v1410 = vpack.c.b16 %v1378, %v1378
  %v1411 = vpack.c.b16 %v1379, %v1379
  %v1412 = vpack.c.b16 %v1380, %v1380
  %v1413 = vpack.c.b16 %v1381, %v1381
  %v1414 = vpack.c.b16 %v1382, %v1382
  %v1415 = vpack.c.b16 %v1383, %v1383
  %v1416 = vpack.c.b16 %v1384, %v1384
  %v1417 = vpack.c.b16 %v1385, %v1385
  %v1418 = vpack.c.b16 %v1386, %v1386
  %v1419 = vpack.c.b16 %v1387, %v1387
  %v1420 = vrot.slane %v1388, 5
  %v1421 = vrot.slane %v1420, 4
  %v1422 = vrot.slane %v1389, 5
  %v1423 = vsel %vm923, %v1421, %v1422
  %v1424 = vrot.slane %v1390, 5
  %v1425 = vrot.slane %v1424, 4
  %v1426 = vrot.slane %v1391, 5
  %v1427 = vsel %vm923, %v1425, %v1426
  %v1428 = vrot.slane %v1392, 5
  %v1429 = vrot.slane %v1428, 4
  %v1430 = vrot.slane %v1393, 5
  %v1431 = vsel %vm923, %v1429, %v1430
  %v1432 = vrot.slane %v1394, 5
  %v1433 = vrot.slane %v1432, 4
  %v1434 = vrot.slane %v1395, 5
  %v1435 = vsel %vm923, %v1433, %v1434
  %v1436 = vrot.slane %v1396, 5
  %v1437 = vrot.slane %v1436, 4
  %v1438 = vrot.slane %v1397, 5
  %v1439 = vsel %vm923, %v1437, %v1438
  %v1440 = vrot.slane %v1398, 5
  %v1441 = vrot.slane %v1440, 4
  %v1442 = vrot.slane %v1399, 5
  %v1443 = vsel %vm923, %v1441, %v1442
  %v1444 = vrot.slane %v1400, 5
  %v1445 = vrot.slane %v1444, 4
  %v1446 = vrot.slane %v1401, 5
  %v1447 = vsel %vm923, %v1445, %v1446
  %v1448 = vrot.slane %v1402, 5
  %v1449 = vrot.slane %v1448, 4
  %v1450 = vrot.slane %v1403, 5
  %v1451 = vsel %vm923, %v1449, %v1450
  %v1452 = vrot.slane %v1404, 5
  %v1453 = vrot.slane %v1452, 4
  %v1454 = vrot.slane %v1405, 5
  %v1455 = vsel %vm923, %v1453, %v1454
  %v1456 = vrot.slane %v1406, 5
  %v1457 = vrot.slane %v1456, 4
  %v1458 = vrot.slane %v1407, 5
  %v1459 = vsel %vm923, %v1457, %v1458
  %v1460 = vrot.slane %v1408, 5
  %v1461 = vrot.slane %v1460, 4
  %v1462 = vrot.slane %v1409, 5
  %v1463 = vsel %vm923, %v1461, %v1462
  %v1464 = vrot.slane %v1410, 5
  %v1465 = vrot.slane %v1464, 4
  %v1466 = vrot.slane %v1411, 5
  %v1467 = vsel %vm923, %v1465, %v1466
  %v1468 = vrot.slane %v1412, 5
  %v1469 = vrot.slane %v1468, 4
  %v1470 = vrot.slane %v1413, 5
  %v1471 = vsel %vm923, %v1469, %v1470
  %v1472 = vrot.slane %v1414, 5
  %v1473 = vrot.slane %v1472, 4
  %v1474 = vrot.slane %v1415, 5
  %v1475 = vsel %vm923, %v1473, %v1474
  %v1476 = vrot.slane %v1416, 5
  %v1477 = vrot.slane %v1476, 4
  %v1478 = vrot.slane %v1417, 5
  %v1479 = vsel %vm923, %v1477, %v1478
  %v1480 = vrot.slane %v1418, 5
  %v1481 = vrot.slane %v1480, 4
  %v1482 = vrot.slane %v1419, 5
  %v1483 = vsel %vm923, %v1481, %v1482
  %s1484 = scalar_lea.vmem [#allocation2], 16
  %v1485 = vld [vmem:[%s1484] sm:$0xf]
  %v1486 = vld [vmem:[%s1484 + $0x8] sm:$0xf]
  %v1487 = vld [vmem:[%s1484 + $0x10] sm:$0xf]
  %v1488 = vld [vmem:[%s1484 + $0x18] sm:$0xf]
  %v1489 = vld [vmem:[%s1484 + $0x20] sm:$0xf]
  %v1490 = vld [vmem:[%s1484 + $0x28] sm:$0xf]
  %v1491 = vld [vmem:[%s1484 + $0x30] sm:$0xf]
  %v1492 = vld [vmem:[%s1484 + $0x38] sm:$0xf]
  %v1493 = vld [vmem:[%s1484 + $0x50] sm:$0xf]
  %v1494 = vld [vmem:[%s1484 + $0x58] sm:$0xf]
  %v1495 = vld [vmem:[%s1484 + $0x60] sm:$0xf]
  %v1496 = vld [vmem:[%s1484 + $0x68] sm:$0xf]
  %v1497 = vld [vmem:[%s1484 + $0x70] sm:$0xf]
  %v1498 = vld [vmem:[%s1484 + $0x78] sm:$0xf]
  %v1499 = vld [vmem:[%s1484 + $0x80] sm:$0xf]
  %v1500 = vld [vmem:[%s1484 + $0x88] sm:$0xf]
  %v1501 = vld [vmem:[%s1484] sm:$0x1f]
  %v1502 = vld [vmem:[%s1484 + $0x8] sm:$0x1f]
  %v1503 = vld [vmem:[%s1484 + $0x10] sm:$0x1f]
  %v1504 = vld [vmem:[%s1484 + $0x18] sm:$0x1f]
  %v1505 = vld [vmem:[%s1484 + $0x20] sm:$0x1f]
  %v1506 = vld [vmem:[%s1484 + $0x28] sm:$0x1f]
  %v1507 = vld [vmem:[%s1484 + $0x30] sm:$0x1f]
  %v1508 = vld [vmem:[%s1484 + $0x38] sm:$0x1f]
  %v1509 = vld [vmem:[%s1484 + $0x50] sm:$0x1f]
  %v1510 = vld [vmem:[%s1484 + $0x58] sm:$0x1f]
  %v1511 = vld [vmem:[%s1484 + $0x60] sm:$0x1f]
  %v1512 = vld [vmem:[%s1484 + $0x68] sm:$0x1f]
  %v1513 = vld [vmem:[%s1484 + $0x70] sm:$0x1f]
  %v1514 = vld [vmem:[%s1484 + $0x78] sm:$0x1f]
  %v1515 = vld [vmem:[%s1484 + $0x80] sm:$0x1f]
  %v1516 = vld [vmem:[%s1484 + $0x88] sm:$0x1f]
  %v1533 = vunpack.c.l.b16 %v1501
  %v1534 = vunpack.c.h.b16 %v1501
  %v1535 = vunpack.c.l.b16 %v1502
  %v1536 = vunpack.c.h.b16 %v1502
  %v1537 = vunpack.c.l.b16 %v1503
  %v1538 = vunpack.c.h.b16 %v1503
  %v1539 = vunpack.c.l.b16 %v1504
  %v1540 = vunpack.c.h.b16 %v1504
  %v1541 = vunpack.c.l.b16 %v1505
  %v1542 = vunpack.c.h.b16 %v1505
  %v1543 = vunpack.c.l.b16 %v1506
  %v1544 = vunpack.c.h.b16 %v1506
  %v1545 = vunpack.c.l.b16 %v1507
  %v1546 = vunpack.c.h.b16 %v1507
  %v1547 = vunpack.c.l.b16 %v1508
  %v1548 = vunpack.c.h.b16 %v1508
  %v1549 = vunpack.c.l.b16 %v1509
  %v1550 = vunpack.c.h.b16 %v1509
  %v1551 = vunpack.c.l.b16 %v1510
  %v1552 = vunpack.c.h.b16 %v1510
  %v1553 = vunpack.c.l.b16 %v1511
  %v1554 = vunpack.c.h.b16 %v1511
  %v1555 = vunpack.c.l.b16 %v1512
  %v1556 = vunpack.c.h.b16 %v1512
  %v1557 = vunpack.c.l.b16 %v1513
  %v1558 = vunpack.c.h.b16 %v1513
  %v1559 = vunpack.c.l.b16 %v1514
  %v1560 = vunpack.c.h.b16 %v1514
  %v1561 = vunpack.c.l.b16 %v1515
  %v1562 = vunpack.c.h.b16 %v1515
  %v1563 = vunpack.c.l.b16 %v1516
  %v1564 = vunpack.c.h.b16 %v1516
  %v1565 = vpack.c.b16 %v1533, %v1533
  %v1566 = vpack.c.b16 %v1534, %v1534
  %v1567 = vpack.c.b16 %v1535, %v1535
  %v1568 = vpack.c.b16 %v1536, %v1536
  %v1569 = vpack.c.b16 %v1537, %v1537
  %v1570 = vpack.c.b16 %v1538, %v1538
  %v1571 = vpack.c.b16 %v1539, %v1539
  %v1572 = vpack.c.b16 %v1540, %v1540
  %v1573 = vpack.c.b16 %v1541, %v1541
  %v1574 = vpack.c.b16 %v1542, %v1542
  %v1575 = vpack.c.b16 %v1543, %v1543
  %v1576 = vpack.c.b16 %v1544, %v1544
  %v1577 = vpack.c.b16 %v1545, %v1545
  %v1578 = vpack.c.b16 %v1546, %v1546
  %v1579 = vpack.c.b16 %v1547, %v1547
  %v1580 = vpack.c.b16 %v1548, %v1548
  %v1581 = vpack.c.b16 %v1549, %v1549
  %v1582 = vpack.c.b16 %v1550, %v1550
  %v1583 = vpack.c.b16 %v1551, %v1551
  %v1584 = vpack.c.b16 %v1552, %v1552
  %v1585 = vpack.c.b16 %v1553, %v1553
  %v1586 = vpack.c.b16 %v1554, %v1554
  %v1587 = vpack.c.b16 %v1555, %v1555
  %v1588 = vpack.c.b16 %v1556, %v1556
  %v1589 = vpack.c.b16 %v1557, %v1557
  %v1590 = vpack.c.b16 %v1558, %v1558
  %v1591 = vpack.c.b16 %v1559, %v1559
  %v1592 = vpack.c.b16 %v1560, %v1560
  %v1593 = vpack.c.b16 %v1561, %v1561
  %v1594 = vpack.c.b16 %v1562, %v1562
  %v1595 = vpack.c.b16 %v1563, %v1563
  %v1596 = vpack.c.b16 %v1564, %v1564
  %v1598 = vshrl.u32 %v1565, 16
  %v1600 = vrot.slane %v1598, 4
  %v1601 = vshll.u32 %v1565, 16
  %v1603 = vrot.slane %v1601, 5
  %v1604 = vor.u32 %v1600, %v1603
  %v1605 = vrot.slane %v1604, 4
  %v1607 = vshll.u32 %v1566, 16
  %v1609 = vrot.slane %v1607, 5
  %v1610 = vsel %vm600, %v1605, %v1609
  %v1612 = vshrl.u32 %v1567, 16
  %v1614 = vrot.slane %v1612, 4
  %v1615 = vshll.u32 %v1567, 16
  %v1617 = vrot.slane %v1615, 5
  %v1618 = vor.u32 %v1614, %v1617
  %v1619 = vrot.slane %v1618, 4
  %v1621 = vshll.u32 %v1568, 16
  %v1623 = vrot.slane %v1621, 5
  %v1624 = vsel %vm600, %v1619, %v1623
  %v1626 = vshrl.u32 %v1569, 16
  %v1628 = vrot.slane %v1626, 4
  %v1629 = vshll.u32 %v1569, 16
  %v1631 = vrot.slane %v1629, 5
  %v1632 = vor.u32 %v1628, %v1631
  %v1633 = vrot.slane %v1632, 4
  %v1635 = vshll.u32 %v1570, 16
  %v1637 = vrot.slane %v1635, 5
  %v1638 = vsel %vm600, %v1633, %v1637
  %v1640 = vshrl.u32 %v1571, 16
  %v1642 = vrot.slane %v1640, 4
  %v1643 = vshll.u32 %v1571, 16
  %v1645 = vrot.slane %v1643, 5
  %v1646 = vor.u32 %v1642, %v1645
  %v1647 = vrot.slane %v1646, 4
  %v1649 = vshll.u32 %v1572, 16
  %v1651 = vrot.slane %v1649, 5
  %v1652 = vsel %vm600, %v1647, %v1651
  %v1654 = vshrl.u32 %v1573, 16
  %v1656 = vrot.slane %v1654, 4
  %v1657 = vshll.u32 %v1573, 16
  %v1659 = vrot.slane %v1657, 5
  %v1660 = vor.u32 %v1656, %v1659
  %v1661 = vrot.slane %v1660, 4
  %v1663 = vshll.u32 %v1574, 16
  %v1665 = vrot.slane %v1663, 5
  %v1666 = vsel %vm600, %v1661, %v1665
  %v1668 = vshrl.u32 %v1575, 16
  %v1670 = vrot.slane %v1668, 4
  %v1671 = vshll.u32 %v1575, 16
  %v1673 = vrot.slane %v1671, 5
  %v1674 = vor.u32 %v1670, %v1673
  %v1675 = vrot.slane %v1674, 4
  %v1677 = vshll.u32 %v1576, 16
  %v1679 = vrot.slane %v1677, 5
  %v1680 = vsel %vm600, %v1675, %v1679
  %v1682 = vshrl.u32 %v1577, 16
  %v1684 = vrot.slane %v1682, 4
  %v1685 = vshll.u32 %v1577, 16
  %v1687 = vrot.slane %v1685, 5
  %v1688 = vor.u32 %v1684, %v1687
  %v1689 = vrot.slane %v1688, 4
  %v1691 = vshll.u32 %v1578, 16
  %v1693 = vrot.slane %v1691, 5
  %v1694 = vsel %vm600, %v1689, %v1693
  %v1696 = vshrl.u32 %v1579, 16
  %v1698 = vrot.slane %v1696, 4
  %v1699 = vshll.u32 %v1579, 16
  %v1701 = vrot.slane %v1699, 5
  %v1702 = vor.u32 %v1698, %v1701
  %v1703 = vrot.slane %v1702, 4
  %v1705 = vshll.u32 %v1580, 16
  %v1707 = vrot.slane %v1705, 5
  %v1708 = vsel %vm600, %v1703, %v1707
  %v1710 = vshrl.u32 %v1581, 16
  %v1712 = vrot.slane %v1710, 4
  %v1713 = vshll.u32 %v1581, 16
  %v1715 = vrot.slane %v1713, 5
  %v1716 = vor.u32 %v1712, %v1715
  %v1717 = vrot.slane %v1716, 4
  %v1719 = vshll.u32 %v1582, 16
  %v1721 = vrot.slane %v1719, 5
  %v1722 = vsel %vm600, %v1717, %v1721
  %v1724 = vshrl.u32 %v1583, 16
  %v1726 = vrot.slane %v1724, 4
  %v1727 = vshll.u32 %v1583, 16
  %v1729 = vrot.slane %v1727, 5
  %v1730 = vor.u32 %v1726, %v1729
  %v1731 = vrot.slane %v1730, 4
  %v1733 = vshll.u32 %v1584, 16
  %v1735 = vrot.slane %v1733, 5
  %v1736 = vsel %vm600, %v1731, %v1735
  %v1738 = vshrl.u32 %v1585, 16
  %v1740 = vrot.slane %v1738, 4
  %v1741 = vshll.u32 %v1585, 16
  %v1743 = vrot.slane %v1741, 5
  %v1744 = vor.u32 %v1740, %v1743
  %v1745 = vrot.slane %v1744, 4
  %v1747 = vshll.u32 %v1586, 16
  %v1749 = vrot.slane %v1747, 5
  %v1750 = vsel %vm600, %v1745, %v1749
  %v1752 = vshrl.u32 %v1587, 16
  %v1754 = vrot.slane %v1752, 4
  %v1755 = vshll.u32 %v1587, 16
  %v1757 = vrot.slane %v1755, 5
  %v1758 = vor.u32 %v1754, %v1757
  %v1759 = vrot.slane %v1758, 4
  %v1761 = vshll.u32 %v1588, 16
  %v1763 = vrot.slane %v1761, 5
  %v1764 = vsel %vm600, %v1759, %v1763
  %v1766 = vshrl.u32 %v1589, 16
  %v1768 = vrot.slane %v1766, 4
  %v1769 = vshll.u32 %v1589, 16
  %v1771 = vrot.slane %v1769, 5
  %v1772 = vor.u32 %v1768, %v1771
  %v1773 = vrot.slane %v1772, 4
  %v1775 = vshll.u32 %v1590, 16
  %v1777 = vrot.slane %v1775, 5
  %v1778 = vsel %vm600, %v1773, %v1777
  %v1780 = vshrl.u32 %v1591, 16
  %v1782 = vrot.slane %v1780, 4
  %v1783 = vshll.u32 %v1591, 16
  %v1785 = vrot.slane %v1783, 5
  %v1786 = vor.u32 %v1782, %v1785
  %v1787 = vrot.slane %v1786, 4
  %v1789 = vshll.u32 %v1592, 16
  %v1791 = vrot.slane %v1789, 5
  %v1792 = vsel %vm600, %v1787, %v1791
  %v1794 = vshrl.u32 %v1593, 16
  %v1796 = vrot.slane %v1794, 4
  %v1797 = vshll.u32 %v1593, 16
  %v1799 = vrot.slane %v1797, 5
  %v1800 = vor.u32 %v1796, %v1799
  %v1801 = vrot.slane %v1800, 4
  %v1803 = vshll.u32 %v1594, 16
  %v1805 = vrot.slane %v1803, 5
  %v1806 = vsel %vm600, %v1801, %v1805
  %v1808 = vshrl.u32 %v1595, 16
  %v1810 = vrot.slane %v1808, 4
  %v1811 = vshll.u32 %v1595, 16
  %v1813 = vrot.slane %v1811, 5
  %v1814 = vor.u32 %v1810, %v1813
  %v1815 = vrot.slane %v1814, 4
  %v1817 = vshll.u32 %v1596, 16
  %v1819 = vrot.slane %v1817, 5
  %v1820 = vsel %vm600, %v1815, %v1819
  %v1821 = vld [vmem:[%s1484] sm:$0x1e]
  %v1822 = vld [vmem:[%s1484 + $0x8] sm:$0x1e]
  %v1823 = vld [vmem:[%s1484 + $0x10] sm:$0x1e]
  %v1824 = vld [vmem:[%s1484 + $0x18] sm:$0x1e]
  %v1825 = vld [vmem:[%s1484 + $0x20] sm:$0x1e]
  %v1826 = vld [vmem:[%s1484 + $0x28] sm:$0x1e]
  %v1827 = vld [vmem:[%s1484 + $0x30] sm:$0x1e]
  %v1828 = vld [vmem:[%s1484 + $0x38] sm:$0x1e]
  %v1829 = vld [vmem:[%s1484 + $0x50] sm:$0x1e]
  %v1830 = vld [vmem:[%s1484 + $0x58] sm:$0x1e]
  %v1831 = vld [vmem:[%s1484 + $0x60] sm:$0x1e]
  %v1832 = vld [vmem:[%s1484 + $0x68] sm:$0x1e]
  %v1833 = vld [vmem:[%s1484 + $0x70] sm:$0x1e]
  %v1834 = vld [vmem:[%s1484 + $0x78] sm:$0x1e]
  %v1835 = vld [vmem:[%s1484 + $0x80] sm:$0x1e]
  %v1836 = vld [vmem:[%s1484 + $0x88] sm:$0x1e]
  %v1853 = vunpack.c.l.b16 %v1821
  %v1854 = vunpack.c.h.b16 %v1821
  %v1855 = vunpack.c.l.b16 %v1822
  %v1856 = vunpack.c.h.b16 %v1822
  %v1857 = vunpack.c.l.b16 %v1823
  %v1858 = vunpack.c.h.b16 %v1823
  %v1859 = vunpack.c.l.b16 %v1824
  %v1860 = vunpack.c.h.b16 %v1824
  %v1861 = vunpack.c.l.b16 %v1825
  %v1862 = vunpack.c.h.b16 %v1825
  %v1863 = vunpack.c.l.b16 %v1826
  %v1864 = vunpack.c.h.b16 %v1826
  %v1865 = vunpack.c.l.b16 %v1827
  %v1866 = vunpack.c.h.b16 %v1827
  %v1867 = vunpack.c.l.b16 %v1828
  %v1868 = vunpack.c.h.b16 %v1828
  %v1869 = vunpack.c.l.b16 %v1829
  %v1870 = vunpack.c.h.b16 %v1829
  %v1871 = vunpack.c.l.b16 %v1830
  %v1872 = vunpack.c.h.b16 %v1830
  %v1873 = vunpack.c.l.b16 %v1831
  %v1874 = vunpack.c.h.b16 %v1831
  %v1875 = vunpack.c.l.b16 %v1832
  %v1876 = vunpack.c.h.b16 %v1832
  %v1877 = vunpack.c.l.b16 %v1833
  %v1878 = vunpack.c.h.b16 %v1833
  %v1879 = vunpack.c.l.b16 %v1834
  %v1880 = vunpack.c.h.b16 %v1834
  %v1881 = vunpack.c.l.b16 %v1835
  %v1882 = vunpack.c.h.b16 %v1835
  %v1883 = vunpack.c.l.b16 %v1836
  %v1884 = vunpack.c.h.b16 %v1836
  %v1885 = vpack.c.b16 %v1853, %v1853
  %v1886 = vpack.c.b16 %v1854, %v1854
  %v1887 = vpack.c.b16 %v1855, %v1855
  %v1888 = vpack.c.b16 %v1856, %v1856
  %v1889 = vpack.c.b16 %v1857, %v1857
  %v1890 = vpack.c.b16 %v1858, %v1858
  %v1891 = vpack.c.b16 %v1859, %v1859
  %v1892 = vpack.c.b16 %v1860, %v1860
  %v1893 = vpack.c.b16 %v1861, %v1861
  %v1894 = vpack.c.b16 %v1862, %v1862
  %v1895 = vpack.c.b16 %v1863, %v1863
  %v1896 = vpack.c.b16 %v1864, %v1864
  %v1897 = vpack.c.b16 %v1865, %v1865
  %v1898 = vpack.c.b16 %v1866, %v1866
  %v1899 = vpack.c.b16 %v1867, %v1867
  %v1900 = vpack.c.b16 %v1868, %v1868
  %v1901 = vpack.c.b16 %v1869, %v1869
  %v1902 = vpack.c.b16 %v1870, %v1870
  %v1903 = vpack.c.b16 %v1871, %v1871
  %v1904 = vpack.c.b16 %v1872, %v1872
  %v1905 = vpack.c.b16 %v1873, %v1873
  %v1906 = vpack.c.b16 %v1874, %v1874
  %v1907 = vpack.c.b16 %v1875, %v1875
  %v1908 = vpack.c.b16 %v1876, %v1876
  %v1909 = vpack.c.b16 %v1877, %v1877
  %v1910 = vpack.c.b16 %v1878, %v1878
  %v1911 = vpack.c.b16 %v1879, %v1879
  %v1912 = vpack.c.b16 %v1880, %v1880
  %v1913 = vpack.c.b16 %v1881, %v1881
  %v1914 = vpack.c.b16 %v1882, %v1882
  %v1915 = vpack.c.b16 %v1883, %v1883
  %v1916 = vpack.c.b16 %v1884, %v1884
  %v1917 = vrot.slane %v1885, 5
  %v1918 = vrot.slane %v1917, 4
  %v1919 = vrot.slane %v1886, 5
  %v1920 = vsel %vm923, %v1918, %v1919
  %v1921 = vrot.slane %v1887, 5
  %v1922 = vrot.slane %v1921, 4
  %v1923 = vrot.slane %v1888, 5
  %v1924 = vsel %vm923, %v1922, %v1923
  %v1925 = vrot.slane %v1889, 5
  %v1926 = vrot.slane %v1925, 4
  %v1927 = vrot.slane %v1890, 5
  %v1928 = vsel %vm923, %v1926, %v1927
  %v1929 = vrot.slane %v1891, 5
  %v1930 = vrot.slane %v1929, 4
  %v1931 = vrot.slane %v1892, 5
  %v1932 = vsel %vm923, %v1930, %v1931
  %v1933 = vrot.slane %v1893, 5
  %v1934 = vrot.slane %v1933, 4
  %v1935 = vrot.slane %v1894, 5
  %v1936 = vsel %vm923, %v1934, %v1935
  %v1937 = vrot.slane %v1895, 5
  %v1938 = vrot.slane %v1937, 4
  %v1939 = vrot.slane %v1896, 5
  %v1940 = vsel %vm923, %v1938, %v1939
  %v1941 = vrot.slane %v1897, 5
  %v1942 = vrot.slane %v1941, 4
  %v1943 = vrot.slane %v1898, 5
  %v1944 = vsel %vm923, %v1942, %v1943
  %v1945 = vrot.slane %v1899, 5
  %v1946 = vrot.slane %v1945, 4
  %v1947 = vrot.slane %v1900, 5
  %v1948 = vsel %vm923, %v1946, %v1947
  %v1949 = vrot.slane %v1901, 5
  %v1950 = vrot.slane %v1949, 4
  %v1951 = vrot.slane %v1902, 5
  %v1952 = vsel %vm923, %v1950, %v1951
  %v1953 = vrot.slane %v1903, 5
  %v1954 = vrot.slane %v1953, 4
  %v1955 = vrot.slane %v1904, 5
  %v1956 = vsel %vm923, %v1954, %v1955
  %v1957 = vrot.slane %v1905, 5
  %v1958 = vrot.slane %v1957, 4
  %v1959 = vrot.slane %v1906, 5
  %v1960 = vsel %vm923, %v1958, %v1959
  %v1961 = vrot.slane %v1907, 5
  %v1962 = vrot.slane %v1961, 4
  %v1963 = vrot.slane %v1908, 5
  %v1964 = vsel %vm923, %v1962, %v1963
  %v1965 = vrot.slane %v1909, 5
  %v1966 = vrot.slane %v1965, 4
  %v1967 = vrot.slane %v1910, 5
  %v1968 = vsel %vm923, %v1966, %v1967
  %v1969 = vrot.slane %v1911, 5
  %v1970 = vrot.slane %v1969, 4
  %v1971 = vrot.slane %v1912, 5
  %v1972 = vsel %vm923, %v1970, %v1971
  %v1973 = vrot.slane %v1913, 5
  %v1974 = vrot.slane %v1973, 4
  %v1975 = vrot.slane %v1914, 5
  %v1976 = vsel %vm923, %v1974, %v1975
  %v1977 = vrot.slane %v1915, 5
  %v1978 = vrot.slane %v1977, 4
  %v1979 = vrot.slane %v1916, 5
  %v1980 = vsel %vm923, %v1978, %v1979
  %v1997 = vunpack.c.l.b16 %v486
  %v1998 = vunpack.c.l.b16 %v487
  %v1999 = vunpack.c.l.b16 %v488
  %v2000 = vunpack.c.l.b16 %v489
  %v2001 = vunpack.c.l.b16 %v490
  %v2002 = vunpack.c.l.b16 %v491
  %v2003 = vunpack.c.l.b16 %v492
  %v2004 = vunpack.c.l.b16 %v493
  %v2005 = vunpack.c.l.b16 %v494
  %v2006 = vunpack.c.l.b16 %v495
  %v2007 = vunpack.c.l.b16 %v496
  %v2008 = vunpack.c.l.b16 %v497
  %v2009 = vunpack.c.l.b16 %v498
  %v2010 = vunpack.c.l.b16 %v499
  %v2011 = vunpack.c.l.b16 %v500
  %v2012 = vunpack.c.l.b16 %v501
  %v2013 = vpack.c.b16 %v1998, %v1997
  %v2014 = vpack.c.b16 %v2000, %v1999
  %v2015 = vpack.c.b16 %v2002, %v2001
  %v2016 = vpack.c.b16 %v2004, %v2003
  %v2017 = vpack.c.b16 %v2006, %v2005
  %v2018 = vpack.c.b16 %v2008, %v2007
  %v2019 = vpack.c.b16 %v2010, %v2009
  %v2020 = vpack.c.b16 %v2012, %v2011
  %v2021 = vunpack.c.l.b16 %v614
  %v2022 = vunpack.c.l.b16 %v628
  %v2023 = vunpack.c.l.b16 %v642
  %v2024 = vunpack.c.l.b16 %v656
  %v2025 = vunpack.c.l.b16 %v670
  %v2026 = vunpack.c.l.b16 %v684
  %v2027 = vunpack.c.l.b16 %v698
  %v2028 = vunpack.c.l.b16 %v712
  %v2029 = vunpack.c.l.b16 %v726
  %v2030 = vunpack.c.l.b16 %v740
  %v2031 = vunpack.c.l.b16 %v754
  %v2032 = vunpack.c.l.b16 %v768
  %v2033 = vunpack.c.l.b16 %v782
  %v2034 = vunpack.c.l.b16 %v796
  %v2035 = vunpack.c.l.b16 %v810
  %v2036 = vunpack.c.l.b16 %v824
  %v2037 = vpack.c.b16 %v2022, %v2021
  %v2038 = vpack.c.b16 %v2024, %v2023
  %v2039 = vpack.c.b16 %v2026, %v2025
  %v2040 = vpack.c.b16 %v2028, %v2027
  %v2041 = vpack.c.b16 %v2030, %v2029
  %v2042 = vpack.c.b16 %v2032, %v2031
  %v2043 = vpack.c.b16 %v2034, %v2033
  %v2044 = vpack.c.b16 %v2036, %v2035
  %2045 = vrot.lane.b32.xlu0 %v2037, 8
  %v2046 = vpop.permute.xlu0 %2045
  %2047 = vrot.lane.b32.xlu0 %v2038, 8
  %v2048 = vpop.permute.xlu0 %2047
  %2049 = vrot.lane.b32.xlu0 %v2039, 8
  %v2050 = vpop.permute.xlu0 %2049
  %2051 = vrot.lane.b32.xlu0 %v2040, 8
  %v2052 = vpop.permute.xlu0 %2051
  %2053 = vrot.lane.b32.xlu0 %v2041, 8
  %v2054 = vpop.permute.xlu0 %2053
  %2055 = vrot.lane.b32.xlu0 %v2042, 8
  %v2056 = vpop.permute.xlu0 %2055
  %2057 = vrot.lane.b32.xlu0 %v2043, 8
  %v2058 = vpop.permute.xlu0 %2057
  %2059 = vrot.lane.b32.xlu0 %v2044, 8
  %v2060 = vpop.permute.xlu0 %2059
  %v2061 = vunpack.c.l.b16 %v927
  %v2062 = vunpack.c.l.b16 %v931
  %v2063 = vunpack.c.l.b16 %v935
  %v2064 = vunpack.c.l.b16 %v939
  %v2065 = vunpack.c.l.b16 %v943
  %v2066 = vunpack.c.l.b16 %v947
  %v2067 = vunpack.c.l.b16 %v951
  %v2068 = vunpack.c.l.b16 %v955
  %v2069 = vunpack.c.l.b16 %v959
  %v2070 = vunpack.c.l.b16 %v963
  %v2071 = vunpack.c.l.b16 %v967
  %v2072 = vunpack.c.l.b16 %v971
  %v2073 = vunpack.c.l.b16 %v975
  %v2074 = vunpack.c.l.b16 %v979
  %v2075 = vunpack.c.l.b16 %v983
  %v2076 = vunpack.c.l.b16 %v987
  %v2077 = vpack.c.b16 %v2062, %v2061
  %v2078 = vpack.c.b16 %v2064, %v2063
  %v2079 = vpack.c.b16 %v2066, %v2065
  %v2080 = vpack.c.b16 %v2068, %v2067
  %v2081 = vpack.c.b16 %v2070, %v2069
  %v2082 = vpack.c.b16 %v2072, %v2071
  %v2083 = vpack.c.b16 %v2074, %v2073
  %v2084 = vpack.c.b16 %v2076, %v2075
  %2085 = vrot.lane.b32.xlu0 %v2077, 16
  %v2086 = vpop.permute.xlu0 %2085
  %2087 = vrot.lane.b32.xlu0 %v2078, 16
  %v2088 = vpop.permute.xlu0 %2087
  %2089 = vrot.lane.b32.xlu0 %v2079, 16
  %v2090 = vpop.permute.xlu0 %2089
  %2091 = vrot.lane.b32.xlu0 %v2080, 16
  %v2092 = vpop.permute.xlu0 %2091
  %2093 = vrot.lane.b32.xlu0 %v2081, 16
  %v2094 = vpop.permute.xlu0 %2093
  %2095 = vrot.lane.b32.xlu0 %v2082, 16
  %v2096 = vpop.permute.xlu0 %2095
  %2097 = vrot.lane.b32.xlu0 %v2083, 16
  %v2098 = vpop.permute.xlu0 %2097
  %2099 = vrot.lane.b32.xlu0 %v2084, 16
  %v2100 = vpop.permute.xlu0 %2099
  %v2117 = vunpack.c.l.b16 %v988
  %v2118 = vunpack.c.l.b16 %v989
  %v2119 = vunpack.c.l.b16 %v990
  %v2120 = vunpack.c.l.b16 %v991
  %v2121 = vunpack.c.l.b16 %v992
  %v2122 = vunpack.c.l.b16 %v993
  %v2123 = vunpack.c.l.b16 %v994
  %v2124 = vunpack.c.l.b16 %v995
  %v2125 = vunpack.c.l.b16 %v996
  %v2126 = vunpack.c.l.b16 %v997
  %v2127 = vunpack.c.l.b16 %v998
  %v2128 = vunpack.c.l.b16 %v999
  %v2129 = vunpack.c.l.b16 %v1000
  %v2130 = vunpack.c.l.b16 %v1001
  %v2131 = vunpack.c.l.b16 %v1002
  %v2132 = vunpack.c.l.b16 %v1003
  %v2133 = vpack.c.b16 %v2118, %v2117
  %v2134 = vpack.c.b16 %v2120, %v2119
  %v2135 = vpack.c.b16 %v2122, %v2121
  %v2136 = vpack.c.b16 %v2124, %v2123
  %v2137 = vpack.c.b16 %v2126, %v2125
  %v2138 = vpack.c.b16 %v2128, %v2127
  %v2139 = vpack.c.b16 %v2130, %v2129
  %v2140 = vpack.c.b16 %v2132, %v2131
  %2141 = vrot.lane.b32.xlu0 %v2133, 24
  %v2142 = vpop.permute.xlu0 %2141
  %2143 = vrot.lane.b32.xlu0 %v2134, 24
  %v2144 = vpop.permute.xlu0 %2143
  %2145 = vrot.lane.b32.xlu0 %v2135, 24
  %v2146 = vpop.permute.xlu0 %2145
  %2147 = vrot.lane.b32.xlu0 %v2136, 24
  %v2148 = vpop.permute.xlu0 %2147
  %2149 = vrot.lane.b32.xlu0 %v2137, 24
  %v2150 = vpop.permute.xlu0 %2149
  %2151 = vrot.lane.b32.xlu0 %v2138, 24
  %v2152 = vpop.permute.xlu0 %2151
  %2153 = vrot.lane.b32.xlu0 %v2139, 24
  %v2154 = vpop.permute.xlu0 %2153
  %2155 = vrot.lane.b32.xlu0 %v2140, 24
  %v2156 = vpop.permute.xlu0 %2155
  %v2157 = vunpack.c.l.b16 %v1113
  %v2158 = vunpack.c.l.b16 %v1127
  %v2159 = vunpack.c.l.b16 %v1141
  %v2160 = vunpack.c.l.b16 %v1155
  %v2161 = vunpack.c.l.b16 %v1169
  %v2162 = vunpack.c.l.b16 %v1183
  %v2163 = vunpack.c.l.b16 %v1197
  %v2164 = vunpack.c.l.b16 %v1211
  %v2165 = vunpack.c.l.b16 %v1225
  %v2166 = vunpack.c.l.b16 %v1239
  %v2167 = vunpack.c.l.b16 %v1253
  %v2168 = vunpack.c.l.b16 %v1267
  %v2169 = vunpack.c.l.b16 %v1281
  %v2170 = vunpack.c.l.b16 %v1295
  %v2171 = vunpack.c.l.b16 %v1309
  %v2172 = vunpack.c.l.b16 %v1323
  %v2173 = vpack.c.b16 %v2158, %v2157
  %v2174 = vpack.c.b16 %v2160, %v2159
  %v2175 = vpack.c.b16 %v2162, %v2161
  %v2176 = vpack.c.b16 %v2164, %v2163
  %v2177 = vpack.c.b16 %v2166, %v2165
  %v2178 = vpack.c.b16 %v2168, %v2167
  %v2179 = vpack.c.b16 %v2170, %v2169
  %v2180 = vpack.c.b16 %v2172, %v2171
  %2181 = vrot.lane.b32.xlu0 %v2173, 32
  %v2182 = vpop.permute.xlu0 %2181
  %2183 = vrot.lane.b32.xlu0 %v2174, 32
  %v2184 = vpop.permute.xlu0 %2183
  %2185 = vrot.lane.b32.xlu0 %v2175, 32
  %v2186 = vpop.permute.xlu0 %2185
  %2187 = vrot.lane.b32.xlu0 %v2176, 32
  %v2188 = vpop.permute.xlu0 %2187
  %2189 = vrot.lane.b32.xlu0 %v2177, 32
  %v2190 = vpop.permute.xlu0 %2189
  %2191 = vrot.lane.b32.xlu0 %v2178, 32
  %v2192 = vpop.permute.xlu0 %2191
  %2193 = vrot.lane.b32.xlu0 %v2179, 32
  %v2194 = vpop.permute.xlu0 %2193
  %2195 = vrot.lane.b32.xlu0 %v2180, 32
  %v2196 = vpop.permute.xlu0 %2195
  %v2197 = vunpack.c.l.b16 %v1423
  %v2198 = vunpack.c.l.b16 %v1427
  %v2199 = vunpack.c.l.b16 %v1431
  %v2200 = vunpack.c.l.b16 %v1435
  %v2201 = vunpack.c.l.b16 %v1439
  %v2202 = vunpack.c.l.b16 %v1443
  %v2203 = vunpack.c.l.b16 %v1447
  %v2204 = vunpack.c.l.b16 %v1451
  %v2205 = vunpack.c.l.b16 %v1455
  %v2206 = vunpack.c.l.b16 %v1459
  %v2207 = vunpack.c.l.b16 %v1463
  %v2208 = vunpack.c.l.b16 %v1467
  %v2209 = vunpack.c.l.b16 %v1471
  %v2210 = vunpack.c.l.b16 %v1475
  %v2211 = vunpack.c.l.b16 %v1479
  %v2212 = vunpack.c.l.b16 %v1483
  %v2213 = vpack.c.b16 %v2198, %v2197
  %v2214 = vpack.c.b16 %v2200, %v2199
  %v2215 = vpack.c.b16 %v2202, %v2201
  %v2216 = vpack.c.b16 %v2204, %v2203
  %v2217 = vpack.c.b16 %v2206, %v2205
  %v2218 = vpack.c.b16 %v2208, %v2207
  %v2219 = vpack.c.b16 %v2210, %v2209
  %v2220 = vpack.c.b16 %v2212, %v2211
  %2221 = vrot.lane.b32.xlu0 %v2213, 40
  %v2222 = vpop.permute.xlu0 %2221
  %2223 = vrot.lane.b32.xlu0 %v2214, 40
  %v2224 = vpop.permute.xlu0 %2223
  %2225 = vrot.lane.b32.xlu0 %v2215, 40
  %v2226 = vpop.permute.xlu0 %2225
  %2227 = vrot.lane.b32.xlu0 %v2216, 40
  %v2228 = vpop.permute.xlu0 %2227
  %2229 = vrot.lane.b32.xlu0 %v2217, 40
  %v2230 = vpop.permute.xlu0 %2229
  %2231 = vrot.lane.b32.xlu0 %v2218, 40
  %v2232 = vpop.permute.xlu0 %2231
  %2233 = vrot.lane.b32.xlu0 %v2219, 40
  %v2234 = vpop.permute.xlu0 %2233
  %2235 = vrot.lane.b32.xlu0 %v2220, 40
  %v2236 = vpop.permute.xlu0 %2235
  %v2253 = vunpack.c.l.b16 %v1485
  %v2254 = vunpack.c.l.b16 %v1486
  %v2255 = vunpack.c.l.b16 %v1487
  %v2256 = vunpack.c.l.b16 %v1488
  %v2257 = vunpack.c.l.b16 %v1489
  %v2258 = vunpack.c.l.b16 %v1490
  %v2259 = vunpack.c.l.b16 %v1491
  %v2260 = vunpack.c.l.b16 %v1492
  %v2261 = vunpack.c.l.b16 %v1493
  %v2262 = vunpack.c.l.b16 %v1494
  %v2263 = vunpack.c.l.b16 %v1495
  %v2264 = vunpack.c.l.b16 %v1496
  %v2265 = vunpack.c.l.b16 %v1497
  %v2266 = vunpack.c.l.b16 %v1498
  %v2267 = vunpack.c.l.b16 %v1499
  %v2268 = vunpack.c.l.b16 %v1500
  %v2269 = vpack.c.b16 %v2254, %v2253
  %v2270 = vpack.c.b16 %v2256, %v2255
  %v2271 = vpack.c.b16 %v2258, %v2257
  %v2272 = vpack.c.b16 %v2260, %v2259
  %v2273 = vpack.c.b16 %v2262, %v2261
  %v2274 = vpack.c.b16 %v2264, %v2263
  %v2275 = vpack.c.b16 %v2266, %v2265
  %v2276 = vpack.c.b16 %v2268, %v2267
  %2277 = vrot.lane.b32.xlu0 %v2269, 48
  %v2278 = vpop.permute.xlu0 %2277
  %2279 = vrot.lane.b32.xlu0 %v2270, 48
  %v2280 = vpop.permute.xlu0 %2279
  %2281 = vrot.lane.b32.xlu0 %v2271, 48
  %v2282 = vpop.permute.xlu0 %2281
  %2283 = vrot.lane.b32.xlu0 %v2272, 48
  %v2284 = vpop.permute.xlu0 %2283
  %2285 = vrot.lane.b32.xlu0 %v2273, 48
  %v2286 = vpop.permute.xlu0 %2285
  %2287 = vrot.lane.b32.xlu0 %v2274, 48
  %v2288 = vpop.permute.xlu0 %2287
  %2289 = vrot.lane.b32.xlu0 %v2275, 48
  %v2290 = vpop.permute.xlu0 %2289
  %2291 = vrot.lane.b32.xlu0 %v2276, 48
  %v2292 = vpop.permute.xlu0 %2291
  %v2293 = vunpack.c.l.b16 %v1610
  %v2294 = vunpack.c.l.b16 %v1624
  %v2295 = vunpack.c.l.b16 %v1638
  %v2296 = vunpack.c.l.b16 %v1652
  %v2297 = vunpack.c.l.b16 %v1666
  %v2298 = vunpack.c.l.b16 %v1680
  %v2299 = vunpack.c.l.b16 %v1694
  %v2300 = vunpack.c.l.b16 %v1708
  %v2301 = vunpack.c.l.b16 %v1722
  %v2302 = vunpack.c.l.b16 %v1736
  %v2303 = vunpack.c.l.b16 %v1750
  %v2304 = vunpack.c.l.b16 %v1764
  %v2305 = vunpack.c.l.b16 %v1778
  %v2306 = vunpack.c.l.b16 %v1792
  %v2307 = vunpack.c.l.b16 %v1806
  %v2308 = vunpack.c.l.b16 %v1820
  %v2309 = vpack.c.b16 %v2294, %v2293
  %v2310 = vpack.c.b16 %v2296, %v2295
  %v2311 = vpack.c.b16 %v2298, %v2297
  %v2312 = vpack.c.b16 %v2300, %v2299
  %v2313 = vpack.c.b16 %v2302, %v2301
  %v2314 = vpack.c.b16 %v2304, %v2303
  %v2315 = vpack.c.b16 %v2306, %v2305
  %v2316 = vpack.c.b16 %v2308, %v2307
  %2317 = vrot.lane.b32.xlu0 %v2309, 56
  %v2318 = vpop.permute.xlu0 %2317
  %2319 = vrot.lane.b32.xlu0 %v2310, 56
  %v2320 = vpop.permute.xlu0 %2319
  %2321 = vrot.lane.b32.xlu0 %v2311, 56
  %v2322 = vpop.permute.xlu0 %2321
  %2323 = vrot.lane.b32.xlu0 %v2312, 56
  %v2324 = vpop.permute.xlu0 %2323
  %2325 = vrot.lane.b32.xlu0 %v2313, 56
  %v2326 = vpop.permute.xlu0 %2325
  %2327 = vrot.lane.b32.xlu0 %v2314, 56
  %v2328 = vpop.permute.xlu0 %2327
  %2329 = vrot.lane.b32.xlu0 %v2315, 56
  %v2330 = vpop.permute.xlu0 %2329
  %2331 = vrot.lane.b32.xlu0 %v2316, 56
  %v2332 = vpop.permute.xlu0 %2331
  %v2333 = vunpack.c.l.b16 %v1920
  %v2334 = vunpack.c.l.b16 %v1924
  %v2335 = vunpack.c.l.b16 %v1928
  %v2336 = vunpack.c.l.b16 %v1932
  %v2337 = vunpack.c.l.b16 %v1936
  %v2338 = vunpack.c.l.b16 %v1940
  %v2339 = vunpack.c.l.b16 %v1944
  %v2340 = vunpack.c.l.b16 %v1948
  %v2341 = vunpack.c.l.b16 %v1952
  %v2342 = vunpack.c.l.b16 %v1956
  %v2343 = vunpack.c.l.b16 %v1960
  %v2344 = vunpack.c.l.b16 %v1964
  %v2345 = vunpack.c.l.b16 %v1968
  %v2346 = vunpack.c.l.b16 %v1972
  %v2347 = vunpack.c.l.b16 %v1976
  %v2348 = vunpack.c.l.b16 %v1980
  %v2349 = vpack.c.b16 %v2334, %v2333
  %v2350 = vpack.c.b16 %v2336, %v2335
  %v2351 = vpack.c.b16 %v2338, %v2337
  %v2352 = vpack.c.b16 %v2340, %v2339
  %v2353 = vpack.c.b16 %v2342, %v2341
  %v2354 = vpack.c.b16 %v2344, %v2343
  %v2355 = vpack.c.b16 %v2346, %v2345
  %v2356 = vpack.c.b16 %v2348, %v2347
  %2357 = vrot.lane.b32.xlu0 %v2349, 64
  %v2358 = vpop.permute.xlu0 %2357
  %2359 = vrot.lane.b32.xlu0 %v2350, 64
  %v2360 = vpop.permute.xlu0 %2359
  %2361 = vrot.lane.b32.xlu0 %v2351, 64
  %v2362 = vpop.permute.xlu0 %2361
  %2363 = vrot.lane.b32.xlu0 %v2352, 64
  %v2364 = vpop.permute.xlu0 %2363
  %2365 = vrot.lane.b32.xlu0 %v2353, 64
  %v2366 = vpop.permute.xlu0 %2365
  %2367 = vrot.lane.b32.xlu0 %v2354, 64
  %v2368 = vpop.permute.xlu0 %2367
  %2369 = vrot.lane.b32.xlu0 %v2355, 64
  %v2370 = vpop.permute.xlu0 %2369
  %2371 = vrot.lane.b32.xlu0 %v2356, 64
  %v2372 = vpop.permute.xlu0 %2371
  %v2375 = vsel %vm150, %v2013, %v2046
  %v2378 = vsel %vm150, %v2014, %v2048
  %v2381 = vsel %vm150, %v2015, %v2050
  %v2384 = vsel %vm150, %v2016, %v2052
  %v2387 = vsel %vm150, %v2017, %v2054
  %v2390 = vsel %vm150, %v2018, %v2056
  %v2393 = vsel %vm150, %v2019, %v2058
  %v2396 = vsel %vm150, %v2020, %v2060
  %vm2397 = vcmask 130048
  %v2399 = vsel %vm2397, %v2375, %v2086
  %v2401 = vsel %vm2397, %v2378, %v2088
  %v2403 = vsel %vm2397, %v2381, %v2090
  %v2405 = vsel %vm2397, %v2384, %v2092
  %v2407 = vsel %vm2397, %v2387, %v2094
  %v2409 = vsel %vm2397, %v2390, %v2096
  %v2411 = vsel %vm2397, %v2393, %v2098
  %v2413 = vsel %vm2397, %v2396, %v2100
  %vm2414 = vcmask 195584
  %v2416 = vsel %vm2414, %v2399, %v2142
  %v2418 = vsel %vm2414, %v2401, %v2144
  %v2420 = vsel %vm2414, %v2403, %v2146
  %v2422 = vsel %vm2414, %v2405, %v2148
  %v2424 = vsel %vm2414, %v2407, %v2150
  %v2426 = vsel %vm2414, %v2409, %v2152
  %v2428 = vsel %vm2414, %v2411, %v2154
  %v2430 = vsel %vm2414, %v2413, %v2156
  %vm2431 = vcmask 261120
  %v2433 = vsel %vm2431, %v2416, %v2182
  %v2435 = vsel %vm2431, %v2418, %v2184
  %v2437 = vsel %vm2431, %v2420, %v2186
  %v2439 = vsel %vm2431, %v2422, %v2188
  %v2441 = vsel %vm2431, %v2424, %v2190
  %v2443 = vsel %vm2431, %v2426, %v2192
  %v2445 = vsel %vm2431, %v2428, %v2194
  %v2447 = vsel %vm2431, %v2430, %v2196
  %vm2448 = vcmask 326656
  %v2450 = vsel %vm2448, %v2433, %v2222
  %v2452 = vsel %vm2448, %v2435, %v2224
  %v2454 = vsel %vm2448, %v2437, %v2226
  %v2456 = vsel %vm2448, %v2439, %v2228
  %v2458 = vsel %vm2448, %v2441, %v2230
  %v2460 = vsel %vm2448, %v2443, %v2232
  %v2462 = vsel %vm2448, %v2445, %v2234
  %v2464 = vsel %vm2448, %v2447, %v2236
  %vm2465 = vcmask 392192
  %v2467 = vsel %vm2465, %v2450, %v2278
  %v2469 = vsel %vm2465, %v2452, %v2280
  %v2471 = vsel %vm2465, %v2454, %v2282
  %v2473 = vsel %vm2465, %v2456, %v2284
  %v2475 = vsel %vm2465, %v2458, %v2286
  %v2477 = vsel %vm2465, %v2460, %v2288
  %v2479 = vsel %vm2465, %v2462, %v2290
  %v2481 = vsel %vm2465, %v2464, %v2292
  %vm2482 = vcmask 457728
  %v2484 = vsel %vm2482, %v2467, %v2318
  %v2486 = vsel %vm2482, %v2469, %v2320
  %v2488 = vsel %vm2482, %v2471, %v2322
  %v2490 = vsel %vm2482, %v2473, %v2324
  %v2492 = vsel %vm2482, %v2475, %v2326
  %v2494 = vsel %vm2482, %v2477, %v2328
  %v2496 = vsel %vm2482, %v2479, %v2330
  %v2498 = vsel %vm2482, %v2481, %v2332
  %vm2499 = vcmask 523264
  %v2501 = vsel %vm2499, %v2484, %v2358
  %v2503 = vsel %vm2499, %v2486, %v2360
  %v2505 = vsel %vm2499, %v2488, %v2362
  %v2507 = vsel %vm2499, %v2490, %v2364
  %v2509 = vsel %vm2499, %v2492, %v2366
  %v2511 = vsel %vm2499, %v2494, %v2368
  %v2513 = vsel %vm2499, %v2496, %v2370
  %v2515 = vsel %vm2499, %v2498, %v2372
  %v2516 = vld [vmem:[%s1] sm:$0xf]
  %v2517 = vld [vmem:[%s1 + $0x4] sm:$0xf]
  %v2518 = vld [vmem:[%s1 + $0x8] sm:$0xf]
  %v2519 = vld [vmem:[%s1 + $0xc] sm:$0xf]
  %v2520 = vld [vmem:[%s1 + $0x10] sm:$0xf]
  %v2521 = vld [vmem:[%s1 + $0x14] sm:$0xf]
  %v2522 = vld [vmem:[%s1 + $0x18] sm:$0xf]
  %v2523 = vld [vmem:[%s1 + $0x1c] sm:$0xf]
  %v2524 = vld [vmem:[%s1 + $0x20] sm:$0xf]
  %v2525 = vld [vmem:[%s2] sm:$0x1]
  %v2526 = vlaneseq
  %v2527 = vshrl.u32 %v2526, 7
  %v2528 = vsub.s32 0, %v2527
  %v2529 = vrot.slane %v2525, %v2528
  %v2539 = vunpack.c.l.b16 %v2516
  %v2540 = vunpack.c.l.b16 %v2517
  %v2541 = vunpack.c.l.b16 %v2518
  %v2542 = vunpack.c.l.b16 %v2519
  %v2543 = vunpack.c.l.b16 %v2520
  %v2544 = vunpack.c.l.b16 %v2521
  %v2545 = vunpack.c.l.b16 %v2522
  %v2546 = vunpack.c.l.b16 %v2523
  %v2547 = vunpack.c.l.b16 %v2524
  %v2548 = vpack.c.b16 %v2540, %v2539
  %v2549 = vpack.c.b16 %v2542, %v2541
  %v2550 = vpack.c.b16 %v2544, %v2543
  %v2551 = vpack.c.b16 %v2546, %v2545
  %v2552 = vpack.c.b16 %v2547, %v2547
  %vm2557 = vcmask 588800
  %v2558 = vsel %vm2557, %v2501, 0
  %v2560 = vsel %vm2557, %v2503, 0
  %v2562 = vsel %vm2557, %v2505, 0
  %v2564 = vsel %vm2557, %v2507, 0
  %v2566 = vsel %vm2557, %v2509, 0
  %v2568 = vsel %vm2557, %v2511, 0
  %v2570 = vsel %vm2557, %v2513, 0
  %v2572 = vsel %vm2557, %v2515, 0
  %vm2574 = vcmask 1043456
  %v2576 = vsel %vm2574, %v2552, 0
  %2578 = vmatprep.subr.bf16.mxu0 0
  %2579 = vmatpush1.bf16.msra.mxu0 %v2548
  %2580 = vmatprep.subr.bf16.mxu0 0
  %2581 = vmatpush1.bf16.msra.mxu0 %v2549
  %2582 = vmatprep.subr.bf16.mxu0 0
  %2583 = vmatpush1.bf16.msra.mxu0 %v2550
  %2584 = vmatprep.subr.bf16.mxu0 0
  %2585 = vmatpush1.bf16.msra.mxu0 %v2551
  %2586 = vmatprep.subr.bf16.mxu0 0
  %2587 = vmatpush1.bf16.msra.mxu0 %v2576
  %2588 = vmatprep.subr.bf16.mxu0 0
  %2589 = vmatpush1.bf16.msra.mxu0 0
  %2590 = vmatprep.subr.bf16.mxu0 0
  %2591 = vmatpush1.bf16.msra.mxu0 0
  %2592 = vmatprep.subr.bf16.mxu0 0
  %2593 = vmatpush1.bf16.msra.mxu0 0
  %2594 = vmatprep.subr.bf16.mxu0 0
  %2595 = vmatpush1.bf16.msra.mxu0 0
  %2596 = vmatprep.subr.bf16.mxu0 0
  %2597 = vmatpush1.bf16.msra.mxu0 0
  %2598 = vmatprep.subr.bf16.mxu0 0
  %2599 = vmatpush1.bf16.msra.mxu0 0
  %2600 = vmatprep.subr.bf16.mxu0 0
  %2601 = vmatpush1.bf16.msra.mxu0 0
  %2602 = vmatprep.subr.bf16.mxu0 0
  %2603 = vmatpush1.bf16.msra.mxu0 0
  %2604 = vmatprep.subr.bf16.mxu0 0
  %2605 = vmatpush1.bf16.msra.mxu0 0
  %2606 = vmatprep.subr.bf16.mxu0 0
  %2607 = vmatpush1.bf16.msra.mxu0 0
  %2608 = vmatprep.subr.bf16.mxu0 0
  %2609 = vmatpush1.bf16.msra.mxu0 0
  %2610 = vmatprep.mubr.bf16.mxu0 0
  %2611 = vmatmul.mubr.bf16.gmra.mrb[0].mxu0 %v2558
  %v2612 = vpop.f32.mrb[0].mxu0
  %v2613 = vadd.f32 %v2529, %v2612
  %v2614 = vpop.f32.mrb[0].mxu0
  %v2615 = vpop.f32.mrb[0].mxu0
  %v2616 = vadd.f32 %v2529, %v2615
  %v2617 = vpop.f32.mrb[0].mxu0
  %2618 = vmatprep.mubr.bf16.mxu0 0
  %2619 = vmatmul.mubr.bf16.gmra.mrb[0].mxu0 %v2560
  %v2620 = vpop.f32.mrb[0].mxu0
  %v2621 = vadd.f32 %v2529, %v2620
  %v2622 = vpop.f32.mrb[0].mxu0
  %v2623 = vpop.f32.mrb[0].mxu0
  %v2624 = vadd.f32 %v2529, %v2623
  %v2625 = vpop.f32.mrb[0].mxu0
  %2626 = vmatprep.mubr.bf16.mxu0 0
  %2627 = vmatmul.mubr.bf16.gmra.mrb[0].mxu0 %v2562
  %v2628 = vpop.f32.mrb[0].mxu0
  %v2629 = vadd.f32 %v2529, %v2628
  %v2630 = vpop.f32.mrb[0].mxu0
  %v2631 = vpop.f32.mrb[0].mxu0
  %v2632 = vadd.f32 %v2529, %v2631
  %v2633 = vpop.f32.mrb[0].mxu0
  %2634 = vmatprep.mubr.bf16.mxu0 0
  %2635 = vmatmul.mubr.bf16.gmra.mrb[0].mxu0 %v2564
  %v2636 = vpop.f32.mrb[0].mxu0
  %v2637 = vadd.f32 %v2529, %v2636
  %v2638 = vpop.f32.mrb[0].mxu0
  %v2639 = vpop.f32.mrb[0].mxu0
  %v2640 = vadd.f32 %v2529, %v2639
  %v2641 = vpop.f32.mrb[0].mxu0
  %2642 = vmatprep.mubr.bf16.mxu0 0
  %2643 = vmatmul.mubr.bf16.gmra.mrb[0].mxu0 %v2566
  %v2644 = vpop.f32.mrb[0].mxu0
  %v2645 = vadd.f32 %v2529, %v2644
  %v2646 = vpop.f32.mrb[0].mxu0
  %v2647 = vpop.f32.mrb[0].mxu0
  %v2648 = vadd.f32 %v2529, %v2647
  %v2649 = vpop.f32.mrb[0].mxu0
  %2650 = vmatprep.mubr.bf16.mxu0 0
  %2651 = vmatmul.mubr.bf16.gmra.mrb[0].mxu0 %v2568
  %v2652 = vpop.f32.mrb[0].mxu0
  %v2653 = vadd.f32 %v2529, %v2652
  %v2654 = vpop.f32.mrb[0].mxu0
  %v2655 = vpop.f32.mrb[0].mxu0
  %v2656 = vadd.f32 %v2529, %v2655
  %v2657 = vpop.f32.mrb[0].mxu0
  %2658 = vmatprep.mubr.bf16.mxu0 0
  %2659 = vmatmul.mubr.bf16.gmra.mrb[0].mxu0 %v2570
  %v2660 = vpop.f32.mrb[0].mxu0
  %v2661 = vadd.f32 %v2529, %v2660
  %v2662 = vpop.f32.mrb[0].mxu0
  %v2663 = vpop.f32.mrb[0].mxu0
  %v2664 = vadd.f32 %v2529, %v2663
  %v2665 = vpop.f32.mrb[0].mxu0
  %2666 = vmatprep.mubr.bf16.mxu0 0
  %2667 = vmatmul.mubr.bf16.gmra.mrb[0].mxu0 %v2572
  %v2668 = vpop.f32.mrb[0].mxu0
  %v2669 = vadd.f32 %v2529, %v2668
  %v2670 = vpop.f32.mrb[0].mxu0
  %v2671 = vpop.f32.mrb[0].mxu0
  %v2672 = vadd.f32 %v2529, %v2671
  %v2673 = vpop.f32.mrb[0].mxu0
  %2674 = vdwg.mxu0
  %v2675 = vadd.f32 %v2613, %v2616
  %v2676 = vadd.f32 %v2675, %v2621
  %v2677 = vadd.f32 %v2676, %v2624
  %v2678 = vadd.f32 %v2677, %v2629
  %v2679 = vadd.f32 %v2678, %v2632
  %v2680 = vadd.f32 %v2679, %v2637
  %v2681 = vadd.f32 %v2680, %v2640
  %v2682 = vadd.f32 %v2681, %v2645
  %v2683 = vadd.f32 %v2682, %v2648
  %v2684 = vadd.f32 %v2683, %v2653
  %v2685 = vadd.f32 %v2684, %v2656
  %v2686 = vadd.f32 %v2685, %v2661
  %v2687 = vadd.f32 %v2686, %v2664
  %v2688 = vadd.f32 %v2687, %v2669
  %v2689 = vadd.f32 %v2688, %v2672
  %v2690 = vrot.slane %v2689, 4
  %v2691 = vadd.f32 %v2689, %v2690
  %v2692 = vrot.slane %v2691, 2
  %v2693 = vadd.f32 %v2691, %v2692
  %v2694 = vrot.slane %v2693, 1
  %v2695 = vadd.f32 %v2693, %v2694
  %v2696 = vrcp.pop 128.0
  %v2697 = vmul.f32 %v2695, %v2696
  %v2698 = vsub.f32 %v2613, %v2697
  %v2699 = vsub.f32 %v2616, %v2697
  %v2700 = vsub.f32 %v2621, %v2697
  %v2701 = vsub.f32 %v2624, %v2697
  %v2702 = vsub.f32 %v2629, %v2697
  %v2703 = vsub.f32 %v2632, %v2697
  %v2704 = vsub.f32 %v2637, %v2697
  %v2705 = vsub.f32 %v2640, %v2697
  %v2706 = vsub.f32 %v2645, %v2697
  %v2707 = vsub.f32 %v2648, %v2697
  %v2708 = vsub.f32 %v2653, %v2697
  %v2709 = vsub.f32 %v2656, %v2697
  %v2710 = vsub.f32 %v2661, %v2697
  %v2711 = vsub.f32 %v2664, %v2697
  %v2712 = vsub.f32 %v2669, %v2697
  %v2713 = vsub.f32 %v2672, %v2697
  %v2714 = vmul.f32 %v2698, %v2698
  %v2715 = vmul.f32 %v2699, %v2699
  %v2716 = vmul.f32 %v2700, %v2700
  %v2717 = vmul.f32 %v2701, %v2701
  %v2718 = vmul.f32 %v2702, %v2702
  %v2719 = vmul.f32 %v2703, %v2703
  %v2720 = vmul.f32 %v2704, %v2704
  %v2721 = vmul.f32 %v2705, %v2705
  %v2722 = vmul.f32 %v2706, %v2706
  %v2723 = vmul.f32 %v2707, %v2707
  %v2724 = vmul.f32 %v2708, %v2708
  %v2725 = vmul.f32 %v2709, %v2709
  %v2726 = vmul.f32 %v2710, %v2710
  %v2727 = vmul.f32 %v2711, %v2711
  %v2728 = vmul.f32 %v2712, %v2712
  %v2729 = vmul.f32 %v2713, %v2713
  %v2730 = vadd.f32 %v2714, %v2715
  %v2731 = vadd.f32 %v2730, %v2716
  %v2732 = vadd.f32 %v2731, %v2717
  %v2733 = vadd.f32 %v2732, %v2718
  %v2734 = vadd.f32 %v2733, %v2719
  %v2735 = vadd.f32 %v2734, %v2720
  %v2736 = vadd.f32 %v2735, %v2721
  %v2737 = vadd.f32 %v2736, %v2722
  %v2738 = vadd.f32 %v2737, %v2723
  %v2739 = vadd.f32 %v2738, %v2724
  %v2740 = vadd.f32 %v2739, %v2725
  %v2741 = vadd.f32 %v2740, %v2726
  %v2742 = vadd.f32 %v2741, %v2727
  %v2743 = vadd.f32 %v2742, %v2728
  %v2744 = vadd.f32 %v2743, %v2729
  %v2745 = vrot.slane %v2744, 4
  %v2746 = vadd.f32 %v2744, %v2745
  %v2747 = vrot.slane %v2746, 2
  %v2748 = vadd.f32 %v2746, %v2747
  %v2749 = vrot.slane %v2748, 1
  %v2750 = vadd.f32 %v2748, %v2749
  %v2751 = vmul.f32 %v2750, %v2696
  %v2752 = vadd.f32 %v2751, 1e-05
  %v2753 = vrsqrt.pop %v2752
  %v2754 = vmul.f32 %v2698, %v2753
  %v2755 = vmul.f32 %v2699, %v2753
  %v2756 = vmul.f32 %v2700, %v2753
  %v2757 = vmul.f32 %v2701, %v2753
  %v2758 = vmul.f32 %v2702, %v2753
  %v2759 = vmul.f32 %v2703, %v2753
  %v2760 = vmul.f32 %v2704, %v2753
  %v2761 = vmul.f32 %v2705, %v2753
  %v2762 = vmul.f32 %v2706, %v2753
  %v2763 = vmul.f32 %v2707, %v2753
  %v2764 = vmul.f32 %v2708, %v2753
  %v2765 = vmul.f32 %v2709, %v2753
  %v2766 = vmul.f32 %v2710, %v2753
  %v2767 = vmul.f32 %v2711, %v2753
  %v2768 = vmul.f32 %v2712, %v2753
  %v2769 = vmul.f32 %v2713, %v2753
  %v2770 = vld [vmem:[%s2 + $0x1] sm:$0x1]
  %v2771 = vlaneseq
  %v2772 = vshrl.u32 %v2771, 7
  %v2773 = vsub.s32 0, %v2772
  %v2774 = vrot.slane %v2770, %v2773
  %v2775 = vmul.f32 %v2754, %v2774
  %v2776 = vmul.f32 %v2755, %v2774
  %v2777 = vmul.f32 %v2756, %v2774
  %v2778 = vmul.f32 %v2757, %v2774
  %v2779 = vmul.f32 %v2758, %v2774
  %v2780 = vmul.f32 %v2759, %v2774
  %v2781 = vmul.f32 %v2760, %v2774
  %v2782 = vmul.f32 %v2761, %v2774
  %v2783 = vmul.f32 %v2762, %v2774
  %v2784 = vmul.f32 %v2763, %v2774
  %v2785 = vmul.f32 %v2764, %v2774
  %v2786 = vmul.f32 %v2765, %v2774
  %v2787 = vmul.f32 %v2766, %v2774
  %v2788 = vmul.f32 %v2767, %v2774
  %v2789 = vmul.f32 %v2768, %v2774
  %v2790 = vmul.f32 %v2769, %v2774
  %v2791 = vld [vmem:[%s2 + $0x2] sm:$0x1]
  %v2792 = vlaneseq
  %v2793 = vshrl.u32 %v2792, 7
  %v2794 = vsub.s32 0, %v2793
  %v2795 = vrot.slane %v2791, %v2794
  %v2796 = vadd.f32 %v2775, %v2795
  %v2797 = vadd.f32 %v2776, %v2795
  %v2798 = vadd.f32 %v2777, %v2795
  %v2799 = vadd.f32 %v2778, %v2795
  %v2800 = vadd.f32 %v2779, %v2795
  %v2801 = vadd.f32 %v2780, %v2795
  %v2802 = vadd.f32 %v2781, %v2795
  %v2803 = vadd.f32 %v2782, %v2795
  %v2804 = vadd.f32 %v2783, %v2795
  %v2805 = vadd.f32 %v2784, %v2795
  %v2806 = vadd.f32 %v2785, %v2795
  %v2807 = vadd.f32 %v2786, %v2795
  %v2808 = vadd.f32 %v2787, %v2795
  %v2809 = vadd.f32 %v2788, %v2795
  %v2810 = vadd.f32 %v2789, %v2795
  %v2811 = vadd.f32 %v2790, %v2795
  %v2812 = vmax.f32 %v2796, 0.0
  %v2813 = vmax.f32 %v2797, 0.0
  %v2814 = vmax.f32 %v2798, 0.0
  %v2815 = vmax.f32 %v2799, 0.0
  %v2816 = vmax.f32 %v2800, 0.0
  %v2817 = vmax.f32 %v2801, 0.0
  %v2818 = vmax.f32 %v2802, 0.0
  %v2819 = vmax.f32 %v2803, 0.0
  %v2820 = vmax.f32 %v2804, 0.0
  %v2821 = vmax.f32 %v2805, 0.0
  %v2822 = vmax.f32 %v2806, 0.0
  %v2823 = vmax.f32 %v2807, 0.0
  %v2824 = vmax.f32 %v2808, 0.0
  %v2825 = vmax.f32 %v2809, 0.0
  %v2826 = vmax.f32 %v2810, 0.0
  %v2827 = vmax.f32 %v2811, 0.0
  %v2828 = vpack.c.bf16 %v2813, %v2812
  %v2829 = vpack.c.bf16 %v2815, %v2814
  %v2830 = vpack.c.bf16 %v2817, %v2816
  %v2831 = vpack.c.bf16 %v2819, %v2818
  %v2832 = vpack.c.bf16 %v2821, %v2820
  %v2833 = vpack.c.bf16 %v2823, %v2822
  %v2834 = vpack.c.bf16 %v2825, %v2824
  %v2835 = vpack.c.bf16 %v2827, %v2826
  %v2844 = vunpack.c.l.b16 %v2828
  %v2845 = vunpack.c.h.b16 %v2828
  %v2846 = vunpack.c.l.b16 %v2829
  %v2847 = vunpack.c.h.b16 %v2829
  %v2848 = vunpack.c.l.b16 %v2830
  %v2849 = vunpack.c.h.b16 %v2830
  %v2850 = vunpack.c.l.b16 %v2831
  %v2851 = vunpack.c.h.b16 %v2831
  %v2852 = vunpack.c.l.b16 %v2832
  %v2853 = vunpack.c.h.b16 %v2832
  %v2854 = vunpack.c.l.b16 %v2833
  %v2855 = vunpack.c.h.b16 %v2833
  %v2856 = vunpack.c.l.b16 %v2834
  %v2857 = vunpack.c.h.b16 %v2834
  %v2858 = vunpack.c.l.b16 %v2835
  %v2859 = vunpack.c.h.b16 %v2835
  %2860 = vst.msk [vmem:[#allocation2] sm:$0xff] %vm150, 0
  %2861 = vst.msk [vmem:[#allocation2 + $0x50] sm:$0xff] %vm150, 0
  %2862 = vst.msk [vmem:[%s153] sm:$0xff] %vm150, 0
  %2863 = vst.msk [vmem:[%s153 + $0x50] sm:$0xff] %vm150, 0
  %v2864 = vld [vmem:[%s156] sm:$0x1]
  %v2865 = vsel %vm159, 0, %v2864
  %2866 = vst [vmem:[%s156] sm:$0x1] %v2865
  %v2867 = vld [vmem:[%s156 + $0x8] sm:$0x1]
  %v2868 = vsel %vm159, 0, %v2867
  %2869 = vst [vmem:[%s156 + $0x8] sm:$0x1] %v2868
  %v2870 = vld [vmem:[%s156 + $0x10] sm:$0x1]
  %v2871 = vsel %vm159, 0, %v2870
  %2872 = vst [vmem:[%s156 + $0x10] sm:$0x1] %v2871
  %v2873 = vld [vmem:[%s156 + $0x18] sm:$0x1]
  %v2874 = vsel %vm159, 0, %v2873
  %2875 = vst [vmem:[%s156 + $0x18] sm:$0x1] %v2874
  %v2876 = vld [vmem:[%s156 + $0x20] sm:$0x1]
  %v2877 = vsel %vm159, 0, %v2876
  %2878 = vst [vmem:[%s156 + $0x20] sm:$0x1] %v2877
  %v2879 = vld [vmem:[%s156 + $0x28] sm:$0x1]
  %v2880 = vsel %vm159, 0, %v2879
  %2881 = vst [vmem:[%s156 + $0x28] sm:$0x1] %v2880
  %v2882 = vld [vmem:[%s156 + $0x30] sm:$0x1]
  %v2883 = vsel %vm159, 0, %v2882
  %2884 = vst [vmem:[%s156 + $0x30] sm:$0x1] %v2883
  %v2885 = vld [vmem:[%s156 + $0x38] sm:$0x1]
  %v2886 = vsel %vm159, 0, %v2885
  %2887 = vst [vmem:[%s156 + $0x38] sm:$0x1] %v2886
  %v2888 = vld [vmem:[%s156 + $0x50] sm:$0x1]
  %v2889 = vsel %vm159, 0, %v2888
  %2890 = vst [vmem:[%s156 + $0x50] sm:$0x1] %v2889
  %v2891 = vld [vmem:[%s156 + $0x58] sm:$0x1]
  %v2892 = vsel %vm159, 0, %v2891
  %2893 = vst [vmem:[%s156 + $0x58] sm:$0x1] %v2892
  %v2894 = vld [vmem:[%s156 + $0x60] sm:$0x1]
  %v2895 = vsel %vm159, 0, %v2894
  %2896 = vst [vmem:[%s156 + $0x60] sm:$0x1] %v2895
  %v2897 = vld [vmem:[%s156 + $0x68] sm:$0x1]
  %v2898 = vsel %vm159, 0, %v2897
  %2899 = vst [vmem:[%s156 + $0x68] sm:$0x1] %v2898
  %v2900 = vld [vmem:[%s156 + $0x70] sm:$0x1]
  %v2901 = vsel %vm159, 0, %v2900
  %2902 = vst [vmem:[%s156 + $0x70] sm:$0x1] %v2901
  %v2903 = vld [vmem:[%s156 + $0x78] sm:$0x1]
  %v2904 = vsel %vm159, 0, %v2903
  %2905 = vst [vmem:[%s156 + $0x78] sm:$0x1] %v2904
  %v2906 = vld [vmem:[%s156 + $0x80] sm:$0x1]
  %v2907 = vsel %vm159, 0, %v2906
  %2908 = vst [vmem:[%s156 + $0x80] sm:$0x1] %v2907
  %v2909 = vld [vmem:[%s156 + $0x88] sm:$0x1]
  %v2910 = vsel %vm159, 0, %v2909
  %2911 = vst [vmem:[%s156 + $0x88] sm:$0x1] %v2910
  %v2912 = vld [vmem:[%s156] sm:$0x10]
  %v2913 = vsel %vm210, 0, %v2912
  %2914 = vst [vmem:[%s156] sm:$0x10] %v2913
  %v2915 = vld [vmem:[%s156 + $0x8] sm:$0x10]
  %v2916 = vsel %vm210, 0, %v2915
  %2917 = vst [vmem:[%s156 + $0x8] sm:$0x10] %v2916
  %v2918 = vld [vmem:[%s156 + $0x10] sm:$0x10]
  %v2919 = vsel %vm210, 0, %v2918
  %2920 = vst [vmem:[%s156 + $0x10] sm:$0x10] %v2919
  %v2921 = vld [vmem:[%s156 + $0x18] sm:$0x10]
  %v2922 = vsel %vm210, 0, %v2921
  %2923 = vst [vmem:[%s156 + $0x18] sm:$0x10] %v2922
  %v2924 = vld [vmem:[%s156 + $0x20] sm:$0x10]
  %v2925 = vsel %vm210, 0, %v2924
  %2926 = vst [vmem:[%s156 + $0x20] sm:$0x10] %v2925
  %v2927 = vld [vmem:[%s156 + $0x28] sm:$0x10]
  %v2928 = vsel %vm210, 0, %v2927
  %2929 = vst [vmem:[%s156 + $0x28] sm:$0x10] %v2928
  %v2930 = vld [vmem:[%s156 + $0x30] sm:$0x10]
  %v2931 = vsel %vm210, 0, %v2930
  %2932 = vst [vmem:[%s156 + $0x30] sm:$0x10] %v2931
  %v2933 = vld [vmem:[%s156 + $0x38] sm:$0x10]
  %v2934 = vsel %vm210, 0, %v2933
  %2935 = vst [vmem:[%s156 + $0x38] sm:$0x10] %v2934
  %v2936 = vld [vmem:[%s156 + $0x50] sm:$0x10]
  %v2937 = vsel %vm210, 0, %v2936
  %2938 = vst [vmem:[%s156 + $0x50] sm:$0x10] %v2937
  %v2939 = vld [vmem:[%s156 + $0x58] sm:$0x10]
  %v2940 = vsel %vm210, 0, %v2939
  %2941 = vst [vmem:[%s156 + $0x58] sm:$0x10] %v2940
  %v2942 = vld [vmem:[%s156 + $0x60] sm:$0x10]
  %v2943 = vsel %vm210, 0, %v2942
  %2944 = vst [vmem:[%s156 + $0x60] sm:$0x10] %v2943
  %v2945 = vld [vmem:[%s156 + $0x68] sm:$0x10]
  %v2946 = vsel %vm210, 0, %v2945
  %2947 = vst [vmem:[%s156 + $0x68] sm:$0x10] %v2946
  %v2948 = vld [vmem:[%s156 + $0x70] sm:$0x10]
  %v2949 = vsel %vm210, 0, %v2948
  %2950 = vst [vmem:[%s156 + $0x70] sm:$0x10] %v2949
  %v2951 = vld [vmem:[%s156 + $0x78] sm:$0x10]
  %v2952 = vsel %vm210, 0, %v2951
  %2953 = vst [vmem:[%s156 + $0x78] sm:$0x10] %v2952
  %v2954 = vld [vmem:[%s156 + $0x80] sm:$0x10]
  %v2955 = vsel %vm210, 0, %v2954
  %2956 = vst [vmem:[%s156 + $0x80] sm:$0x10] %v2955
  %v2957 = vld [vmem:[%s156 + $0x88] sm:$0x10]
  %v2958 = vsel %vm210, 0, %v2957
  %2959 = vst [vmem:[%s156 + $0x88] sm:$0x10] %v2958
  %v2960 = vpack.c.b16 %v2844, %v2844
  %v2961 = vpack.c.b16 %v2845, %v2845
  %v2962 = vpack.c.b16 %v2846, %v2846
  %v2963 = vpack.c.b16 %v2847, %v2847
  %v2964 = vpack.c.b16 %v2848, %v2848
  %v2965 = vpack.c.b16 %v2849, %v2849
  %v2966 = vpack.c.b16 %v2850, %v2850
  %v2967 = vpack.c.b16 %v2851, %v2851
  %v2968 = vpack.c.b16 %v2852, %v2852
  %v2969 = vpack.c.b16 %v2853, %v2853
  %v2970 = vpack.c.b16 %v2854, %v2854
  %v2971 = vpack.c.b16 %v2855, %v2855
  %v2972 = vpack.c.b16 %v2856, %v2856
  %v2973 = vpack.c.b16 %v2857, %v2857
  %v2974 = vpack.c.b16 %v2858, %v2858
  %v2975 = vpack.c.b16 %v2859, %v2859
  %v2977 = vshrl.u32 %v2960, 16
  %v2979 = vrot.slane %v2977, 7
  %v2980 = vshll.u32 %v2960, 16
  %v2982 = vor.u32 %v2979, %v2980
  %v2984 = vshrl.u32 %v2961, 16
  %v2986 = vrot.slane %v2984, 7
  %v2987 = vshll.u32 %v2961, 16
  %v2989 = vor.u32 %v2986, %v2987
  %v2991 = vshrl.u32 %v2962, 16
  %v2993 = vrot.slane %v2991, 7
  %v2994 = vshll.u32 %v2962, 16
  %v2996 = vor.u32 %v2993, %v2994
  %v2998 = vshrl.u32 %v2963, 16
  %v3000 = vrot.slane %v2998, 7
  %v3001 = vshll.u32 %v2963, 16
  %v3003 = vor.u32 %v3000, %v3001
  %v3005 = vshrl.u32 %v2964, 16
  %v3007 = vrot.slane %v3005, 7
  %v3008 = vshll.u32 %v2964, 16
  %v3010 = vor.u32 %v3007, %v3008
  %v3012 = vshrl.u32 %v2965, 16
  %v3014 = vrot.slane %v3012, 7
  %v3015 = vshll.u32 %v2965, 16
  %v3017 = vor.u32 %v3014, %v3015
  %v3019 = vshrl.u32 %v2966, 16
  %v3021 = vrot.slane %v3019, 7
  %v3022 = vshll.u32 %v2966, 16
  %v3024 = vor.u32 %v3021, %v3022
  %v3026 = vshrl.u32 %v2967, 16
  %v3028 = vrot.slane %v3026, 7
  %v3029 = vshll.u32 %v2967, 16
  %v3031 = vor.u32 %v3028, %v3029
  %v3033 = vshrl.u32 %v2968, 16
  %v3035 = vrot.slane %v3033, 7
  %v3036 = vshll.u32 %v2968, 16
  %v3038 = vor.u32 %v3035, %v3036
  %v3040 = vshrl.u32 %v2969, 16
  %v3042 = vrot.slane %v3040, 7
  %v3043 = vshll.u32 %v2969, 16
  %v3045 = vor.u32 %v3042, %v3043
  %v3047 = vshrl.u32 %v2970, 16
  %v3049 = vrot.slane %v3047, 7
  %v3050 = vshll.u32 %v2970, 16
  %v3052 = vor.u32 %v3049, %v3050
  %v3054 = vshrl.u32 %v2971, 16
  %v3056 = vrot.slane %v3054, 7
  %v3057 = vshll.u32 %v2971, 16
  %v3059 = vor.u32 %v3056, %v3057
  %v3061 = vshrl.u32 %v2972, 16
  %v3063 = vrot.slane %v3061, 7
  %v3064 = vshll.u32 %v2972, 16
  %v3066 = vor.u32 %v3063, %v3064
  %v3068 = vshrl.u32 %v2973, 16
  %v3070 = vrot.slane %v3068, 7
  %v3071 = vshll.u32 %v2973, 16
  %v3073 = vor.u32 %v3070, %v3071
  %v3075 = vshrl.u32 %v2974, 16
  %v3077 = vrot.slane %v3075, 7
  %v3078 = vshll.u32 %v2974, 16
  %v3080 = vor.u32 %v3077, %v3078
  %v3082 = vshrl.u32 %v2975, 16
  %v3084 = vrot.slane %v3082, 7
  %v3085 = vshll.u32 %v2975, 16
  %v3087 = vor.u32 %v3084, %v3085
  %v3104 = vld [vmem:[%s156] sm:$0x1f]
  %v3105 = vsel %vm437, %v2982, %v3104
  %3106 = vst [vmem:[%s156] sm:$0x1f] %v3105
  %v3107 = vld [vmem:[%s156 + $0x8] sm:$0x1f]
  %v3108 = vsel %vm437, %v2989, %v3107
  %3109 = vst [vmem:[%s156 + $0x8] sm:$0x1f] %v3108
  %v3110 = vld [vmem:[%s156 + $0x10] sm:$0x1f]
  %v3111 = vsel %vm437, %v2996, %v3110
  %3112 = vst [vmem:[%s156 + $0x10] sm:$0x1f] %v3111
  %v3113 = vld [vmem:[%s156 + $0x18] sm:$0x1f]
  %v3114 = vsel %vm437, %v3003, %v3113
  %3115 = vst [vmem:[%s156 + $0x18] sm:$0x1f] %v3114
  %v3116 = vld [vmem:[%s156 + $0x20] sm:$0x1f]
  %v3117 = vsel %vm437, %v3010, %v3116
  %3118 = vst [vmem:[%s156 + $0x20] sm:$0x1f] %v3117
  %v3119 = vld [vmem:[%s156 + $0x28] sm:$0x1f]
  %v3120 = vsel %vm437, %v3017, %v3119
  %3121 = vst [vmem:[%s156 + $0x28] sm:$0x1f] %v3120
  %v3122 = vld [vmem:[%s156 + $0x30] sm:$0x1f]
  %v3123 = vsel %vm437, %v3024, %v3122
  %3124 = vst [vmem:[%s156 + $0x30] sm:$0x1f] %v3123
  %v3125 = vld [vmem:[%s156 + $0x38] sm:$0x1f]
  %v3126 = vsel %vm437, %v3031, %v3125
  %3127 = vst [vmem:[%s156 + $0x38] sm:$0x1f] %v3126
  %v3128 = vld [vmem:[%s156 + $0x50] sm:$0x1f]
  %v3129 = vsel %vm437, %v3038, %v3128
  %3130 = vst [vmem:[%s156 + $0x50] sm:$0x1f] %v3129
  %v3131 = vld [vmem:[%s156 + $0x58] sm:$0x1f]
  %v3132 = vsel %vm437, %v3045, %v3131
  %3133 = vst [vmem:[%s156 + $0x58] sm:$0x1f] %v3132
  %v3134 = vld [vmem:[%s156 + $0x60] sm:$0x1f]
  %v3135 = vsel %vm437, %v3052, %v3134
  %3136 = vst [vmem:[%s156 + $0x60] sm:$0x1f] %v3135
  %v3137 = vld [vmem:[%s156 + $0x68] sm:$0x1f]
  %v3138 = vsel %vm437, %v3059, %v3137
  %3139 = vst [vmem:[%s156 + $0x68] sm:$0x1f] %v3138
  %v3140 = vld [vmem:[%s156 + $0x70] sm:$0x1f]
  %v3141 = vsel %vm437, %v3066, %v3140
  %3142 = vst [vmem:[%s156 + $0x70] sm:$0x1f] %v3141
  %v3143 = vld [vmem:[%s156 + $0x78] sm:$0x1f]
  %v3144 = vsel %vm437, %v3073, %v3143
  %3145 = vst [vmem:[%s156 + $0x78] sm:$0x1f] %v3144
  %v3146 = vld [vmem:[%s156 + $0x80] sm:$0x1f]
  %v3147 = vsel %vm437, %v3080, %v3146
  %3148 = vst [vmem:[%s156 + $0x80] sm:$0x1f] %v3147
  %v3149 = vld [vmem:[%s156 + $0x88] sm:$0x1f]
  %v3150 = vsel %vm437, %v3087, %v3149
  %3151 = vst [vmem:[%s156 + $0x88] sm:$0x1f] %v3150
  %v3152 = vld [vmem:[#allocation2] sm:$0xf]
  %v3153 = vld [vmem:[#allocation2 + $0x8] sm:$0xf]
  %v3154 = vld [vmem:[#allocation2 + $0x10] sm:$0xf]
  %v3155 = vld [vmem:[#allocation2 + $0x18] sm:$0xf]
  %v3156 = vld [vmem:[#allocation2 + $0x20] sm:$0xf]
  %v3157 = vld [vmem:[#allocation2 + $0x28] sm:$0xf]
  %v3158 = vld [vmem:[#allocation2 + $0x30] sm:$0xf]
  %v3159 = vld [vmem:[#allocation2 + $0x38] sm:$0xf]
  %v3160 = vld [vmem:[#allocation2 + $0x50] sm:$0xf]
  %v3161 = vld [vmem:[#allocation2 + $0x58] sm:$0xf]
  %v3162 = vld [vmem:[#allocation2 + $0x60] sm:$0xf]
  %v3163 = vld [vmem:[#allocation2 + $0x68] sm:$0xf]
  %v3164 = vld [vmem:[#allocation2 + $0x70] sm:$0xf]
  %v3165 = vld [vmem:[#allocation2 + $0x78] sm:$0xf]
  %v3166 = vld [vmem:[#allocation2 + $0x80] sm:$0xf]
  %v3167 = vld [vmem:[#allocation2 + $0x88] sm:$0xf]
  %v3168 = vld [vmem:[#allocation2] sm:$0x1f]
  %v3169 = vld [vmem:[#allocation2 + $0x8] sm:$0x1f]
  %v3170 = vld [vmem:[#allocation2 + $0x10] sm:$0x1f]
  %v3171 = vld [vmem:[#allocation2 + $0x18] sm:$0x1f]
  %v3172 = vld [vmem:[#allocation2 + $0x20] sm:$0x1f]
  %v3173 = vld [vmem:[#allocation2 + $0x28] sm:$0x1f]
  %v3174 = vld [vmem:[#allocation2 + $0x30] sm:$0x1f]
  %v3175 = vld [vmem:[#allocation2 + $0x38] sm:$0x1f]
  %v3176 = vld [vmem:[#allocation2 + $0x50] sm:$0x1f]
  %v3177 = vld [vmem:[#allocation2 + $0x58] sm:$0x1f]
  %v3178 = vld [vmem:[#allocation2 + $0x60] sm:$0x1f]
  %v3179 = vld [vmem:[#allocation2 + $0x68] sm:$0x1f]
  %v3180 = vld [vmem:[#allocation2 + $0x70] sm:$0x1f]
  %v3181 = vld [vmem:[#allocation2 + $0x78] sm:$0x1f]
  %v3182 = vld [vmem:[#allocation2 + $0x80] sm:$0x1f]
  %v3183 = vld [vmem:[#allocation2 + $0x88] sm:$0x1f]
  %v3200 = vunpack.c.l.b16 %v3168
  %v3201 = vunpack.c.h.b16 %v3168
  %v3202 = vunpack.c.l.b16 %v3169
  %v3203 = vunpack.c.h.b16 %v3169
  %v3204 = vunpack.c.l.b16 %v3170
  %v3205 = vunpack.c.h.b16 %v3170
  %v3206 = vunpack.c.l.b16 %v3171
  %v3207 = vunpack.c.h.b16 %v3171
  %v3208 = vunpack.c.l.b16 %v3172
  %v3209 = vunpack.c.h.b16 %v3172
  %v3210 = vunpack.c.l.b16 %v3173
  %v3211 = vunpack.c.h.b16 %v3173
  %v3212 = vunpack.c.l.b16 %v3174
  %v3213 = vunpack.c.h.b16 %v3174
  %v3214 = vunpack.c.l.b16 %v3175
  %v3215 = vunpack.c.h.b16 %v3175
  %v3216 = vunpack.c.l.b16 %v3176
  %v3217 = vunpack.c.h.b16 %v3176
  %v3218 = vunpack.c.l.b16 %v3177
  %v3219 = vunpack.c.h.b16 %v3177
  %v3220 = vunpack.c.l.b16 %v3178
  %v3221 = vunpack.c.h.b16 %v3178
  %v3222 = vunpack.c.l.b16 %v3179
  %v3223 = vunpack.c.h.b16 %v3179
  %v3224 = vunpack.c.l.b16 %v3180
  %v3225 = vunpack.c.h.b16 %v3180
  %v3226 = vunpack.c.l.b16 %v3181
  %v3227 = vunpack.c.h.b16 %v3181
  %v3228 = vunpack.c.l.b16 %v3182
  %v3229 = vunpack.c.h.b16 %v3182
  %v3230 = vunpack.c.l.b16 %v3183
  %v3231 = vunpack.c.h.b16 %v3183
  %v3232 = vpack.c.b16 %v3200, %v3200
  %v3233 = vpack.c.b16 %v3201, %v3201
  %v3234 = vpack.c.b16 %v3202, %v3202
  %v3235 = vpack.c.b16 %v3203, %v3203
  %v3236 = vpack.c.b16 %v3204, %v3204
  %v3237 = vpack.c.b16 %v3205, %v3205
  %v3238 = vpack.c.b16 %v3206, %v3206
  %v3239 = vpack.c.b16 %v3207, %v3207
  %v3240 = vpack.c.b16 %v3208, %v3208
  %v3241 = vpack.c.b16 %v3209, %v3209
  %v3242 = vpack.c.b16 %v3210, %v3210
  %v3243 = vpack.c.b16 %v3211, %v3211
  %v3244 = vpack.c.b16 %v3212, %v3212
  %v3245 = vpack.c.b16 %v3213, %v3213
  %v3246 = vpack.c.b16 %v3214, %v3214
  %v3247 = vpack.c.b16 %v3215, %v3215
  %v3248 = vpack.c.b16 %v3216, %v3216
  %v3249 = vpack.c.b16 %v3217, %v3217
  %v3250 = vpack.c.b16 %v3218, %v3218
  %v3251 = vpack.c.b16 %v3219, %v3219
  %v3252 = vpack.c.b16 %v3220, %v3220
  %v3253 = vpack.c.b16 %v3221, %v3221
  %v3254 = vpack.c.b16 %v3222, %v3222
  %v3255 = vpack.c.b16 %v3223, %v3223
  %v3256 = vpack.c.b16 %v3224, %v3224
  %v3257 = vpack.c.b16 %v3225, %v3225
  %v3258 = vpack.c.b16 %v3226, %v3226
  %v3259 = vpack.c.b16 %v3227, %v3227
  %v3260 = vpack.c.b16 %v3228, %v3228
  %v3261 = vpack.c.b16 %v3229, %v3229
  %v3262 = vpack.c.b16 %v3230, %v3230
  %v3263 = vpack.c.b16 %v3231, %v3231
  %v3265 = vshrl.u32 %v3232, 16
  %v3267 = vrot.slane %v3265, 4
  %v3268 = vshll.u32 %v3232, 16
  %v3270 = vrot.slane %v3268, 5
  %v3271 = vor.u32 %v3267, %v3270
  %v3272 = vrot.slane %v3271, 4
  %v3274 = vshll.u32 %v3233, 16
  %v3276 = vrot.slane %v3274, 5
  %v3277 = vsel %vm600, %v3272, %v3276
  %v3279 = vshrl.u32 %v3234, 16
  %v3281 = vrot.slane %v3279, 4
  %v3282 = vshll.u32 %v3234, 16
  %v3284 = vrot.slane %v3282, 5
  %v3285 = vor.u32 %v3281, %v3284
  %v3286 = vrot.slane %v3285, 4
  %v3288 = vshll.u32 %v3235, 16
  %v3290 = vrot.slane %v3288, 5
  %v3291 = vsel %vm600, %v3286, %v3290
  %v3293 = vshrl.u32 %v3236, 16
  %v3295 = vrot.slane %v3293, 4
  %v3296 = vshll.u32 %v3236, 16
  %v3298 = vrot.slane %v3296, 5
  %v3299 = vor.u32 %v3295, %v3298
  %v3300 = vrot.slane %v3299, 4
  %v3302 = vshll.u32 %v3237, 16
  %v3304 = vrot.slane %v3302, 5
  %v3305 = vsel %vm600, %v3300, %v3304
  %v3307 = vshrl.u32 %v3238, 16
  %v3309 = vrot.slane %v3307, 4
  %v3310 = vshll.u32 %v3238, 16
  %v3312 = vrot.slane %v3310, 5
  %v3313 = vor.u32 %v3309, %v3312
  %v3314 = vrot.slane %v3313, 4
  %v3316 = vshll.u32 %v3239, 16
  %v3318 = vrot.slane %v3316, 5
  %v3319 = vsel %vm600, %v3314, %v3318
  %v3321 = vshrl.u32 %v3240, 16
  %v3323 = vrot.slane %v3321, 4
  %v3324 = vshll.u32 %v3240, 16
  %v3326 = vrot.slane %v3324, 5
  %v3327 = vor.u32 %v3323, %v3326
  %v3328 = vrot.slane %v3327, 4
  %v3330 = vshll.u32 %v3241, 16
  %v3332 = vrot.slane %v3330, 5
  %v3333 = vsel %vm600, %v3328, %v3332
  %v3335 = vshrl.u32 %v3242, 16
  %v3337 = vrot.slane %v3335, 4
  %v3338 = vshll.u32 %v3242, 16
  %v3340 = vrot.slane %v3338, 5
  %v3341 = vor.u32 %v3337, %v3340
  %v3342 = vrot.slane %v3341, 4
  %v3344 = vshll.u32 %v3243, 16
  %v3346 = vrot.slane %v3344, 5
  %v3347 = vsel %vm600, %v3342, %v3346
  %v3349 = vshrl.u32 %v3244, 16
  %v3351 = vrot.slane %v3349, 4
  %v3352 = vshll.u32 %v3244, 16
  %v3354 = vrot.slane %v3352, 5
  %v3355 = vor.u32 %v3351, %v3354
  %v3356 = vrot.slane %v3355, 4
  %v3358 = vshll.u32 %v3245, 16
  %v3360 = vrot.slane %v3358, 5
  %v3361 = vsel %vm600, %v3356, %v3360
  %v3363 = vshrl.u32 %v3246, 16
  %v3365 = vrot.slane %v3363, 4
  %v3366 = vshll.u32 %v3246, 16
  %v3368 = vrot.slane %v3366, 5
  %v3369 = vor.u32 %v3365, %v3368
  %v3370 = vrot.slane %v3369, 4
  %v3372 = vshll.u32 %v3247, 16
  %v3374 = vrot.slane %v3372, 5
  %v3375 = vsel %vm600, %v3370, %v3374
  %v3377 = vshrl.u32 %v3248, 16
  %v3379 = vrot.slane %v3377, 4
  %v3380 = vshll.u32 %v3248, 16
  %v3382 = vrot.slane %v3380, 5
  %v3383 = vor.u32 %v3379, %v3382
  %v3384 = vrot.slane %v3383, 4
  %v3386 = vshll.u32 %v3249, 16
  %v3388 = vrot.slane %v3386, 5
  %v3389 = vsel %vm600, %v3384, %v3388
  %v3391 = vshrl.u32 %v3250, 16
  %v3393 = vrot.slane %v3391, 4
  %v3394 = vshll.u32 %v3250, 16
  %v3396 = vrot.slane %v3394, 5
  %v3397 = vor.u32 %v3393, %v3396
  %v3398 = vrot.slane %v3397, 4
  %v3400 = vshll.u32 %v3251, 16
  %v3402 = vrot.slane %v3400, 5
  %v3403 = vsel %vm600, %v3398, %v3402
  %v3405 = vshrl.u32 %v3252, 16
  %v3407 = vrot.slane %v3405, 4
  %v3408 = vshll.u32 %v3252, 16
  %v3410 = vrot.slane %v3408, 5
  %v3411 = vor.u32 %v3407, %v3410
  %v3412 = vrot.slane %v3411, 4
  %v3414 = vshll.u32 %v3253, 16
  %v3416 = vrot.slane %v3414, 5
  %v3417 = vsel %vm600, %v3412, %v3416
  %v3419 = vshrl.u32 %v3254, 16
  %v3421 = vrot.slane %v3419, 4
  %v3422 = vshll.u32 %v3254, 16
  %v3424 = vrot.slane %v3422, 5
  %v3425 = vor.u32 %v3421, %v3424
  %v3426 = vrot.slane %v3425, 4
  %v3428 = vshll.u32 %v3255, 16
  %v3430 = vrot.slane %v3428, 5
  %v3431 = vsel %vm600, %v3426, %v3430
  %v3433 = vshrl.u32 %v3256, 16
  %v3435 = vrot.slane %v3433, 4
  %v3436 = vshll.u32 %v3256, 16
  %v3438 = vrot.slane %v3436, 5
  %v3439 = vor.u32 %v3435, %v3438
  %v3440 = vrot.slane %v3439, 4
  %v3442 = vshll.u32 %v3257, 16
  %v3444 = vrot.slane %v3442, 5
  %v3445 = vsel %vm600, %v3440, %v3444
  %v3447 = vshrl.u32 %v3258, 16
  %v3449 = vrot.slane %v3447, 4
  %v3450 = vshll.u32 %v3258, 16
  %v3452 = vrot.slane %v3450, 5
  %v3453 = vor.u32 %v3449, %v3452
  %v3454 = vrot.slane %v3453, 4
  %v3456 = vshll.u32 %v3259, 16
  %v3458 = vrot.slane %v3456, 5
  %v3459 = vsel %vm600, %v3454, %v3458
  %v3461 = vshrl.u32 %v3260, 16
  %v3463 = vrot.slane %v3461, 4
  %v3464 = vshll.u32 %v3260, 16
  %v3466 = vrot.slane %v3464, 5
  %v3467 = vor.u32 %v3463, %v3466
  %v3468 = vrot.slane %v3467, 4
  %v3470 = vshll.u32 %v3261, 16
  %v3472 = vrot.slane %v3470, 5
  %v3473 = vsel %vm600, %v3468, %v3472
  %v3475 = vshrl.u32 %v3262, 16
  %v3477 = vrot.slane %v3475, 4
  %v3478 = vshll.u32 %v3262, 16
  %v3480 = vrot.slane %v3478, 5
  %v3481 = vor.u32 %v3477, %v3480
  %v3482 = vrot.slane %v3481, 4
  %v3484 = vshll.u32 %v3263, 16
  %v3486 = vrot.slane %v3484, 5
  %v3487 = vsel %vm600, %v3482, %v3486
  %v3488 = vld [vmem:[#allocation2] sm:$0x1e]
  %v3489 = vld [vmem:[#allocation2 + $0x8] sm:$0x1e]
  %v3490 = vld [vmem:[#allocation2 + $0x10] sm:$0x1e]
  %v3491 = vld [vmem:[#allocation2 + $0x18] sm:$0x1e]
  %v3492 = vld [vmem:[#allocation2 + $0x20] sm:$0x1e]
  %v3493 = vld [vmem:[#allocation2 + $0x28] sm:$0x1e]
  %v3494 = vld [vmem:[#allocation2 + $0x30] sm:$0x1e]
  %v3495 = vld [vmem:[#allocation2 + $0x38] sm:$0x1e]
  %v3496 = vld [vmem:[#allocation2 + $0x50] sm:$0x1e]
  %v3497 = vld [vmem:[#allocation2 + $0x58] sm:$0x1e]
  %v3498 = vld [vmem:[#allocation2 + $0x60] sm:$0x1e]
  %v3499 = vld [vmem:[#allocation2 + $0x68] sm:$0x1e]
  %v3500 = vld [vmem:[#allocation2 + $0x70] sm:$0x1e]
  %v3501 = vld [vmem:[#allocation2 + $0x78] sm:$0x1e]
  %v3502 = vld [vmem:[#allocation2 + $0x80] sm:$0x1e]
  %v3503 = vld [vmem:[#allocation2 + $0x88] sm:$0x1e]
  %v3520 = vunpack.c.l.b16 %v3488
  %v3521 = vunpack.c.h.b16 %v3488
  %v3522 = vunpack.c.l.b16 %v3489
  %v3523 = vunpack.c.h.b16 %v3489
  %v3524 = vunpack.c.l.b16 %v3490
  %v3525 = vunpack.c.h.b16 %v3490
  %v3526 = vunpack.c.l.b16 %v3491
  %v3527 = vunpack.c.h.b16 %v3491
  %v3528 = vunpack.c.l.b16 %v3492
  %v3529 = vunpack.c.h.b16 %v3492
  %v3530 = vunpack.c.l.b16 %v3493
  %v3531 = vunpack.c.h.b16 %v3493
  %v3532 = vunpack.c.l.b16 %v3494
  %v3533 = vunpack.c.h.b16 %v3494
  %v3534 = vunpack.c.l.b16 %v3495
  %v3535 = vunpack.c.h.b16 %v3495
  %v3536 = vunpack.c.l.b16 %v3496
  %v3537 = vunpack.c.h.b16 %v3496
  %v3538 = vunpack.c.l.b16 %v3497
  %v3539 = vunpack.c.h.b16 %v3497
  %v3540 = vunpack.c.l.b16 %v3498
  %v3541 = vunpack.c.h.b16 %v3498
  %v3542 = vunpack.c.l.b16 %v3499
  %v3543 = vunpack.c.h.b16 %v3499
  %v3544 = vunpack.c.l.b16 %v3500
  %v3545 = vunpack.c.h.b16 %v3500
  %v3546 = vunpack.c.l.b16 %v3501
  %v3547 = vunpack.c.h.b16 %v3501
  %v3548 = vunpack.c.l.b16 %v3502
  %v3549 = vunpack.c.h.b16 %v3502
  %v3550 = vunpack.c.l.b16 %v3503
  %v3551 = vunpack.c.h.b16 %v3503
  %v3552 = vpack.c.b16 %v3520, %v3520
  %v3553 = vpack.c.b16 %v3521, %v3521
  %v3554 = vpack.c.b16 %v3522, %v3522
  %v3555 = vpack.c.b16 %v3523, %v3523
  %v3556 = vpack.c.b16 %v3524, %v3524
  %v3557 = vpack.c.b16 %v3525, %v3525
  %v3558 = vpack.c.b16 %v3526, %v3526
  %v3559 = vpack.c.b16 %v3527, %v3527
  %v3560 = vpack.c.b16 %v3528, %v3528
  %v3561 = vpack.c.b16 %v3529, %v3529
  %v3562 = vpack.c.b16 %v3530, %v3530
  %v3563 = vpack.c.b16 %v3531, %v3531
  %v3564 = vpack.c.b16 %v3532, %v3532
  %v3565 = vpack.c.b16 %v3533, %v3533
  %v3566 = vpack.c.b16 %v3534, %v3534
  %v3567 = vpack.c.b16 %v3535, %v3535
  %v3568 = vpack.c.b16 %v3536, %v3536
  %v3569 = vpack.c.b16 %v3537, %v3537
  %v3570 = vpack.c.b16 %v3538, %v3538
  %v3571 = vpack.c.b16 %v3539, %v3539
  %v3572 = vpack.c.b16 %v3540, %v3540
  %v3573 = vpack.c.b16 %v3541, %v3541
  %v3574 = vpack.c.b16 %v3542, %v3542
  %v3575 = vpack.c.b16 %v3543, %v3543
  %v3576 = vpack.c.b16 %v3544, %v3544
  %v3577 = vpack.c.b16 %v3545, %v3545
  %v3578 = vpack.c.b16 %v3546, %v3546
  %v3579 = vpack.c.b16 %v3547, %v3547
  %v3580 = vpack.c.b16 %v3548, %v3548
  %v3581 = vpack.c.b16 %v3549, %v3549
  %v3582 = vpack.c.b16 %v3550, %v3550
  %v3583 = vpack.c.b16 %v3551, %v3551
  %v3584 = vrot.slane %v3552, 5
  %v3585 = vrot.slane %v3584, 4
  %v3586 = vrot.slane %v3553, 5
  %v3587 = vsel %vm923, %v3585, %v3586
  %v3588 = vrot.slane %v3554, 5
  %v3589 = vrot.slane %v3588, 4
  %v3590 = vrot.slane %v3555, 5
  %v3591 = vsel %vm923, %v3589, %v3590
  %v3592 = vrot.slane %v3556, 5
  %v3593 = vrot.slane %v3592, 4
  %v3594 = vrot.slane %v3557, 5
  %v3595 = vsel %vm923, %v3593, %v3594
  %v3596 = vrot.slane %v3558, 5
  %v3597 = vrot.slane %v3596, 4
  %v3598 = vrot.slane %v3559, 5
  %v3599 = vsel %vm923, %v3597, %v3598
  %v3600 = vrot.slane %v3560, 5
  %v3601 = vrot.slane %v3600, 4
  %v3602 = vrot.slane %v3561, 5
  %v3603 = vsel %vm923, %v3601, %v3602
  %v3604 = vrot.slane %v3562, 5
  %v3605 = vrot.slane %v3604, 4
  %v3606 = vrot.slane %v3563, 5
  %v3607 = vsel %vm923, %v3605, %v3606
  %v3608 = vrot.slane %v3564, 5
  %v3609 = vrot.slane %v3608, 4
  %v3610 = vrot.slane %v3565, 5
  %v3611 = vsel %vm923, %v3609, %v3610
  %v3612 = vrot.slane %v3566, 5
  %v3613 = vrot.slane %v3612, 4
  %v3614 = vrot.slane %v3567, 5
  %v3615 = vsel %vm923, %v3613, %v3614
  %v3616 = vrot.slane %v3568, 5
  %v3617 = vrot.slane %v3616, 4
  %v3618 = vrot.slane %v3569, 5
  %v3619 = vsel %vm923, %v3617, %v3618
  %v3620 = vrot.slane %v3570, 5
  %v3621 = vrot.slane %v3620, 4
  %v3622 = vrot.slane %v3571, 5
  %v3623 = vsel %vm923, %v3621, %v3622
  %v3624 = vrot.slane %v3572, 5
  %v3625 = vrot.slane %v3624, 4
  %v3626 = vrot.slane %v3573, 5
  %v3627 = vsel %vm923, %v3625, %v3626
  %v3628 = vrot.slane %v3574, 5
  %v3629 = vrot.slane %v3628, 4
  %v3630 = vrot.slane %v3575, 5
  %v3631 = vsel %vm923, %v3629, %v3630
  %v3632 = vrot.slane %v3576, 5
  %v3633 = vrot.slane %v3632, 4
  %v3634 = vrot.slane %v3577, 5
  %v3635 = vsel %vm923, %v3633, %v3634
  %v3636 = vrot.slane %v3578, 5
  %v3637 = vrot.slane %v3636, 4
  %v3638 = vrot.slane %v3579, 5
  %v3639 = vsel %vm923, %v3637, %v3638
  %v3640 = vrot.slane %v3580, 5
  %v3641 = vrot.slane %v3640, 4
  %v3642 = vrot.slane %v3581, 5
  %v3643 = vsel %vm923, %v3641, %v3642
  %v3644 = vrot.slane %v3582, 5
  %v3645 = vrot.slane %v3644, 4
  %v3646 = vrot.slane %v3583, 5
  %v3647 = vsel %vm923, %v3645, %v3646
  %v3648 = vld [vmem:[%s156] sm:$0xf]
  %v3649 = vld [vmem:[%s156 + $0x8] sm:$0xf]
  %v3650 = vld [vmem:[%s156 + $0x10] sm:$0xf]
  %v3651 = vld [vmem:[%s156 + $0x18] sm:$0xf]
  %v3652 = vld [vmem:[%s156 + $0x20] sm:$0xf]
  %v3653 = vld [vmem:[%s156 + $0x28] sm:$0xf]
  %v3654 = vld [vmem:[%s156 + $0x30] sm:$0xf]
  %v3655 = vld [vmem:[%s156 + $0x38] sm:$0xf]
  %v3656 = vld [vmem:[%s156 + $0x50] sm:$0xf]
  %v3657 = vld [vmem:[%s156 + $0x58] sm:$0xf]
  %v3658 = vld [vmem:[%s156 + $0x60] sm:$0xf]
  %v3659 = vld [vmem:[%s156 + $0x68] sm:$0xf]
  %v3660 = vld [vmem:[%s156 + $0x70] sm:$0xf]
  %v3661 = vld [vmem:[%s156 + $0x78] sm:$0xf]
  %v3662 = vld [vmem:[%s156 + $0x80] sm:$0xf]
  %v3663 = vld [vmem:[%s156 + $0x88] sm:$0xf]
  %v3664 = vld [vmem:[%s156] sm:$0x1f]
  %v3665 = vld [vmem:[%s156 + $0x8] sm:$0x1f]
  %v3666 = vld [vmem:[%s156 + $0x10] sm:$0x1f]
  %v3667 = vld [vmem:[%s156 + $0x18] sm:$0x1f]
  %v3668 = vld [vmem:[%s156 + $0x20] sm:$0x1f]
  %v3669 = vld [vmem:[%s156 + $0x28] sm:$0x1f]
  %v3670 = vld [vmem:[%s156 + $0x30] sm:$0x1f]
  %v3671 = vld [vmem:[%s156 + $0x38] sm:$0x1f]
  %v3672 = vld [vmem:[%s156 + $0x50] sm:$0x1f]
  %v3673 = vld [vmem:[%s156 + $0x58] sm:$0x1f]
  %v3674 = vld [vmem:[%s156 + $0x60] sm:$0x1f]
  %v3675 = vld [vmem:[%s156 + $0x68] sm:$0x1f]
  %v3676 = vld [vmem:[%s156 + $0x70] sm:$0x1f]
  %v3677 = vld [vmem:[%s156 + $0x78] sm:$0x1f]
  %v3678 = vld [vmem:[%s156 + $0x80] sm:$0x1f]
  %v3679 = vld [vmem:[%s156 + $0x88] sm:$0x1f]
  %v3696 = vunpack.c.l.b16 %v3664
  %v3697 = vunpack.c.h.b16 %v3664
  %v3698 = vunpack.c.l.b16 %v3665
  %v3699 = vunpack.c.h.b16 %v3665
  %v3700 = vunpack.c.l.b16 %v3666
  %v3701 = vunpack.c.h.b16 %v3666
  %v3702 = vunpack.c.l.b16 %v3667
  %v3703 = vunpack.c.h.b16 %v3667
  %v3704 = vunpack.c.l.b16 %v3668
  %v3705 = vunpack.c.h.b16 %v3668
  %v3706 = vunpack.c.l.b16 %v3669
  %v3707 = vunpack.c.h.b16 %v3669
  %v3708 = vunpack.c.l.b16 %v3670
  %v3709 = vunpack.c.h.b16 %v3670
  %v3710 = vunpack.c.l.b16 %v3671
  %v3711 = vunpack.c.h.b16 %v3671
  %v3712 = vunpack.c.l.b16 %v3672
  %v3713 = vunpack.c.h.b16 %v3672
  %v3714 = vunpack.c.l.b16 %v3673
  %v3715 = vunpack.c.h.b16 %v3673
  %v3716 = vunpack.c.l.b16 %v3674
  %v3717 = vunpack.c.h.b16 %v3674
  %v3718 = vunpack.c.l.b16 %v3675
  %v3719 = vunpack.c.h.b16 %v3675
  %v3720 = vunpack.c.l.b16 %v3676
  %v3721 = vunpack.c.h.b16 %v3676
  %v3722 = vunpack.c.l.b16 %v3677
  %v3723 = vunpack.c.h.b16 %v3677
  %v3724 = vunpack.c.l.b16 %v3678
  %v3725 = vunpack.c.h.b16 %v3678
  %v3726 = vunpack.c.l.b16 %v3679
  %v3727 = vunpack.c.h.b16 %v3679
  %v3728 = vpack.c.b16 %v3696, %v3696
  %v3729 = vpack.c.b16 %v3697, %v3697
  %v3730 = vpack.c.b16 %v3698, %v3698
  %v3731 = vpack.c.b16 %v3699, %v3699
  %v3732 = vpack.c.b16 %v3700, %v3700
  %v3733 = vpack.c.b16 %v3701, %v3701
  %v3734 = vpack.c.b16 %v3702, %v3702
  %v3735 = vpack.c.b16 %v3703, %v3703
  %v3736 = vpack.c.b16 %v3704, %v3704
  %v3737 = vpack.c.b16 %v3705, %v3705
  %v3738 = vpack.c.b16 %v3706, %v3706
  %v3739 = vpack.c.b16 %v3707, %v3707
  %v3740 = vpack.c.b16 %v3708, %v3708
  %v3741 = vpack.c.b16 %v3709, %v3709
  %v3742 = vpack.c.b16 %v3710, %v3710
  %v3743 = vpack.c.b16 %v3711, %v3711
  %v3744 = vpack.c.b16 %v3712, %v3712
  %v3745 = vpack.c.b16 %v3713, %v3713
  %v3746 = vpack.c.b16 %v3714, %v3714
  %v3747 = vpack.c.b16 %v3715, %v3715
  %v3748 = vpack.c.b16 %v3716, %v3716
  %v3749 = vpack.c.b16 %v3717, %v3717
  %v3750 = vpack.c.b16 %v3718, %v3718
  %v3751 = vpack.c.b16 %v3719, %v3719
  %v3752 = vpack.c.b16 %v3720, %v3720
  %v3753 = vpack.c.b16 %v3721, %v3721
  %v3754 = vpack.c.b16 %v3722, %v3722
  %v3755 = vpack.c.b16 %v3723, %v3723
  %v3756 = vpack.c.b16 %v3724, %v3724
  %v3757 = vpack.c.b16 %v3725, %v3725
  %v3758 = vpack.c.b16 %v3726, %v3726
  %v3759 = vpack.c.b16 %v3727, %v3727
  %v3761 = vshrl.u32 %v3728, 16
  %v3763 = vrot.slane %v3761, 4
  %v3764 = vshll.u32 %v3728, 16
  %v3766 = vrot.slane %v3764, 5
  %v3767 = vor.u32 %v3763, %v3766
  %v3768 = vrot.slane %v3767, 4
  %v3770 = vshll.u32 %v3729, 16
  %v3772 = vrot.slane %v3770, 5
  %v3773 = vsel %vm600, %v3768, %v3772
  %v3775 = vshrl.u32 %v3730, 16
  %v3777 = vrot.slane %v3775, 4
  %v3778 = vshll.u32 %v3730, 16
  %v3780 = vrot.slane %v3778, 5
  %v3781 = vor.u32 %v3777, %v3780
  %v3782 = vrot.slane %v3781, 4
  %v3784 = vshll.u32 %v3731, 16
  %v3786 = vrot.slane %v3784, 5
  %v3787 = vsel %vm600, %v3782, %v3786
  %v3789 = vshrl.u32 %v3732, 16
  %v3791 = vrot.slane %v3789, 4
  %v3792 = vshll.u32 %v3732, 16
  %v3794 = vrot.slane %v3792, 5
  %v3795 = vor.u32 %v3791, %v3794
  %v3796 = vrot.slane %v3795, 4
  %v3798 = vshll.u32 %v3733, 16
  %v3800 = vrot.slane %v3798, 5
  %v3801 = vsel %vm600, %v3796, %v3800
  %v3803 = vshrl.u32 %v3734, 16
  %v3805 = vrot.slane %v3803, 4
  %v3806 = vshll.u32 %v3734, 16
  %v3808 = vrot.slane %v3806, 5
  %v3809 = vor.u32 %v3805, %v3808
  %v3810 = vrot.slane %v3809, 4
  %v3812 = vshll.u32 %v3735, 16
  %v3814 = vrot.slane %v3812, 5
  %v3815 = vsel %vm600, %v3810, %v3814
  %v3817 = vshrl.u32 %v3736, 16
  %v3819 = vrot.slane %v3817, 4
  %v3820 = vshll.u32 %v3736, 16
  %v3822 = vrot.slane %v3820, 5
  %v3823 = vor.u32 %v3819, %v3822
  %v3824 = vrot.slane %v3823, 4
  %v3826 = vshll.u32 %v3737, 16
  %v3828 = vrot.slane %v3826, 5
  %v3829 = vsel %vm600, %v3824, %v3828
  %v3831 = vshrl.u32 %v3738, 16
  %v3833 = vrot.slane %v3831, 4
  %v3834 = vshll.u32 %v3738, 16
  %v3836 = vrot.slane %v3834, 5
  %v3837 = vor.u32 %v3833, %v3836
  %v3838 = vrot.slane %v3837, 4
  %v3840 = vshll.u32 %v3739, 16
  %v3842 = vrot.slane %v3840, 5
  %v3843 = vsel %vm600, %v3838, %v3842
  %v3845 = vshrl.u32 %v3740, 16
  %v3847 = vrot.slane %v3845, 4
  %v3848 = vshll.u32 %v3740, 16
  %v3850 = vrot.slane %v3848, 5
  %v3851 = vor.u32 %v3847, %v3850
  %v3852 = vrot.slane %v3851, 4
  %v3854 = vshll.u32 %v3741, 16
  %v3856 = vrot.slane %v3854, 5
  %v3857 = vsel %vm600, %v3852, %v3856
  %v3859 = vshrl.u32 %v3742, 16
  %v3861 = vrot.slane %v3859, 4
  %v3862 = vshll.u32 %v3742, 16
  %v3864 = vrot.slane %v3862, 5
  %v3865 = vor.u32 %v3861, %v3864
  %v3866 = vrot.slane %v3865, 4
  %v3868 = vshll.u32 %v3743, 16
  %v3870 = vrot.slane %v3868, 5
  %v3871 = vsel %vm600, %v3866, %v3870
  %v3873 = vshrl.u32 %v3744, 16
  %v3875 = vrot.slane %v3873, 4
  %v3876 = vshll.u32 %v3744, 16
  %v3878 = vrot.slane %v3876, 5
  %v3879 = vor.u32 %v3875, %v3878
  %v3880 = vrot.slane %v3879, 4
  %v3882 = vshll.u32 %v3745, 16
  %v3884 = vrot.slane %v3882, 5
  %v3885 = vsel %vm600, %v3880, %v3884
  %v3887 = vshrl.u32 %v3746, 16
  %v3889 = vrot.slane %v3887, 4
  %v3890 = vshll.u32 %v3746, 16
  %v3892 = vrot.slane %v3890, 5
  %v3893 = vor.u32 %v3889, %v3892
  %v3894 = vrot.slane %v3893, 4
  %v3896 = vshll.u32 %v3747, 16
  %v3898 = vrot.slane %v3896, 5
  %v3899 = vsel %vm600, %v3894, %v3898
  %v3901 = vshrl.u32 %v3748, 16
  %v3903 = vrot.slane %v3901, 4
  %v3904 = vshll.u32 %v3748, 16
  %v3906 = vrot.slane %v3904, 5
  %v3907 = vor.u32 %v3903, %v3906
  %v3908 = vrot.slane %v3907, 4
  %v3910 = vshll.u32 %v3749, 16
  %v3912 = vrot.slane %v3910, 5
  %v3913 = vsel %vm600, %v3908, %v3912
  %v3915 = vshrl.u32 %v3750, 16
  %v3917 = vrot.slane %v3915, 4
  %v3918 = vshll.u32 %v3750, 16
  %v3920 = vrot.slane %v3918, 5
  %v3921 = vor.u32 %v3917, %v3920
  %v3922 = vrot.slane %v3921, 4
  %v3924 = vshll.u32 %v3751, 16
  %v3926 = vrot.slane %v3924, 5
  %v3927 = vsel %vm600, %v3922, %v3926
  %v3929 = vshrl.u32 %v3752, 16
  %v3931 = vrot.slane %v3929, 4
  %v3932 = vshll.u32 %v3752, 16
  %v3934 = vrot.slane %v3932, 5
  %v3935 = vor.u32 %v3931, %v3934
  %v3936 = vrot.slane %v3935, 4
  %v3938 = vshll.u32 %v3753, 16
  %v3940 = vrot.slane %v3938, 5
  %v3941 = vsel %vm600, %v3936, %v3940
  %v3943 = vshrl.u32 %v3754, 16
  %v3945 = vrot.slane %v3943, 4
  %v3946 = vshll.u32 %v3754, 16
  %v3948 = vrot.slane %v3946, 5
  %v3949 = vor.u32 %v3945, %v3948
  %v3950 = vrot.slane %v3949, 4
  %v3952 = vshll.u32 %v3755, 16
  %v3954 = vrot.slane %v3952, 5
  %v3955 = vsel %vm600, %v3950, %v3954
  %v3957 = vshrl.u32 %v3756, 16
  %v3959 = vrot.slane %v3957, 4
  %v3960 = vshll.u32 %v3756, 16
  %v3962 = vrot.slane %v3960, 5
  %v3963 = vor.u32 %v3959, %v3962
  %v3964 = vrot.slane %v3963, 4
  %v3966 = vshll.u32 %v3757, 16
  %v3968 = vrot.slane %v3966, 5
  %v3969 = vsel %vm600, %v3964, %v3968
  %v3971 = vshrl.u32 %v3758, 16
  %v3973 = vrot.slane %v3971, 4
  %v3974 = vshll.u32 %v3758, 16
  %v3976 = vrot.slane %v3974, 5
  %v3977 = vor.u32 %v3973, %v3976
  %v3978 = vrot.slane %v3977, 4
  %v3980 = vshll.u32 %v3759, 16
  %v3982 = vrot.slane %v3980, 5
  %v3983 = vsel %vm600, %v3978, %v3982
  %v3984 = vld [vmem:[%s156] sm:$0x1e]
  %v3985 = vld [vmem:[%s156 + $0x8] sm:$0x1e]
  %v3986 = vld [vmem:[%s156 + $0x10] sm:$0x1e]
  %v3987 = vld [vmem:[%s156 + $0x18] sm:$0x1e]
  %v3988 = vld [vmem:[%s156 + $0x20] sm:$0x1e]
  %v3989 = vld [vmem:[%s156 + $0x28] sm:$0x1e]
  %v3990 = vld [vmem:[%s156 + $0x30] sm:$0x1e]
  %v3991 = vld [vmem:[%s156 + $0x38] sm:$0x1e]
  %v3992 = vld [vmem:[%s156 + $0x50] sm:$0x1e]
  %v3993 = vld [vmem:[%s156 + $0x58] sm:$0x1e]
  %v3994 = vld [vmem:[%s156 + $0x60] sm:$0x1e]
  %v3995 = vld [vmem:[%s156 + $0x68] sm:$0x1e]
  %v3996 = vld [vmem:[%s156 + $0x70] sm:$0x1e]
  %v3997 = vld [vmem:[%s156 + $0x78] sm:$0x1e]
  %v3998 = vld [vmem:[%s156 + $0x80] sm:$0x1e]
  %v3999 = vld [vmem:[%s156 + $0x88] sm:$0x1e]
  %v4016 = vunpack.c.l.b16 %v3984
  %v4017 = vunpack.c.h.b16 %v3984
  %v4018 = vunpack.c.l.b16 %v3985
  %v4019 = vunpack.c.h.b16 %v3985
  %v4020 = vunpack.c.l.b16 %v3986
  %v4021 = vunpack.c.h.b16 %v3986
  %v4022 = vunpack.c.l.b16 %v3987
  %v4023 = vunpack.c.h.b16 %v3987
  %v4024 = vunpack.c.l.b16 %v3988
  %v4025 = vunpack.c.h.b16 %v3988
  %v4026 = vunpack.c.l.b16 %v3989
  %v4027 = vunpack.c.h.b16 %v3989
  %v4028 = vunpack.c.l.b16 %v3990
  %v4029 = vunpack.c.h.b16 %v3990
  %v4030 = vunpack.c.l.b16 %v3991
  %v4031 = vunpack.c.h.b16 %v3991
  %v4032 = vunpack.c.l.b16 %v3992
  %v4033 = vunpack.c.h.b16 %v3992
  %v4034 = vunpack.c.l.b16 %v3993
  %v4035 = vunpack.c.h.b16 %v3993
  %v4036 = vunpack.c.l.b16 %v3994
  %v4037 = vunpack.c.h.b16 %v3994
  %v4038 = vunpack.c.l.b16 %v3995
  %v4039 = vunpack.c.h.b16 %v3995
  %v4040 = vunpack.c.l.b16 %v3996
  %v4041 = vunpack.c.h.b16 %v3996
  %v4042 = vunpack.c.l.b16 %v3997
  %v4043 = vunpack.c.h.b16 %v3997
  %v4044 = vunpack.c.l.b16 %v3998
  %v4045 = vunpack.c.h.b16 %v3998
  %v4046 = vunpack.c.l.b16 %v3999
  %v4047 = vunpack.c.h.b16 %v3999
  %v4048 = vpack.c.b16 %v4016, %v4016
  %v4049 = vpack.c.b16 %v4017, %v4017
  %v4050 = vpack.c.b16 %v4018, %v4018
  %v4051 = vpack.c.b16 %v4019, %v4019
  %v4052 = vpack.c.b16 %v4020, %v4020
  %v4053 = vpack.c.b16 %v4021, %v4021
  %v4054 = vpack.c.b16 %v4022, %v4022
  %v4055 = vpack.c.b16 %v4023, %v4023
  %v4056 = vpack.c.b16 %v4024, %v4024
  %v4057 = vpack.c.b16 %v4025, %v4025
  %v4058 = vpack.c.b16 %v4026, %v4026
  %v4059 = vpack.c.b16 %v4027, %v4027
  %v4060 = vpack.c.b16 %v4028, %v4028
  %v4061 = vpack.c.b16 %v4029, %v4029
  %v4062 = vpack.c.b16 %v4030, %v4030
  %v4063 = vpack.c.b16 %v4031, %v4031
  %v4064 = vpack.c.b16 %v4032, %v4032
  %v4065 = vpack.c.b16 %v4033, %v4033
  %v4066 = vpack.c.b16 %v4034, %v4034
  %v4067 = vpack.c.b16 %v4035, %v4035
  %v4068 = vpack.c.b16 %v4036, %v4036
  %v4069 = vpack.c.b16 %v4037, %v4037
  %v4070 = vpack.c.b16 %v4038, %v4038
  %v4071 = vpack.c.b16 %v4039, %v4039
  %v4072 = vpack.c.b16 %v4040, %v4040
  %v4073 = vpack.c.b16 %v4041, %v4041
  %v4074 = vpack.c.b16 %v4042, %v4042
  %v4075 = vpack.c.b16 %v4043, %v4043
  %v4076 = vpack.c.b16 %v4044, %v4044
  %v4077 = vpack.c.b16 %v4045, %v4045
  %v4078 = vpack.c.b16 %v4046, %v4046
  %v4079 = vpack.c.b16 %v4047, %v4047
  %v4080 = vrot.slane %v4048, 5
  %v4081 = vrot.slane %v4080, 4
  %v4082 = vrot.slane %v4049, 5
  %v4083 = vsel %vm923, %v4081, %v4082
  %v4084 = vrot.slane %v4050, 5
  %v4085 = vrot.slane %v4084, 4
  %v4086 = vrot.slane %v4051, 5
  %v4087 = vsel %vm923, %v4085, %v4086
  %v4088 = vrot.slane %v4052, 5
  %v4089 = vrot.slane %v4088, 4
  %v4090 = vrot.slane %v4053, 5
  %v4091 = vsel %vm923, %v4089, %v4090
  %v4092 = vrot.slane %v4054, 5
  %v4093 = vrot.slane %v4092, 4
  %v4094 = vrot.slane %v4055, 5
  %v4095 = vsel %vm923, %v4093, %v4094
  %v4096 = vrot.slane %v4056, 5
  %v4097 = vrot.slane %v4096, 4
  %v4098 = vrot.slane %v4057, 5
  %v4099 = vsel %vm923, %v4097, %v4098
  %v4100 = vrot.slane %v4058, 5
  %v4101 = vrot.slane %v4100, 4
  %v4102 = vrot.slane %v4059, 5
  %v4103 = vsel %vm923, %v4101, %v4102
  %v4104 = vrot.slane %v4060, 5
  %v4105 = vrot.slane %v4104, 4
  %v4106 = vrot.slane %v4061, 5
  %v4107 = vsel %vm923, %v4105, %v4106
  %v4108 = vrot.slane %v4062, 5
  %v4109 = vrot.slane %v4108, 4
  %v4110 = vrot.slane %v4063, 5
  %v4111 = vsel %vm923, %v4109, %v4110
  %v4112 = vrot.slane %v4064, 5
  %v4113 = vrot.slane %v4112, 4
  %v4114 = vrot.slane %v4065, 5
  %v4115 = vsel %vm923, %v4113, %v4114
  %v4116 = vrot.slane %v4066, 5
  %v4117 = vrot.slane %v4116, 4
  %v4118 = vrot.slane %v4067, 5
  %v4119 = vsel %vm923, %v4117, %v4118
  %v4120 = vrot.slane %v4068, 5
  %v4121 = vrot.slane %v4120, 4
  %v4122 = vrot.slane %v4069, 5
  %v4123 = vsel %vm923, %v4121, %v4122
  %v4124 = vrot.slane %v4070, 5
  %v4125 = vrot.slane %v4124, 4
  %v4126 = vrot.slane %v4071, 5
  %v4127 = vsel %vm923, %v4125, %v4126
  %v4128 = vrot.slane %v4072, 5
  %v4129 = vrot.slane %v4128, 4
  %v4130 = vrot.slane %v4073, 5
  %v4131 = vsel %vm923, %v4129, %v4130
  %v4132 = vrot.slane %v4074, 5
  %v4133 = vrot.slane %v4132, 4
  %v4134 = vrot.slane %v4075, 5
  %v4135 = vsel %vm923, %v4133, %v4134
  %v4136 = vrot.slane %v4076, 5
  %v4137 = vrot.slane %v4136, 4
  %v4138 = vrot.slane %v4077, 5
  %v4139 = vsel %vm923, %v4137, %v4138
  %v4140 = vrot.slane %v4078, 5
  %v4141 = vrot.slane %v4140, 4
  %v4142 = vrot.slane %v4079, 5
  %v4143 = vsel %vm923, %v4141, %v4142
  %v4144 = vld [vmem:[%s1484] sm:$0xf]
  %v4145 = vld [vmem:[%s1484 + $0x8] sm:$0xf]
  %v4146 = vld [vmem:[%s1484 + $0x10] sm:$0xf]
  %v4147 = vld [vmem:[%s1484 + $0x18] sm:$0xf]
  %v4148 = vld [vmem:[%s1484 + $0x20] sm:$0xf]
  %v4149 = vld [vmem:[%s1484 + $0x28] sm:$0xf]
  %v4150 = vld [vmem:[%s1484 + $0x30] sm:$0xf]
  %v4151 = vld [vmem:[%s1484 + $0x38] sm:$0xf]
  %v4152 = vld [vmem:[%s1484 + $0x50] sm:$0xf]
  %v4153 = vld [vmem:[%s1484 + $0x58] sm:$0xf]
  %v4154 = vld [vmem:[%s1484 + $0x60] sm:$0xf]
  %v4155 = vld [vmem:[%s1484 + $0x68] sm:$0xf]
  %v4156 = vld [vmem:[%s1484 + $0x70] sm:$0xf]
  %v4157 = vld [vmem:[%s1484 + $0x78] sm:$0xf]
  %v4158 = vld [vmem:[%s1484 + $0x80] sm:$0xf]
  %v4159 = vld [vmem:[%s1484 + $0x88] sm:$0xf]
  %v4160 = vld [vmem:[%s1484] sm:$0x1f]
  %v4161 = vld [vmem:[%s1484 + $0x8] sm:$0x1f]
  %v4162 = vld [vmem:[%s1484 + $0x10] sm:$0x1f]
  %v4163 = vld [vmem:[%s1484 + $0x18] sm:$0x1f]
  %v4164 = vld [vmem:[%s1484 + $0x20] sm:$0x1f]
  %v4165 = vld [vmem:[%s1484 + $0x28] sm:$0x1f]
  %v4166 = vld [vmem:[%s1484 + $0x30] sm:$0x1f]
  %v4167 = vld [vmem:[%s1484 + $0x38] sm:$0x1f]
  %v4168 = vld [vmem:[%s1484 + $0x50] sm:$0x1f]
  %v4169 = vld [vmem:[%s1484 + $0x58] sm:$0x1f]
  %v4170 = vld [vmem:[%s1484 + $0x60] sm:$0x1f]
  %v4171 = vld [vmem:[%s1484 + $0x68] sm:$0x1f]
  %v4172 = vld [vmem:[%s1484 + $0x70] sm:$0x1f]
  %v4173 = vld [vmem:[%s1484 + $0x78] sm:$0x1f]
  %v4174 = vld [vmem:[%s1484 + $0x80] sm:$0x1f]
  %v4175 = vld [vmem:[%s1484 + $0x88] sm:$0x1f]
  %v4192 = vunpack.c.l.b16 %v4160
  %v4193 = vunpack.c.h.b16 %v4160
  %v4194 = vunpack.c.l.b16 %v4161
  %v4195 = vunpack.c.h.b16 %v4161
  %v4196 = vunpack.c.l.b16 %v4162
  %v4197 = vunpack.c.h.b16 %v4162
  %v4198 = vunpack.c.l.b16 %v4163
  %v4199 = vunpack.c.h.b16 %v4163
  %v4200 = vunpack.c.l.b16 %v4164
  %v4201 = vunpack.c.h.b16 %v4164
  %v4202 = vunpack.c.l.b16 %v4165
  %v4203 = vunpack.c.h.b16 %v4165
  %v4204 = vunpack.c.l.b16 %v4166
  %v4205 = vunpack.c.h.b16 %v4166
  %v4206 = vunpack.c.l.b16 %v4167
  %v4207 = vunpack.c.h.b16 %v4167
  %v4208 = vunpack.c.l.b16 %v4168
  %v4209 = vunpack.c.h.b16 %v4168
  %v4210 = vunpack.c.l.b16 %v4169
  %v4211 = vunpack.c.h.b16 %v4169
  %v4212 = vunpack.c.l.b16 %v4170
  %v4213 = vunpack.c.h.b16 %v4170
  %v4214 = vunpack.c.l.b16 %v4171
  %v4215 = vunpack.c.h.b16 %v4171
  %v4216 = vunpack.c.l.b16 %v4172
  %v4217 = vunpack.c.h.b16 %v4172
  %v4218 = vunpack.c.l.b16 %v4173
  %v4219 = vunpack.c.h.b16 %v4173
  %v4220 = vunpack.c.l.b16 %v4174
  %v4221 = vunpack.c.h.b16 %v4174
  %v4222 = vunpack.c.l.b16 %v4175
  %v4223 = vunpack.c.h.b16 %v4175
  %v4224 = vpack.c.b16 %v4192, %v4192
  %v4225 = vpack.c.b16 %v4193, %v4193
  %v4226 = vpack.c.b16 %v4194, %v4194
  %v4227 = vpack.c.b16 %v4195, %v4195
  %v4228 = vpack.c.b16 %v4196, %v4196
  %v4229 = vpack.c.b16 %v4197, %v4197
  %v4230 = vpack.c.b16 %v4198, %v4198
  %v4231 = vpack.c.b16 %v4199, %v4199
  %v4232 = vpack.c.b16 %v4200, %v4200
  %v4233 = vpack.c.b16 %v4201, %v4201
  %v4234 = vpack.c.b16 %v4202, %v4202
  %v4235 = vpack.c.b16 %v4203, %v4203
  %v4236 = vpack.c.b16 %v4204, %v4204
  %v4237 = vpack.c.b16 %v4205, %v4205
  %v4238 = vpack.c.b16 %v4206, %v4206
  %v4239 = vpack.c.b16 %v4207, %v4207
  %v4240 = vpack.c.b16 %v4208, %v4208
  %v4241 = vpack.c.b16 %v4209, %v4209
  %v4242 = vpack.c.b16 %v4210, %v4210
  %v4243 = vpack.c.b16 %v4211, %v4211
  %v4244 = vpack.c.b16 %v4212, %v4212
  %v4245 = vpack.c.b16 %v4213, %v4213
  %v4246 = vpack.c.b16 %v4214, %v4214
  %v4247 = vpack.c.b16 %v4215, %v4215
  %v4248 = vpack.c.b16 %v4216, %v4216
  %v4249 = vpack.c.b16 %v4217, %v4217
  %v4250 = vpack.c.b16 %v4218, %v4218
  %v4251 = vpack.c.b16 %v4219, %v4219
  %v4252 = vpack.c.b16 %v4220, %v4220
  %v4253 = vpack.c.b16 %v4221, %v4221
  %v4254 = vpack.c.b16 %v4222, %v4222
  %v4255 = vpack.c.b16 %v4223, %v4223
  %v4257 = vshrl.u32 %v4224, 16
  %v4259 = vrot.slane %v4257, 4
  %v4260 = vshll.u32 %v4224, 16
  %v4262 = vrot.slane %v4260, 5
  %v4263 = vor.u32 %v4259, %v4262
  %v4264 = vrot.slane %v4263, 4
  %v4266 = vshll.u32 %v4225, 16
  %v4268 = vrot.slane %v4266, 5
  %v4269 = vsel %vm600, %v4264, %v4268
  %v4271 = vshrl.u32 %v4226, 16
  %v4273 = vrot.slane %v4271, 4
  %v4274 = vshll.u32 %v4226, 16
  %v4276 = vrot.slane %v4274, 5
  %v4277 = vor.u32 %v4273, %v4276
  %v4278 = vrot.slane %v4277, 4
  %v4280 = vshll.u32 %v4227, 16
  %v4282 = vrot.slane %v4280, 5
  %v4283 = vsel %vm600, %v4278, %v4282
  %v4285 = vshrl.u32 %v4228, 16
  %v4287 = vrot.slane %v4285, 4
  %v4288 = vshll.u32 %v4228, 16
  %v4290 = vrot.slane %v4288, 5
  %v4291 = vor.u32 %v4287, %v4290
  %v4292 = vrot.slane %v4291, 4
  %v4294 = vshll.u32 %v4229, 16
  %v4296 = vrot.slane %v4294, 5
  %v4297 = vsel %vm600, %v4292, %v4296
  %v4299 = vshrl.u32 %v4230, 16
  %v4301 = vrot.slane %v4299, 4
  %v4302 = vshll.u32 %v4230, 16
  %v4304 = vrot.slane %v4302, 5
  %v4305 = vor.u32 %v4301, %v4304
  %v4306 = vrot.slane %v4305, 4
  %v4308 = vshll.u32 %v4231, 16
  %v4310 = vrot.slane %v4308, 5
  %v4311 = vsel %vm600, %v4306, %v4310
  %v4313 = vshrl.u32 %v4232, 16
  %v4315 = vrot.slane %v4313, 4
  %v4316 = vshll.u32 %v4232, 16
  %v4318 = vrot.slane %v4316, 5
  %v4319 = vor.u32 %v4315, %v4318
  %v4320 = vrot.slane %v4319, 4
  %v4322 = vshll.u32 %v4233, 16
  %v4324 = vrot.slane %v4322, 5
  %v4325 = vsel %vm600, %v4320, %v4324
  %v4327 = vshrl.u32 %v4234, 16
  %v4329 = vrot.slane %v4327, 4
  %v4330 = vshll.u32 %v4234, 16
  %v4332 = vrot.slane %v4330, 5
  %v4333 = vor.u32 %v4329, %v4332
  %v4334 = vrot.slane %v4333, 4
  %v4336 = vshll.u32 %v4235, 16
  %v4338 = vrot.slane %v4336, 5
  %v4339 = vsel %vm600, %v4334, %v4338
  %v4341 = vshrl.u32 %v4236, 16
  %v4343 = vrot.slane %v4341, 4
  %v4344 = vshll.u32 %v4236, 16
  %v4346 = vrot.slane %v4344, 5
  %v4347 = vor.u32 %v4343, %v4346
  %v4348 = vrot.slane %v4347, 4
  %v4350 = vshll.u32 %v4237, 16
  %v4352 = vrot.slane %v4350, 5
  %v4353 = vsel %vm600, %v4348, %v4352
  %v4355 = vshrl.u32 %v4238, 16
  %v4357 = vrot.slane %v4355, 4
  %v4358 = vshll.u32 %v4238, 16
  %v4360 = vrot.slane %v4358, 5
  %v4361 = vor.u32 %v4357, %v4360
  %v4362 = vrot.slane %v4361, 4
  %v4364 = vshll.u32 %v4239, 16
  %v4366 = vrot.slane %v4364, 5
  %v4367 = vsel %vm600, %v4362, %v4366
  %v4369 = vshrl.u32 %v4240, 16
  %v4371 = vrot.slane %v4369, 4
  %v4372 = vshll.u32 %v4240, 16
  %v4374 = vrot.slane %v4372, 5
  %v4375 = vor.u32 %v4371, %v4374
  %v4376 = vrot.slane %v4375, 4
  %v4378 = vshll.u32 %v4241, 16
  %v4380 = vrot.slane %v4378, 5
  %v4381 = vsel %vm600, %v4376, %v4380
  %v4383 = vshrl.u32 %v4242, 16
  %v4385 = vrot.slane %v4383, 4
  %v4386 = vshll.u32 %v4242, 16
  %v4388 = vrot.slane %v4386, 5
  %v4389 = vor.u32 %v4385, %v4388
  %v4390 = vrot.slane %v4389, 4
  %v4392 = vshll.u32 %v4243, 16
  %v4394 = vrot.slane %v4392, 5
  %v4395 = vsel %vm600, %v4390, %v4394
  %v4397 = vshrl.u32 %v4244, 16
  %v4399 = vrot.slane %v4397, 4
  %v4400 = vshll.u32 %v4244, 16
  %v4402 = vrot.slane %v4400, 5
  %v4403 = vor.u32 %v4399, %v4402
  %v4404 = vrot.slane %v4403, 4
  %v4406 = vshll.u32 %v4245, 16
  %v4408 = vrot.slane %v4406, 5
  %v4409 = vsel %vm600, %v4404, %v4408
  %v4411 = vshrl.u32 %v4246, 16
  %v4413 = vrot.slane %v4411, 4
  %v4414 = vshll.u32 %v4246, 16
  %v4416 = vrot.slane %v4414, 5
  %v4417 = vor.u32 %v4413, %v4416
  %v4418 = vrot.slane %v4417, 4
  %v4420 = vshll.u32 %v4247, 16
  %v4422 = vrot.slane %v4420, 5
  %v4423 = vsel %vm600, %v4418, %v4422
  %v4425 = vshrl.u32 %v4248, 16
  %v4427 = vrot.slane %v4425, 4
  %v4428 = vshll.u32 %v4248, 16
  %v4430 = vrot.slane %v4428, 5
  %v4431 = vor.u32 %v4427, %v4430
  %v4432 = vrot.slane %v4431, 4
  %v4434 = vshll.u32 %v4249, 16
  %v4436 = vrot.slane %v4434, 5
  %v4437 = vsel %vm600, %v4432, %v4436
  %v4439 = vshrl.u32 %v4250, 16
  %v4441 = vrot.slane %v4439, 4
  %v4442 = vshll.u32 %v4250, 16
  %v4444 = vrot.slane %v4442, 5
  %v4445 = vor.u32 %v4441, %v4444
  %v4446 = vrot.slane %v4445, 4
  %v4448 = vshll.u32 %v4251, 16
  %v4450 = vrot.slane %v4448, 5
  %v4451 = vsel %vm600, %v4446, %v4450
  %v4453 = vshrl.u32 %v4252, 16
  %v4455 = vrot.slane %v4453, 4
  %v4456 = vshll.u32 %v4252, 16
  %v4458 = vrot.slane %v4456, 5
  %v4459 = vor.u32 %v4455, %v4458
  %v4460 = vrot.slane %v4459, 4
  %v4462 = vshll.u32 %v4253, 16
  %v4464 = vrot.slane %v4462, 5
  %v4465 = vsel %vm600, %v4460, %v4464
  %v4467 = vshrl.u32 %v4254, 16
  %v4469 = vrot.slane %v4467, 4
  %v4470 = vshll.u32 %v4254, 16
  %v4472 = vrot.slane %v4470, 5
  %v4473 = vor.u32 %v4469, %v4472
  %v4474 = vrot.slane %v4473, 4
  %v4476 = vshll.u32 %v4255, 16
  %v4478 = vrot.slane %v4476, 5
  %v4479 = vsel %vm600, %v4474, %v4478
  %v4480 = vld [vmem:[%s1484] sm:$0x1e]
  %v4481 = vld [vmem:[%s1484 + $0x8] sm:$0x1e]
  %v4482 = vld [vmem:[%s1484 + $0x10] sm:$0x1e]
  %v4483 = vld [vmem:[%s1484 + $0x18] sm:$0x1e]
  %v4484 = vld [vmem:[%s1484 + $0x20] sm:$0x1e]
  %v4485 = vld [vmem:[%s1484 + $0x28] sm:$0x1e]
  %v4486 = vld [vmem:[%s1484 + $0x30] sm:$0x1e]
  %v4487 = vld [vmem:[%s1484 + $0x38] sm:$0x1e]
  %v4488 = vld [vmem:[%s1484 + $0x50] sm:$0x1e]
  %v4489 = vld [vmem:[%s1484 + $0x58] sm:$0x1e]
  %v4490 = vld [vmem:[%s1484 + $0x60] sm:$0x1e]
  %v4491 = vld [vmem:[%s1484 + $0x68] sm:$0x1e]
  %v4492 = vld [vmem:[%s1484 + $0x70] sm:$0x1e]
  %v4493 = vld [vmem:[%s1484 + $0x78] sm:$0x1e]
  %v4494 = vld [vmem:[%s1484 + $0x80] sm:$0x1e]
  %v4495 = vld [vmem:[%s1484 + $0x88] sm:$0x1e]
  %v4512 = vunpack.c.l.b16 %v4480
  %v4513 = vunpack.c.h.b16 %v4480
  %v4514 = vunpack.c.l.b16 %v4481
  %v4515 = vunpack.c.h.b16 %v4481
  %v4516 = vunpack.c.l.b16 %v4482
  %v4517 = vunpack.c.h.b16 %v4482
  %v4518 = vunpack.c.l.b16 %v4483
  %v4519 = vunpack.c.h.b16 %v4483
  %v4520 = vunpack.c.l.b16 %v4484
  %v4521 = vunpack.c.h.b16 %v4484
  %v4522 = vunpack.c.l.b16 %v4485
  %v4523 = vunpack.c.h.b16 %v4485
  %v4524 = vunpack.c.l.b16 %v4486
  %v4525 = vunpack.c.h.b16 %v4486
  %v4526 = vunpack.c.l.b16 %v4487
  %v4527 = vunpack.c.h.b16 %v4487
  %v4528 = vunpack.c.l.b16 %v4488
  %v4529 = vunpack.c.h.b16 %v4488
  %v4530 = vunpack.c.l.b16 %v4489
  %v4531 = vunpack.c.h.b16 %v4489
  %v4532 = vunpack.c.l.b16 %v4490
  %v4533 = vunpack.c.h.b16 %v4490
  %v4534 = vunpack.c.l.b16 %v4491
  %v4535 = vunpack.c.h.b16 %v4491
  %v4536 = vunpack.c.l.b16 %v4492
  %v4537 = vunpack.c.h.b16 %v4492
  %v4538 = vunpack.c.l.b16 %v4493
  %v4539 = vunpack.c.h.b16 %v4493
  %v4540 = vunpack.c.l.b16 %v4494
  %v4541 = vunpack.c.h.b16 %v4494
  %v4542 = vunpack.c.l.b16 %v4495
  %v4543 = vunpack.c.h.b16 %v4495
  %v4544 = vpack.c.b16 %v4512, %v4512
  %v4545 = vpack.c.b16 %v4513, %v4513
  %v4546 = vpack.c.b16 %v4514, %v4514
  %v4547 = vpack.c.b16 %v4515, %v4515
  %v4548 = vpack.c.b16 %v4516, %v4516
  %v4549 = vpack.c.b16 %v4517, %v4517
  %v4550 = vpack.c.b16 %v4518, %v4518
  %v4551 = vpack.c.b16 %v4519, %v4519
  %v4552 = vpack.c.b16 %v4520, %v4520
  %v4553 = vpack.c.b16 %v4521, %v4521
  %v4554 = vpack.c.b16 %v4522, %v4522
  %v4555 = vpack.c.b16 %v4523, %v4523
  %v4556 = vpack.c.b16 %v4524, %v4524
  %v4557 = vpack.c.b16 %v4525, %v4525
  %v4558 = vpack.c.b16 %v4526, %v4526
  %v4559 = vpack.c.b16 %v4527, %v4527
  %v4560 = vpack.c.b16 %v4528, %v4528
  %v4561 = vpack.c.b16 %v4529, %v4529
  %v4562 = vpack.c.b16 %v4530, %v4530
  %v4563 = vpack.c.b16 %v4531, %v4531
  %v4564 = vpack.c.b16 %v4532, %v4532
  %v4565 = vpack.c.b16 %v4533, %v4533
  %v4566 = vpack.c.b16 %v4534, %v4534
  %v4567 = vpack.c.b16 %v4535, %v4535
  %v4568 = vpack.c.b16 %v4536, %v4536
  %v4569 = vpack.c.b16 %v4537, %v4537
  %v4570 = vpack.c.b16 %v4538, %v4538
  %v4571 = vpack.c.b16 %v4539, %v4539
  %v4572 = vpack.c.b16 %v4540, %v4540
  %v4573 = vpack.c.b16 %v4541, %v4541
  %v4574 = vpack.c.b16 %v4542, %v4542
  %v4575 = vpack.c.b16 %v4543, %v4543
  %v4576 = vrot.slane %v4544, 5
  %v4577 = vrot.slane %v4576, 4
  %v4578 = vrot.slane %v4545, 5
  %v4579 = vsel %vm923, %v4577, %v4578
  %v4580 = vrot.slane %v4546, 5
  %v4581 = vrot.slane %v4580, 4
  %v4582 = vrot.slane %v4547, 5
  %v4583 = vsel %vm923, %v4581, %v4582
  %v4584 = vrot.slane %v4548, 5
  %v4585 = vrot.slane %v4584, 4
  %v4586 = vrot.slane %v4549, 5
  %v4587 = vsel %vm923, %v4585, %v4586
  %v4588 = vrot.slane %v4550, 5
  %v4589 = vrot.slane %v4588, 4
  %v4590 = vrot.slane %v4551, 5
  %v4591 = vsel %vm923, %v4589, %v4590
  %v4592 = vrot.slane %v4552, 5
  %v4593 = vrot.slane %v4592, 4
  %v4594 = vrot.slane %v4553, 5
  %v4595 = vsel %vm923, %v4593, %v4594
  %v4596 = vrot.slane %v4554, 5
  %v4597 = vrot.slane %v4596, 4
  %v4598 = vrot.slane %v4555, 5
  %v4599 = vsel %vm923, %v4597, %v4598
  %v4600 = vrot.slane %v4556, 5
  %v4601 = vrot.slane %v4600, 4
  %v4602 = vrot.slane %v4557, 5
  %v4603 = vsel %vm923, %v4601, %v4602
  %v4604 = vrot.slane %v4558, 5
  %v4605 = vrot.slane %v4604, 4
  %v4606 = vrot.slane %v4559, 5
  %v4607 = vsel %vm923, %v4605, %v4606
  %v4608 = vrot.slane %v4560, 5
  %v4609 = vrot.slane %v4608, 4
  %v4610 = vrot.slane %v4561, 5
  %v4611 = vsel %vm923, %v4609, %v4610
  %v4612 = vrot.slane %v4562, 5
  %v4613 = vrot.slane %v4612, 4
  %v4614 = vrot.slane %v4563, 5
  %v4615 = vsel %vm923, %v4613, %v4614
  %v4616 = vrot.slane %v4564, 5
  %v4617 = vrot.slane %v4616, 4
  %v4618 = vrot.slane %v4565, 5
  %v4619 = vsel %vm923, %v4617, %v4618
  %v4620 = vrot.slane %v4566, 5
  %v4621 = vrot.slane %v4620, 4
  %v4622 = vrot.slane %v4567, 5
  %v4623 = vsel %vm923, %v4621, %v4622
  %v4624 = vrot.slane %v4568, 5
  %v4625 = vrot.slane %v4624, 4
  %v4626 = vrot.slane %v4569, 5
  %v4627 = vsel %vm923, %v4625, %v4626
  %v4628 = vrot.slane %v4570, 5
  %v4629 = vrot.slane %v4628, 4
  %v4630 = vrot.slane %v4571, 5
  %v4631 = vsel %vm923, %v4629, %v4630
  %v4632 = vrot.slane %v4572, 5
  %v4633 = vrot.slane %v4632, 4
  %v4634 = vrot.slane %v4573, 5
  %v4635 = vsel %vm923, %v4633, %v4634
  %v4636 = vrot.slane %v4574, 5
  %v4637 = vrot.slane %v4636, 4
  %v4638 = vrot.slane %v4575, 5
  %v4639 = vsel %vm923, %v4637, %v4638
  %v4656 = vunpack.c.l.b16 %v3152
  %v4657 = vunpack.c.l.b16 %v3153
  %v4658 = vunpack.c.l.b16 %v3154
  %v4659 = vunpack.c.l.b16 %v3155
  %v4660 = vunpack.c.l.b16 %v3156
  %v4661 = vunpack.c.l.b16 %v3157
  %v4662 = vunpack.c.l.b16 %v3158
  %v4663 = vunpack.c.l.b16 %v3159
  %v4664 = vunpack.c.l.b16 %v3160
  %v4665 = vunpack.c.l.b16 %v3161
  %v4666 = vunpack.c.l.b16 %v3162
  %v4667 = vunpack.c.l.b16 %v3163
  %v4668 = vunpack.c.l.b16 %v3164
  %v4669 = vunpack.c.l.b16 %v3165
  %v4670 = vunpack.c.l.b16 %v3166
  %v4671 = vunpack.c.l.b16 %v3167
  %v4672 = vpack.c.b16 %v4657, %v4656
  %v4673 = vpack.c.b16 %v4659, %v4658
  %v4674 = vpack.c.b16 %v4661, %v4660
  %v4675 = vpack.c.b16 %v4663, %v4662
  %v4676 = vpack.c.b16 %v4665, %v4664
  %v4677 = vpack.c.b16 %v4667, %v4666
  %v4678 = vpack.c.b16 %v4669, %v4668
  %v4679 = vpack.c.b16 %v4671, %v4670
  %v4680 = vunpack.c.l.b16 %v3277
  %v4681 = vunpack.c.l.b16 %v3291
  %v4682 = vunpack.c.l.b16 %v3305
  %v4683 = vunpack.c.l.b16 %v3319
  %v4684 = vunpack.c.l.b16 %v3333
  %v4685 = vunpack.c.l.b16 %v3347
  %v4686 = vunpack.c.l.b16 %v3361
  %v4687 = vunpack.c.l.b16 %v3375
  %v4688 = vunpack.c.l.b16 %v3389
  %v4689 = vunpack.c.l.b16 %v3403
  %v4690 = vunpack.c.l.b16 %v3417
  %v4691 = vunpack.c.l.b16 %v3431
  %v4692 = vunpack.c.l.b16 %v3445
  %v4693 = vunpack.c.l.b16 %v3459
  %v4694 = vunpack.c.l.b16 %v3473
  %v4695 = vunpack.c.l.b16 %v3487
  %v4696 = vpack.c.b16 %v4681, %v4680
  %v4697 = vpack.c.b16 %v4683, %v4682
  %v4698 = vpack.c.b16 %v4685, %v4684
  %v4699 = vpack.c.b16 %v4687, %v4686
  %v4700 = vpack.c.b16 %v4689, %v4688
  %v4701 = vpack.c.b16 %v4691, %v4690
  %v4702 = vpack.c.b16 %v4693, %v4692
  %v4703 = vpack.c.b16 %v4695, %v4694
  %4704 = vrot.lane.b32.xlu0 %v4696, 8
  %v4705 = vpop.permute.xlu0 %4704
  %4706 = vrot.lane.b32.xlu0 %v4697, 8
  %v4707 = vpop.permute.xlu0 %4706
  %4708 = vrot.lane.b32.xlu0 %v4698, 8
  %v4709 = vpop.permute.xlu0 %4708
  %4710 = vrot.lane.b32.xlu0 %v4699, 8
  %v4711 = vpop.permute.xlu0 %4710
  %4712 = vrot.lane.b32.xlu0 %v4700, 8
  %v4713 = vpop.permute.xlu0 %4712
  %4714 = vrot.lane.b32.xlu0 %v4701, 8
  %v4715 = vpop.permute.xlu0 %4714
  %4716 = vrot.lane.b32.xlu0 %v4702, 8
  %v4717 = vpop.permute.xlu0 %4716
  %4718 = vrot.lane.b32.xlu0 %v4703, 8
  %v4719 = vpop.permute.xlu0 %4718
  %v4720 = vunpack.c.l.b16 %v3587
  %v4721 = vunpack.c.l.b16 %v3591
  %v4722 = vunpack.c.l.b16 %v3595
  %v4723 = vunpack.c.l.b16 %v3599
  %v4724 = vunpack.c.l.b16 %v3603
  %v4725 = vunpack.c.l.b16 %v3607
  %v4726 = vunpack.c.l.b16 %v3611
  %v4727 = vunpack.c.l.b16 %v3615
  %v4728 = vunpack.c.l.b16 %v3619
  %v4729 = vunpack.c.l.b16 %v3623
  %v4730 = vunpack.c.l.b16 %v3627
  %v4731 = vunpack.c.l.b16 %v3631
  %v4732 = vunpack.c.l.b16 %v3635
  %v4733 = vunpack.c.l.b16 %v3639
  %v4734 = vunpack.c.l.b16 %v3643
  %v4735 = vunpack.c.l.b16 %v3647
  %v4736 = vpack.c.b16 %v4721, %v4720
  %v4737 = vpack.c.b16 %v4723, %v4722
  %v4738 = vpack.c.b16 %v4725, %v4724
  %v4739 = vpack.c.b16 %v4727, %v4726
  %v4740 = vpack.c.b16 %v4729, %v4728
  %v4741 = vpack.c.b16 %v4731, %v4730
  %v4742 = vpack.c.b16 %v4733, %v4732
  %v4743 = vpack.c.b16 %v4735, %v4734
  %4744 = vrot.lane.b32.xlu0 %v4736, 16
  %v4745 = vpop.permute.xlu0 %4744
  %4746 = vrot.lane.b32.xlu0 %v4737, 16
  %v4747 = vpop.permute.xlu0 %4746
  %4748 = vrot.lane.b32.xlu0 %v4738, 16
  %v4749 = vpop.permute.xlu0 %4748
  %4750 = vrot.lane.b32.xlu0 %v4739, 16
  %v4751 = vpop.permute.xlu0 %4750
  %4752 = vrot.lane.b32.xlu0 %v4740, 16
  %v4753 = vpop.permute.xlu0 %4752
  %4754 = vrot.lane.b32.xlu0 %v4741, 16
  %v4755 = vpop.permute.xlu0 %4754
  %4756 = vrot.lane.b32.xlu0 %v4742, 16
  %v4757 = vpop.permute.xlu0 %4756
  %4758 = vrot.lane.b32.xlu0 %v4743, 16
  %v4759 = vpop.permute.xlu0 %4758
  %v4776 = vunpack.c.l.b16 %v3648
  %v4777 = vunpack.c.l.b16 %v3649
  %v4778 = vunpack.c.l.b16 %v3650
  %v4779 = vunpack.c.l.b16 %v3651
  %v4780 = vunpack.c.l.b16 %v3652
  %v4781 = vunpack.c.l.b16 %v3653
  %v4782 = vunpack.c.l.b16 %v3654
  %v4783 = vunpack.c.l.b16 %v3655
  %v4784 = vunpack.c.l.b16 %v3656
  %v4785 = vunpack.c.l.b16 %v3657
  %v4786 = vunpack.c.l.b16 %v3658
  %v4787 = vunpack.c.l.b16 %v3659
  %v4788 = vunpack.c.l.b16 %v3660
  %v4789 = vunpack.c.l.b16 %v3661
  %v4790 = vunpack.c.l.b16 %v3662
  %v4791 = vunpack.c.l.b16 %v3663
  %v4792 = vpack.c.b16 %v4777, %v4776
  %v4793 = vpack.c.b16 %v4779, %v4778
  %v4794 = vpack.c.b16 %v4781, %v4780
  %v4795 = vpack.c.b16 %v4783, %v4782
  %v4796 = vpack.c.b16 %v4785, %v4784
  %v4797 = vpack.c.b16 %v4787, %v4786
  %v4798 = vpack.c.b16 %v4789, %v4788
  %v4799 = vpack.c.b16 %v4791, %v4790
  %4800 = vrot.lane.b32.xlu0 %v4792, 24
  %v4801 = vpop.permute.xlu0 %4800
  %4802 = vrot.lane.b32.xlu0 %v4793, 24
  %v4803 = vpop.permute.xlu0 %4802
  %4804 = vrot.lane.b32.xlu0 %v4794, 24
  %v4805 = vpop.permute.xlu0 %4804
  %4806 = vrot.lane.b32.xlu0 %v4795, 24
  %v4807 = vpop.permute.xlu0 %4806
  %4808 = vrot.lane.b32.xlu0 %v4796, 24
  %v4809 = vpop.permute.xlu0 %4808
  %4810 = vrot.lane.b32.xlu0 %v4797, 24
  %v4811 = vpop.permute.xlu0 %4810
  %4812 = vrot.lane.b32.xlu0 %v4798, 24
  %v4813 = vpop.permute.xlu0 %4812
  %4814 = vrot.lane.b32.xlu0 %v4799, 24
  %v4815 = vpop.permute.xlu0 %4814
  %v4816 = vunpack.c.l.b16 %v3773
  %v4817 = vunpack.c.l.b16 %v3787
  %v4818 = vunpack.c.l.b16 %v3801
  %v4819 = vunpack.c.l.b16 %v3815
  %v4820 = vunpack.c.l.b16 %v3829
  %v4821 = vunpack.c.l.b16 %v3843
  %v4822 = vunpack.c.l.b16 %v3857
  %v4823 = vunpack.c.l.b16 %v3871
  %v4824 = vunpack.c.l.b16 %v3885
  %v4825 = vunpack.c.l.b16 %v3899
  %v4826 = vunpack.c.l.b16 %v3913
  %v4827 = vunpack.c.l.b16 %v3927
  %v4828 = vunpack.c.l.b16 %v3941
  %v4829 = vunpack.c.l.b16 %v3955
  %v4830 = vunpack.c.l.b16 %v3969
  %v4831 = vunpack.c.l.b16 %v3983
  %v4832 = vpack.c.b16 %v4817, %v4816
  %v4833 = vpack.c.b16 %v4819, %v4818
  %v4834 = vpack.c.b16 %v4821, %v4820
  %v4835 = vpack.c.b16 %v4823, %v4822
  %v4836 = vpack.c.b16 %v4825, %v4824
  %v4837 = vpack.c.b16 %v4827, %v4826
  %v4838 = vpack.c.b16 %v4829, %v4828
  %v4839 = vpack.c.b16 %v4831, %v4830
  %4840 = vrot.lane.b32.xlu0 %v4832, 32
  %v4841 = vpop.permute.xlu0 %4840
  %4842 = vrot.lane.b32.xlu0 %v4833, 32
  %v4843 = vpop.permute.xlu0 %4842
  %4844 = vrot.lane.b32.xlu0 %v4834, 32
  %v4845 = vpop.permute.xlu0 %4844
  %4846 = vrot.lane.b32.xlu0 %v4835, 32
  %v4847 = vpop.permute.xlu0 %4846
  %4848 = vrot.lane.b32.xlu0 %v4836, 32
  %v4849 = vpop.permute.xlu0 %4848
  %4850 = vrot.lane.b32.xlu0 %v4837, 32
  %v4851 = vpop.permute.xlu0 %4850
  %4852 = vrot.lane.b32.xlu0 %v4838, 32
  %v4853 = vpop.permute.xlu0 %4852
  %4854 = vrot.lane.b32.xlu0 %v4839, 32
  %v4855 = vpop.permute.xlu0 %4854
  %v4856 = vunpack.c.l.b16 %v4083
  %v4857 = vunpack.c.l.b16 %v4087
  %v4858 = vunpack.c.l.b16 %v4091
  %v4859 = vunpack.c.l.b16 %v4095
  %v4860 = vunpack.c.l.b16 %v4099
  %v4861 = vunpack.c.l.b16 %v4103
  %v4862 = vunpack.c.l.b16 %v4107
  %v4863 = vunpack.c.l.b16 %v4111
  %v4864 = vunpack.c.l.b16 %v4115
  %v4865 = vunpack.c.l.b16 %v4119
  %v4866 = vunpack.c.l.b16 %v4123
  %v4867 = vunpack.c.l.b16 %v4127
  %v4868 = vunpack.c.l.b16 %v4131
  %v4869 = vunpack.c.l.b16 %v4135
  %v4870 = vunpack.c.l.b16 %v4139
  %v4871 = vunpack.c.l.b16 %v4143
  %v4872 = vpack.c.b16 %v4857, %v4856
  %v4873 = vpack.c.b16 %v4859, %v4858
  %v4874 = vpack.c.b16 %v4861, %v4860
  %v4875 = vpack.c.b16 %v4863, %v4862
  %v4876 = vpack.c.b16 %v4865, %v4864
  %v4877 = vpack.c.b16 %v4867, %v4866
  %v4878 = vpack.c.b16 %v4869, %v4868
  %v4879 = vpack.c.b16 %v4871, %v4870
  %4880 = vrot.lane.b32.xlu0 %v4872, 40
  %v4881 = vpop.permute.xlu0 %4880
  %4882 = vrot.lane.b32.xlu0 %v4873, 40
  %v4883 = vpop.permute.xlu0 %4882
  %4884 = vrot.lane.b32.xlu0 %v4874, 40
  %v4885 = vpop.permute.xlu0 %4884
  %4886 = vrot.lane.b32.xlu0 %v4875, 40
  %v4887 = vpop.permute.xlu0 %4886
  %4888 = vrot.lane.b32.xlu0 %v4876, 40
  %v4889 = vpop.permute.xlu0 %4888
  %4890 = vrot.lane.b32.xlu0 %v4877, 40
  %v4891 = vpop.permute.xlu0 %4890
  %4892 = vrot.lane.b32.xlu0 %v4878, 40
  %v4893 = vpop.permute.xlu0 %4892
  %4894 = vrot.lane.b32.xlu0 %v4879, 40
  %v4895 = vpop.permute.xlu0 %4894
  %v4912 = vunpack.c.l.b16 %v4144
  %v4913 = vunpack.c.l.b16 %v4145
  %v4914 = vunpack.c.l.b16 %v4146
  %v4915 = vunpack.c.l.b16 %v4147
  %v4916 = vunpack.c.l.b16 %v4148
  %v4917 = vunpack.c.l.b16 %v4149
  %v4918 = vunpack.c.l.b16 %v4150
  %v4919 = vunpack.c.l.b16 %v4151
  %v4920 = vunpack.c.l.b16 %v4152
  %v4921 = vunpack.c.l.b16 %v4153
  %v4922 = vunpack.c.l.b16 %v4154
  %v4923 = vunpack.c.l.b16 %v4155
  %v4924 = vunpack.c.l.b16 %v4156
  %v4925 = vunpack.c.l.b16 %v4157
  %v4926 = vunpack.c.l.b16 %v4158
  %v4927 = vunpack.c.l.b16 %v4159
  %v4928 = vpack.c.b16 %v4913, %v4912
  %v4929 = vpack.c.b16 %v4915, %v4914
  %v4930 = vpack.c.b16 %v4917, %v4916
  %v4931 = vpack.c.b16 %v4919, %v4918
  %v4932 = vpack.c.b16 %v4921, %v4920
  %v4933 = vpack.c.b16 %v4923, %v4922
  %v4934 = vpack.c.b16 %v4925, %v4924
  %v4935 = vpack.c.b16 %v4927, %v4926
  %4936 = vrot.lane.b32.xlu0 %v4928, 48
  %v4937 = vpop.permute.xlu0 %4936
  %4938 = vrot.lane.b32.xlu0 %v4929, 48
  %v4939 = vpop.permute.xlu0 %4938
  %4940 = vrot.lane.b32.xlu0 %v4930, 48
  %v4941 = vpop.permute.xlu0 %4940
  %4942 = vrot.lane.b32.xlu0 %v4931, 48
  %v4943 = vpop.permute.xlu0 %4942
  %4944 = vrot.lane.b32.xlu0 %v4932, 48
  %v4945 = vpop.permute.xlu0 %4944
  %4946 = vrot.lane.b32.xlu0 %v4933, 48
  %v4947 = vpop.permute.xlu0 %4946
  %4948 = vrot.lane.b32.xlu0 %v4934, 48
  %v4949 = vpop.permute.xlu0 %4948
  %4950 = vrot.lane.b32.xlu0 %v4935, 48
  %v4951 = vpop.permute.xlu0 %4950
  %v4952 = vunpack.c.l.b16 %v4269
  %v4953 = vunpack.c.l.b16 %v4283
  %v4954 = vunpack.c.l.b16 %v4297
  %v4955 = vunpack.c.l.b16 %v4311
  %v4956 = vunpack.c.l.b16 %v4325
  %v4957 = vunpack.c.l.b16 %v4339
  %v4958 = vunpack.c.l.b16 %v4353
  %v4959 = vunpack.c.l.b16 %v4367
  %v4960 = vunpack.c.l.b16 %v4381
  %v4961 = vunpack.c.l.b16 %v4395
  %v4962 = vunpack.c.l.b16 %v4409
  %v4963 = vunpack.c.l.b16 %v4423
  %v4964 = vunpack.c.l.b16 %v4437
  %v4965 = vunpack.c.l.b16 %v4451
  %v4966 = vunpack.c.l.b16 %v4465
  %v4967 = vunpack.c.l.b16 %v4479
  %v4968 = vpack.c.b16 %v4953, %v4952
  %v4969 = vpack.c.b16 %v4955, %v4954
  %v4970 = vpack.c.b16 %v4957, %v4956
  %v4971 = vpack.c.b16 %v4959, %v4958
  %v4972 = vpack.c.b16 %v4961, %v4960
  %v4973 = vpack.c.b16 %v4963, %v4962
  %v4974 = vpack.c.b16 %v4965, %v4964
  %v4975 = vpack.c.b16 %v4967, %v4966
  %4976 = vrot.lane.b32.xlu0 %v4968, 56
  %v4977 = vpop.permute.xlu0 %4976
  %4978 = vrot.lane.b32.xlu0 %v4969, 56
  %v4979 = vpop.permute.xlu0 %4978
  %4980 = vrot.lane.b32.xlu0 %v4970, 56
  %v4981 = vpop.permute.xlu0 %4980
  %4982 = vrot.lane.b32.xlu0 %v4971, 56
  %v4983 = vpop.permute.xlu0 %4982
  %4984 = vrot.lane.b32.xlu0 %v4972, 56
  %v4985 = vpop.permute.xlu0 %4984
  %4986 = vrot.lane.b32.xlu0 %v4973, 56
  %v4987 = vpop.permute.xlu0 %4986
  %4988 = vrot.lane.b32.xlu0 %v4974, 56
  %v4989 = vpop.permute.xlu0 %4988
  %4990 = vrot.lane.b32.xlu0 %v4975, 56
  %v4991 = vpop.permute.xlu0 %4990
  %v4992 = vunpack.c.l.b16 %v4579
  %v4993 = vunpack.c.l.b16 %v4583
  %v4994 = vunpack.c.l.b16 %v4587
  %v4995 = vunpack.c.l.b16 %v4591
  %v4996 = vunpack.c.l.b16 %v4595
  %v4997 = vunpack.c.l.b16 %v4599
  %v4998 = vunpack.c.l.b16 %v4603
  %v4999 = vunpack.c.l.b16 %v4607
  %v5000 = vunpack.c.l.b16 %v4611
  %v5001 = vunpack.c.l.b16 %v4615
  %v5002 = vunpack.c.l.b16 %v4619
  %v5003 = vunpack.c.l.b16 %v4623
  %v5004 = vunpack.c.l.b16 %v4627
  %v5005 = vunpack.c.l.b16 %v4631
  %v5006 = vunpack.c.l.b16 %v4635
  %v5007 = vunpack.c.l.b16 %v4639
  %v5008 = vpack.c.b16 %v4993, %v4992
  %v5009 = vpack.c.b16 %v4995, %v4994
  %v5010 = vpack.c.b16 %v4997, %v4996
  %v5011 = vpack.c.b16 %v4999, %v4998
  %v5012 = vpack.c.b16 %v5001, %v5000
  %v5013 = vpack.c.b16 %v5003, %v5002
  %v5014 = vpack.c.b16 %v5005, %v5004
  %v5015 = vpack.c.b16 %v5007, %v5006
  %5016 = vrot.lane.b32.xlu0 %v5008, 64
  %v5017 = vpop.permute.xlu0 %5016
  %5018 = vrot.lane.b32.xlu0 %v5009, 64
  %v5019 = vpop.permute.xlu0 %5018
  %5020 = vrot.lane.b32.xlu0 %v5010, 64
  %v5021 = vpop.permute.xlu0 %5020
  %5022 = vrot.lane.b32.xlu0 %v5011, 64
  %v5023 = vpop.permute.xlu0 %5022
  %5024 = vrot.lane.b32.xlu0 %v5012, 64
  %v5025 = vpop.permute.xlu0 %5024
  %5026 = vrot.lane.b32.xlu0 %v5013, 64
  %v5027 = vpop.permute.xlu0 %5026
  %5028 = vrot.lane.b32.xlu0 %v5014, 64
  %v5029 = vpop.permute.xlu0 %5028
  %5030 = vrot.lane.b32.xlu0 %v5015, 64
  %v5031 = vpop.permute.xlu0 %5030
  %v5034 = vsel %vm150, %v4672, %v4705
  %v5037 = vsel %vm150, %v4673, %v4707
  %v5040 = vsel %vm150, %v4674, %v4709
  %v5043 = vsel %vm150, %v4675, %v4711
  %v5046 = vsel %vm150, %v4676, %v4713
  %v5049 = vsel %vm150, %v4677, %v4715
  %v5052 = vsel %vm150, %v4678, %v4717
  %v5055 = vsel %vm150, %v4679, %v4719
  %v5057 = vsel %vm2397, %v5034, %v4745
  %v5059 = vsel %vm2397, %v5037, %v4747
  %v5061 = vsel %vm2397, %v5040, %v4749
  %v5063 = vsel %vm2397, %v5043, %v4751
  %v5065 = vsel %vm2397, %v5046, %v4753
  %v5067 = vsel %vm2397, %v5049, %v4755
  %v5069 = vsel %vm2397, %v5052, %v4757
  %v5071 = vsel %vm2397, %v5055, %v4759
  %v5073 = vsel %vm2414, %v5057, %v4801
  %v5075 = vsel %vm2414, %v5059, %v4803
  %v5077 = vsel %vm2414, %v5061, %v4805
  %v5079 = vsel %vm2414, %v5063, %v4807
  %v5081 = vsel %vm2414, %v5065, %v4809
  %v5083 = vsel %vm2414, %v5067, %v4811
  %v5085 = vsel %vm2414, %v5069, %v4813
  %v5087 = vsel %vm2414, %v5071, %v4815
  %v5089 = vsel %vm2431, %v5073, %v4841
  %v5091 = vsel %vm2431, %v5075, %v4843
  %v5093 = vsel %vm2431, %v5077, %v4845
  %v5095 = vsel %vm2431, %v5079, %v4847
  %v5097 = vsel %vm2431, %v5081, %v4849
  %v5099 = vsel %vm2431, %v5083, %v4851
  %v5101 = vsel %vm2431, %v5085, %v4853
  %v5103 = vsel %vm2431, %v5087, %v4855
  %v5105 = vsel %vm2448, %v5089, %v4881
  %v5107 = vsel %vm2448, %v5091, %v4883
  %v5109 = vsel %vm2448, %v5093, %v4885
  %v5111 = vsel %vm2448, %v5095, %v4887
  %v5113 = vsel %vm2448, %v5097, %v4889
  %v5115 = vsel %vm2448, %v5099, %v4891
  %v5117 = vsel %vm2448, %v5101, %v4893
  %v5119 = vsel %vm2448, %v5103, %v4895
  %v5121 = vsel %vm2465, %v5105, %v4937
  %v5123 = vsel %vm2465, %v5107, %v4939
  %v5125 = vsel %vm2465, %v5109, %v4941
  %v5127 = vsel %vm2465, %v5111, %v4943
  %v5129 = vsel %vm2465, %v5113, %v4945
  %v5131 = vsel %vm2465, %v5115, %v4947
  %v5133 = vsel %vm2465, %v5117, %v4949
  %v5135 = vsel %vm2465, %v5119, %v4951
  %v5137 = vsel %vm2482, %v5121, %v4977
  %v5139 = vsel %vm2482, %v5123, %v4979
  %v5141 = vsel %vm2482, %v5125, %v4981
  %v5143 = vsel %vm2482, %v5127, %v4983
  %v5145 = vsel %vm2482, %v5129, %v4985
  %v5147 = vsel %vm2482, %v5131, %v4987
  %v5149 = vsel %vm2482, %v5133, %v4989
  %v5151 = vsel %vm2482, %v5135, %v4991
  %v5153 = vsel %vm2499, %v5137, %v5017
  %v5155 = vsel %vm2499, %v5139, %v5019
  %v5157 = vsel %vm2499, %v5141, %v5021
  %v5159 = vsel %vm2499, %v5143, %v5023
  %v5161 = vsel %vm2499, %v5145, %v5025
  %v5163 = vsel %vm2499, %v5147, %v5027
  %v5165 = vsel %vm2499, %v5149, %v5029
  %v5167 = vsel %vm2499, %v5151, %v5031
  %v5168 = vld [vmem:[%s3] sm:$0xf]
  %v5169 = vld [vmem:[%s3 + $0x4] sm:$0xf]
  %v5170 = vld [vmem:[%s3 + $0x8] sm:$0xf]
  %v5171 = vld [vmem:[%s3 + $0xc] sm:$0xf]
  %v5172 = vld [vmem:[%s3 + $0x10] sm:$0xf]
  %v5173 = vld [vmem:[%s3 + $0x14] sm:$0xf]
  %v5174 = vld [vmem:[%s3 + $0x18] sm:$0xf]
  %v5175 = vld [vmem:[%s3 + $0x1c] sm:$0xf]
  %v5176 = vld [vmem:[%s3 + $0x20] sm:$0xf]
  %v5177 = vld [vmem:[%s4] sm:$0x1]
  %v5178 = vlaneseq
  %v5179 = vshrl.u32 %v5178, 7
  %v5180 = vsub.s32 0, %v5179
  %v5181 = vrot.slane %v5177, %v5180
  %v5191 = vunpack.c.l.b16 %v5168
  %v5192 = vunpack.c.l.b16 %v5169
  %v5193 = vunpack.c.l.b16 %v5170
  %v5194 = vunpack.c.l.b16 %v5171
  %v5195 = vunpack.c.l.b16 %v5172
  %v5196 = vunpack.c.l.b16 %v5173
  %v5197 = vunpack.c.l.b16 %v5174
  %v5198 = vunpack.c.l.b16 %v5175
  %v5199 = vunpack.c.l.b16 %v5176
  %v5200 = vpack.c.b16 %v5192, %v5191
  %v5201 = vpack.c.b16 %v5194, %v5193
  %v5202 = vpack.c.b16 %v5196, %v5195
  %v5203 = vpack.c.b16 %v5198, %v5197
  %v5204 = vpack.c.b16 %v5199, %v5199
  %v5209 = vsel %vm2557, %v5153, 0
  %v5211 = vsel %vm2557, %v5155, 0
  %v5213 = vsel %vm2557, %v5157, 0
  %v5215 = vsel %vm2557, %v5159, 0
  %v5217 = vsel %vm2557, %v5161, 0
  %v5219 = vsel %vm2557, %v5163, 0
  %v5221 = vsel %vm2557, %v5165, 0
  %v5223 = vsel %vm2557, %v5167, 0
  %v5226 = vsel %vm2574, %v5204, 0
  %5228 = vmatprep.subr.bf16.mxu0 0
  %5229 = vmatpush1.bf16.msra.mxu0 %v5200
  %5230 = vmatprep.subr.bf16.mxu0 0
  %5231 = vmatpush1.bf16.msra.mxu0 %v5201
  %5232 = vmatprep.subr.bf16.mxu0 0
  %5233 = vmatpush1.bf16.msra.mxu0 %v5202
  %5234 = vmatprep.subr.bf16.mxu0 0
  %5235 = vmatpush1.bf16.msra.mxu0 %v5203
  %5236 = vmatprep.subr.bf16.mxu0 0
  %5237 = vmatpush1.bf16.msra.mxu0 %v5226
  %5238 = vmatprep.subr.bf16.mxu0 0
  %5239 = vmatpush1.bf16.msra.mxu0 0
  %5240 = vmatprep.subr.bf16.mxu0 0
  %5241 = vmatpush1.bf16.msra.mxu0 0
  %5242 = vmatprep.subr.bf16.mxu0 0
  %5243 = vmatpush1.bf16.msra.mxu0 0
  %5244 = vmatprep.subr.bf16.mxu0 0
  %5245 = vmatpush1.bf16.msra.mxu0 0
  %5246 = vmatprep.subr.bf16.mxu0 0
  %5247 = vmatpush1.bf16.msra.mxu0 0
  %5248 = vmatprep.subr.bf16.mxu0 0
  %5249 = vmatpush1.bf16.msra.mxu0 0
  %5250 = vmatprep.subr.bf16.mxu0 0
  %5251 = vmatpush1.bf16.msra.mxu0 0
  %5252 = vmatprep.subr.bf16.mxu0 0
  %5253 = vmatpush1.bf16.msra.mxu0 0
  %5254 = vmatprep.subr.bf16.mxu0 0
  %5255 = vmatpush1.bf16.msra.mxu0 0
  %5256 = vmatprep.subr.bf16.mxu0 0
  %5257 = vmatpush1.bf16.msra.mxu0 0
  %5258 = vmatprep.subr.bf16.mxu0 0
  %5259 = vmatpush1.bf16.msra.mxu0 0
  %5260 = vmatprep.mubr.bf16.mxu0 0
  %5261 = vmatmul.mubr.bf16.gmra.mrb[0].mxu0 %v5209
  %v5262 = vpop.f32.mrb[0].mxu0
  %v5263 = vadd.f32 %v5181, %v5262
  %v5264 = vpop.f32.mrb[0].mxu0
  %v5265 = vpop.f32.mrb[0].mxu0
  %v5266 = vadd.f32 %v5181, %v5265
  %v5267 = vpop.f32.mrb[0].mxu0
  %5268 = vmatprep.mubr.bf16.mxu0 0
  %5269 = vmatmul.mubr.bf16.gmra.mrb[0].mxu0 %v5211
  %v5270 = vpop.f32.mrb[0].mxu0
  %v5271 = vadd.f32 %v5181, %v5270
  %v5272 = vpop.f32.mrb[0].mxu0
  %v5273 = vpop.f32.mrb[0].mxu0
  %v5274 = vadd.f32 %v5181, %v5273
  %v5275 = vpop.f32.mrb[0].mxu0
  %5276 = vmatprep.mubr.bf16.mxu0 0
  %5277 = vmatmul.mubr.bf16.gmra.mrb[0].mxu0 %v5213
  %v5278 = vpop.f32.mrb[0].mxu0
  %v5279 = vadd.f32 %v5181, %v5278
  %v5280 = vpop.f32.mrb[0].mxu0
  %v5281 = vpop.f32.mrb[0].mxu0
  %v5282 = vadd.f32 %v5181, %v5281
  %v5283 = vpop.f32.mrb[0].mxu0
  %5284 = vmatprep.mubr.bf16.mxu0 0
  %5285 = vmatmul.mubr.bf16.gmra.mrb[0].mxu0 %v5215
  %v5286 = vpop.f32.mrb[0].mxu0
  %v5287 = vadd.f32 %v5181, %v5286
  %v5288 = vpop.f32.mrb[0].mxu0
  %v5289 = vpop.f32.mrb[0].mxu0
  %v5290 = vadd.f32 %v5181, %v5289
  %v5291 = vpop.f32.mrb[0].mxu0
  %5292 = vmatprep.mubr.bf16.mxu0 0
  %5293 = vmatmul.mubr.bf16.gmra.mrb[0].mxu0 %v5217
  %v5294 = vpop.f32.mrb[0].mxu0
  %v5295 = vadd.f32 %v5181, %v5294
  %v5296 = vpop.f32.mrb[0].mxu0
  %v5297 = vpop.f32.mrb[0].mxu0
  %v5298 = vadd.f32 %v5181, %v5297
  %v5299 = vpop.f32.mrb[0].mxu0
  %5300 = vmatprep.mubr.bf16.mxu0 0
  %5301 = vmatmul.mubr.bf16.gmra.mrb[0].mxu0 %v5219
  %v5302 = vpop.f32.mrb[0].mxu0
  %v5303 = vadd.f32 %v5181, %v5302
  %v5304 = vpop.f32.mrb[0].mxu0
  %v5305 = vpop.f32.mrb[0].mxu0
  %v5306 = vadd.f32 %v5181, %v5305
  %v5307 = vpop.f32.mrb[0].mxu0
  %5308 = vmatprep.mubr.bf16.mxu0 0
  %5309 = vmatmul.mubr.bf16.gmra.mrb[0].mxu0 %v5221
  %v5310 = vpop.f32.mrb[0].mxu0
  %v5311 = vadd.f32 %v5181, %v5310
  %v5312 = vpop.f32.mrb[0].mxu0
  %v5313 = vpop.f32.mrb[0].mxu0
  %v5314 = vadd.f32 %v5181, %v5313
  %v5315 = vpop.f32.mrb[0].mxu0
  %5316 = vmatprep.mubr.bf16.mxu0 0
  %5317 = vmatmul.mubr.bf16.gmra.mrb[0].mxu0 %v5223
  %v5318 = vpop.f32.mrb[0].mxu0
  %v5319 = vadd.f32 %v5181, %v5318
  %v5320 = vpop.f32.mrb[0].mxu0
  %v5321 = vpop.f32.mrb[0].mxu0
  %v5322 = vadd.f32 %v5181, %v5321
  %v5323 = vpop.f32.mrb[0].mxu0
  %5324 = vdwg.mxu0
  %v5325 = vadd.f32 %v5263, %v5266
  %v5326 = vadd.f32 %v5325, %v5271
  %v5327 = vadd.f32 %v5326, %v5274
  %v5328 = vadd.f32 %v5327, %v5279
  %v5329 = vadd.f32 %v5328, %v5282
  %v5330 = vadd.f32 %v5329, %v5287
  %v5331 = vadd.f32 %v5330, %v5290
  %v5332 = vadd.f32 %v5331, %v5295
  %v5333 = vadd.f32 %v5332, %v5298
  %v5334 = vadd.f32 %v5333, %v5303
  %v5335 = vadd.f32 %v5334, %v5306
  %v5336 = vadd.f32 %v5335, %v5311
  %v5337 = vadd.f32 %v5336, %v5314
  %v5338 = vadd.f32 %v5337, %v5319
  %v5339 = vadd.f32 %v5338, %v5322
  %v5340 = vrot.slane %v5339, 4
  %v5341 = vadd.f32 %v5339, %v5340
  %v5342 = vrot.slane %v5341, 2
  %v5343 = vadd.f32 %v5341, %v5342
  %v5344 = vrot.slane %v5343, 1
  %v5345 = vadd.f32 %v5343, %v5344
  %v5346 = vmul.f32 %v5345, %v2696
  %v5347 = vsub.f32 %v5263, %v5346
  %v5348 = vsub.f32 %v5266, %v5346
  %v5349 = vsub.f32 %v5271, %v5346
  %v5350 = vsub.f32 %v5274, %v5346
  %v5351 = vsub.f32 %v5279, %v5346
  %v5352 = vsub.f32 %v5282, %v5346
  %v5353 = vsub.f32 %v5287, %v5346
  %v5354 = vsub.f32 %v5290, %v5346
  %v5355 = vsub.f32 %v5295, %v5346
  %v5356 = vsub.f32 %v5298, %v5346
  %v5357 = vsub.f32 %v5303, %v5346
  %v5358 = vsub.f32 %v5306, %v5346
  %v5359 = vsub.f32 %v5311, %v5346
  %v5360 = vsub.f32 %v5314, %v5346
  %v5361 = vsub.f32 %v5319, %v5346
  %v5362 = vsub.f32 %v5322, %v5346
  %v5363 = vmul.f32 %v5347, %v5347
  %v5364 = vmul.f32 %v5348, %v5348
  %v5365 = vmul.f32 %v5349, %v5349
  %v5366 = vmul.f32 %v5350, %v5350
  %v5367 = vmul.f32 %v5351, %v5351
  %v5368 = vmul.f32 %v5352, %v5352
  %v5369 = vmul.f32 %v5353, %v5353
  %v5370 = vmul.f32 %v5354, %v5354
  %v5371 = vmul.f32 %v5355, %v5355
  %v5372 = vmul.f32 %v5356, %v5356
  %v5373 = vmul.f32 %v5357, %v5357
  %v5374 = vmul.f32 %v5358, %v5358
  %v5375 = vmul.f32 %v5359, %v5359
  %v5376 = vmul.f32 %v5360, %v5360
  %v5377 = vmul.f32 %v5361, %v5361
  %v5378 = vmul.f32 %v5362, %v5362
  %v5379 = vadd.f32 %v5363, %v5364
  %v5380 = vadd.f32 %v5379, %v5365
  %v5381 = vadd.f32 %v5380, %v5366
  %v5382 = vadd.f32 %v5381, %v5367
  %v5383 = vadd.f32 %v5382, %v5368
  %v5384 = vadd.f32 %v5383, %v5369
  %v5385 = vadd.f32 %v5384, %v5370
  %v5386 = vadd.f32 %v5385, %v5371
  %v5387 = vadd.f32 %v5386, %v5372
  %v5388 = vadd.f32 %v5387, %v5373
  %v5389 = vadd.f32 %v5388, %v5374
  %v5390 = vadd.f32 %v5389, %v5375
  %v5391 = vadd.f32 %v5390, %v5376
  %v5392 = vadd.f32 %v5391, %v5377
  %v5393 = vadd.f32 %v5392, %v5378
  %v5394 = vrot.slane %v5393, 4
  %v5395 = vadd.f32 %v5393, %v5394
  %v5396 = vrot.slane %v5395, 2
  %v5397 = vadd.f32 %v5395, %v5396
  %v5398 = vrot.slane %v5397, 1
  %v5399 = vadd.f32 %v5397, %v5398
  %v5400 = vmul.f32 %v5399, %v2696
  %v5401 = vadd.f32 %v5400, 1e-05
  %v5402 = vrsqrt.pop %v5401
  %v5403 = vmul.f32 %v5347, %v5402
  %v5404 = vmul.f32 %v5348, %v5402
  %v5405 = vmul.f32 %v5349, %v5402
  %v5406 = vmul.f32 %v5350, %v5402
  %v5407 = vmul.f32 %v5351, %v5402
  %v5408 = vmul.f32 %v5352, %v5402
  %v5409 = vmul.f32 %v5353, %v5402
  %v5410 = vmul.f32 %v5354, %v5402
  %v5411 = vmul.f32 %v5355, %v5402
  %v5412 = vmul.f32 %v5356, %v5402
  %v5413 = vmul.f32 %v5357, %v5402
  %v5414 = vmul.f32 %v5358, %v5402
  %v5415 = vmul.f32 %v5359, %v5402
  %v5416 = vmul.f32 %v5360, %v5402
  %v5417 = vmul.f32 %v5361, %v5402
  %v5418 = vmul.f32 %v5362, %v5402
  %v5419 = vld [vmem:[%s4 + $0x1] sm:$0x1]
  %v5420 = vlaneseq
  %v5421 = vshrl.u32 %v5420, 7
  %v5422 = vsub.s32 0, %v5421
  %v5423 = vrot.slane %v5419, %v5422
  %v5424 = vmul.f32 %v5403, %v5423
  %v5425 = vmul.f32 %v5404, %v5423
  %v5426 = vmul.f32 %v5405, %v5423
  %v5427 = vmul.f32 %v5406, %v5423
  %v5428 = vmul.f32 %v5407, %v5423
  %v5429 = vmul.f32 %v5408, %v5423
  %v5430 = vmul.f32 %v5409, %v5423
  %v5431 = vmul.f32 %v5410, %v5423
  %v5432 = vmul.f32 %v5411, %v5423
  %v5433 = vmul.f32 %v5412, %v5423
  %v5434 = vmul.f32 %v5413, %v5423
  %v5435 = vmul.f32 %v5414, %v5423
  %v5436 = vmul.f32 %v5415, %v5423
  %v5437 = vmul.f32 %v5416, %v5423
  %v5438 = vmul.f32 %v5417, %v5423
  %v5439 = vmul.f32 %v5418, %v5423
  %v5440 = vld [vmem:[%s4 + $0x2] sm:$0x1]
  %v5441 = vlaneseq
  %v5442 = vshrl.u32 %v5441, 7
  %v5443 = vsub.s32 0, %v5442
  %v5444 = vrot.slane %v5440, %v5443
  %v5445 = vadd.f32 %v5424, %v5444
  %v5446 = vadd.f32 %v5425, %v5444
  %v5447 = vadd.f32 %v5426, %v5444
  %v5448 = vadd.f32 %v5427, %v5444
  %v5449 = vadd.f32 %v5428, %v5444
  %v5450 = vadd.f32 %v5429, %v5444
  %v5451 = vadd.f32 %v5430, %v5444
  %v5452 = vadd.f32 %v5431, %v5444
  %v5453 = vadd.f32 %v5432, %v5444
  %v5454 = vadd.f32 %v5433, %v5444
  %v5455 = vadd.f32 %v5434, %v5444
  %v5456 = vadd.f32 %v5435, %v5444
  %v5457 = vadd.f32 %v5436, %v5444
  %v5458 = vadd.f32 %v5437, %v5444
  %v5459 = vadd.f32 %v5438, %v5444
  %v5460 = vadd.f32 %v5439, %v5444
  %v5461 = vmax.f32 %v5445, 0.0
  %v5462 = vmax.f32 %v5446, 0.0
  %v5463 = vmax.f32 %v5447, 0.0
  %v5464 = vmax.f32 %v5448, 0.0
  %v5465 = vmax.f32 %v5449, 0.0
  %v5466 = vmax.f32 %v5450, 0.0
  %v5467 = vmax.f32 %v5451, 0.0
  %v5468 = vmax.f32 %v5452, 0.0
  %v5469 = vmax.f32 %v5453, 0.0
  %v5470 = vmax.f32 %v5454, 0.0
  %v5471 = vmax.f32 %v5455, 0.0
  %v5472 = vmax.f32 %v5456, 0.0
  %v5473 = vmax.f32 %v5457, 0.0
  %v5474 = vmax.f32 %v5458, 0.0
  %v5475 = vmax.f32 %v5459, 0.0
  %v5476 = vmax.f32 %v5460, 0.0
  %5477 = vxpose.xlu0.b32.start [1/16] %v5461, 128
  %5478 = vxpose.xlu0.b32.cont [2/16] %v5462, 128
  %5479 = vxpose.xlu0.b32.cont [3/16] %v5463, 128
  %5480 = vxpose.xlu0.b32.cont [4/16] %v5464, 128
  %5481 = vxpose.xlu0.b32.cont [5/16] %v5465, 128
  %5482 = vxpose.xlu0.b32.cont [6/16] %v5466, 128
  %5483 = vxpose.xlu0.b32.cont [7/16] %v5467, 128
  %5484 = vxpose.xlu0.b32.cont [8/16] %v5468, 128
  %5485 = vxpose.xlu0.b32.cont [9/16] %v5469, 128
  %5486 = vxpose.xlu0.b32.cont [10/16] %v5470, 128
  %5487 = vxpose.xlu0.b32.cont [11/16] %v5471, 128
  %5488 = vxpose.xlu0.b32.cont [12/16] %v5472, 128
  %5489 = vxpose.xlu0.b32.cont [13/16] %v5473, 128
  %5490 = vxpose.xlu0.b32.cont [14/16] %v5474, 128
  %5491 = vxpose.xlu0.b32.cont [15/16] %v5475, 128
  %5492 = vxpose.xlu0.b32.end [16/16] %v5476, 128
  %v5493 = vpop.trf.xlu0
  %v5494 = vpop.trf.xlu0
  %v5495 = vpop.trf.xlu0
  %v5496 = vpop.trf.xlu0
  %v5497 = vpop.trf.xlu0
  %v5498 = vpop.trf.xlu0
  %v5499 = vpop.trf.xlu0
  %v5500 = vpop.trf.xlu0
  %v5501 = vpop.trf.xlu0
  %v5502 = vpop.trf.xlu0
  %v5503 = vpop.trf.xlu0
  %v5504 = vpop.trf.xlu0
  %v5505 = vpop.trf.xlu0
  %v5506 = vpop.trf.xlu0
  %v5507 = vpop.trf.xlu0
  %v5508 = vpop.trf.xlu0
  %vm5509 = vcmask 519168
  %5510 = vst.msk [vmem:[%s5] sm:$0xf] %vm5509, %v5493
  %5512 = vrot.lane.b32.xlu0 %v5493, 64
  %v5513 = vpop.permute.xlu0 %5512
  %s5515 = scalar_lea.vmem %s5, 4
  %5516 = vst.msk [vmem:[%s5515] sm:$0xf] %vm5509, %v5513
  // Predicated region
  $region22: #{down_layer_forward.1} parent=0 // pred_check
    _
  $region23: #{down_layer_forward.1} parent=0 // pred_check_branch
    %5518 = sbr.rel (0) target = $region25
  $region24: #{down_layer_forward.1} parent=0 // pred_region
    _
  $region25: #{down_layer_forward.1} parent=0 // pred_fallthru
    _
  // Predicated region
  $region26: #{down_layer_forward.1} parent=0 // pred_check
    _
  $region27: #{down_layer_forward.1} parent=0 // pred_check_branch
    %5520 = sbr.rel (0) target = $region29
  $region28: #{down_layer_forward.1} parent=0 // pred_region
    _
  $region29: #{down_layer_forward.1} parent=0 // pred_fallthru
    _

</llo_original>
